<compile_context>
chip_gen: v6e
topology: v6e:2x2x1
jax: 0.10.0
libtpu: 0.0.40
codegen_flags: <defaults>
</compile_context>

<pallas_src>
import functools
import math

import jax
import jax.numpy as jnp
from jax import lax
from jax.experimental import pallas as pl
from jax.experimental.pallas import tpu as pltpu


def _silu(x):
    return x * (1.0 / (1.0 + jnp.exp(-x)))


def _softplus(x):
    # torch.nn.functional.softplus with beta=1, threshold=20
    return jnp.where(x > 20.0, x, jnp.log1p(jnp.exp(jnp.minimum(x, 20.0))))


def _layernorm(x, eps=1e-5):
    # nn.LayerNorm(dim) created fresh in forward() -> gamma=1, beta=0
    mu = jnp.mean(x, axis=-1, keepdims=True)
    var = jnp.mean((x - mu) ** 2, axis=-1, keepdims=True)
    return (x - mu) * lax.rsqrt(var + eps)


def mamba_moe_kernel(
    x_ref,                               # (1, Lc, dim) input chunk
    w_in_ref,                            # (dim, 2*d_inner)   [x | z]
    w_conv_ref, b_conv_ref,              # (d_conv, d_inner), (1, d_inner)
    w_xdbc_ref,                          # (d_inner, dtW + 2*d_state)  [dt|B|C]
    w_dt_ref, b_dt_ref,                  # (dt_rank, d_inner), (1, d_inner)
    a_T_ref,                             # (d_state, d_inner)  == -exp(A_log).T
    d_param_ref,                         # (1, d_inner)
    w_out_ref,                           # (d_inner, dim)
    w_moe1_ref, b_moe1_ref,              # (dim, 2*hidden), (1, 2*hidden)
    w_moe2_ref, b_moe2_ref,              # (2*hidden, dim), (1, dim) == b02+b12
    o_ref,                               # (1, Lc, dim)
    # ---- VMEM scratch ----
    xc_ref,                              # (Lc, d_inner)  conv out -> gated scan out
    delta_ref,                           # (Lc, d_inner)
    g_ref,                               # (Lc, d_inner)  silu(z) gate
    bc_ref,                              # (Lc, 2*d_state)  [B | C] staging
    h_ref,                               # (Lc, dim)   LN(x), reused in epilogue
    tail_ref,                            # (8, d_inner)  prev-chunk conv-input tail
    state_ref,                           # (d_state, d_inner)  SSM state (carry)
    *, d_conv, dt_rank, d_state, d_inner, dt_folded, exp_bf16,
):
    li = pl.program_id(1)                # sequence-chunk index (sequential)
    lc = xc_ref.shape[0]
    wdtype = w_in_ref.dtype              # bf16 or f32; accumulation stays f32

    # reset per-sequence carries at the first chunk of each batch element
    @pl.when(li == 0)
    def _():
        tail_ref[...] = jnp.zeros_like(tail_ref)
        state_ref[...] = jnp.zeros_like(state_ref)

    x_in = x_ref[0]                      # (Lc, dim)
    h = _layernorm(x_in)                 # first LayerNorm (row-local -> chunkable)
    h_ref[...] = h                       # reused by the epilogue residual

    # ---------------- Mamba: fused in_proj (x | z) ------------------------
    xz = jnp.dot(h.astype(wdtype), w_in_ref[...],
                 preferred_element_type=jnp.float32)          # (Lc, 2*d_inner)
    xm = xz[:, :d_inner]
    g_ref[...] = _silu(xz[:, d_inner:])

    # ---------------- causal depthwise conv1d -----------------------------
    # full block, history-free (rows 0..7 recomputed exactly by the head patch)
    w_conv = w_conv_ref[...].astype(jnp.float32)              # (d_conv, d_inner)
    b_conv = b_conv_ref[...]
    conv = xm * w_conv[d_conv - 1:d_conv, :] + b_conv
    for k in range(d_conv - 1):
        shift = d_conv - 1 - k                                # 1..d_conv-1 (<=8)
        conv = conv + pltpu.roll(xm, shift=shift, axis=0) * w_conv[k:k + 1, :]
    xc_ref[...] = _silu(conv)

    # exact 8-row head patch against the carried previous-chunk tail
    tail = tail_ref[...]                                      # (8, d_inner)
    head = xm[:8, :]
    row8 = lax.broadcasted_iota(jnp.int32, (8, 1), 0)
    conv_h = head * w_conv[d_conv - 1:d_conv, :] + b_conv
    for k in range(d_conv - 1):
        shift = d_conv - 1 - k
        cur = pltpu.roll(head, shift=shift, axis=0)
        prev = pltpu.roll(tail, shift=shift, axis=0)          # last rows of prev chunk
        conv_h = conv_h + jnp.where(row8 >= shift, cur, prev) * w_conv[k:k + 1, :]
    xc_ref[pl.ds(0, 8), :] = _silu(conv_h)
    tail_ref[...] = xm[lc - 8:, :]                            # 8-row carry only

    xc = xc_ref[...]

    # ---------------- fused x_proj (dt | B | C) (+ folded dt_proj) --------
    xdbc = jnp.dot(xc.astype(wdtype), w_xdbc_ref[...],
                   preferred_element_type=jnp.float32)
    if dt_folded:
        # dt_proj folded host-side -> lane-aligned slice, no small K matmul
        delta_pre = xdbc[:, :d_inner]
        bc_ref[...] = xdbc[:, d_inner:]
    else:
        delta_pre = jnp.dot(xdbc[:, :dt_rank].astype(wdtype), w_dt_ref[...],
                            preferred_element_type=jnp.float32)
        bc_ref[...] = xdbc[:, dt_rank:]
    delta_ref[...] = _softplus(delta_pre + b_dt_ref[...])

    # ---------------- selective scan: 8 timesteps per fori iteration ------
    a_T = a_T_ref[...].astype(jnp.float32)                    # (n, d_inner)
    d_param = d_param_ref[...]                                # (1, d_inner)
    n2 = 2 * d_state
    # identity used to hoist the B/C lane->sublane relayout to once per block
    eye2n = (lax.broadcasted_iota(jnp.int32, (n2, n2), 0) ==
             lax.broadcasted_iota(jnp.int32, (n2, n2), 1)).astype(jnp.float32)

    def scan_block(blk, carry):
        base = pl.multiple_of(blk * 8, 8)
        d8 = delta_ref[pl.ds(base, 8), :]                     # (8, d_inner)
        x8 = xc_ref[pl.ds(base, 8), :]                        # (8, d_inner)
        g8 = g_ref[pl.ds(base, 8), :]                         # (8, d_inner)
        bc8 = bc_ref[pl.ds(base, 8), :]                       # (8, 2n)
        # (2n, 8) == bc8.T via a tiny MXU matmul (MXU is idle in the scan);
        # per-step we then take static (n, 1) columns -> no per-step relayout.
        bcT8 = lax.dot_general(eye2n, bc8, (((1,), (1,)), ((), ())),
                               preferred_element_type=jnp.float32)
        st = state_ref[...]                                   # (n, d_inner) f32
        rows = []
        for j in range(8):
            dj = d8[j:j + 1, :]                               # (1, d_inner)
            uj = x8[j:j + 1, :]                               # (1, d_inner)
            prod = dj * a_T                                   # (n, d_inner)
            if exp_bf16:
                # v6e/v7x: ~2x EUP throughput; recurrence/state stay f32
                dA = jnp.exp(prod.astype(jnp.bfloat16))
            else:
                dA = jnp.exp(prod)
            bj = bcT8[0:d_state, j:j + 1]                     # (n, 1)
            cj = bcT8[d_state:n2, j:j + 1]                    # (n, 1)
            st = dA * st + (dj * uj) * bj                     # (n, d_inner), f32
            y = jnp.sum(cj * st, axis=0, keepdims=True)       # (1, d_inner)
            # fused D-skip + silu(z) gate (no extra epilogue sweep / buffer)
            rows.append((y + uj * d_param) * g8[j:j + 1, :])
        state_ref[...] = st                                   # carry across chunks
        # write gated output over the consumed conv rows (lane-dense store)
        xc_ref[pl.ds(base, 8), :] = jnp.concatenate(rows, axis=0)
        return carry

    lax.fori_loop(0, lc // 8, scan_block, 0, unroll=2)

    # ---------------- epilogue: out_proj, residual + LN, fused MoE --------
    y_all = xc_ref[...]                                       # gated scan output
    mamba_out = jnp.dot(y_all.astype(wdtype), w_out_ref[...],
                        preferred_element_type=jnp.float32)   # (Lc, dim)
    h2 = _layernorm(mamba_out + h_ref[...])                   # reuse LN(x)

    hid = jnp.maximum(
        jnp.dot(h2.astype(wdtype), w_moe1_ref[...],
                preferred_element_type=jnp.float32) + b_moe1_ref[...], 0.0)
    moe = jnp.dot(hid.astype(wdtype), w_moe2_ref[...],
                  preferred_element_type=jnp.float32) + b_moe2_ref[...]
    o_ref[0] = (0.5 * moe + x_in).astype(o_ref.dtype)


_FUSED_ORDER = [
    "w_in", "w_conv", "b_conv", "w_xdbc", "w_dt", "b_dt",
    "a_T", "d", "w_out", "w_moe1", "b_moe1", "w_moe2", "b_moe2",
]


def fuse_params(p, *, param_dtype=jnp.float32, fold_dt=None):
    """Host-side fusion / pre-computation of the kernel weights."""
    wd = param_dtype
    d_inner = p["w_in_x"].shape[1]
    if fold_dt is None:
        # folding adds a (d_inner, d_inner) weight; only worth it for modest widths
        fold_dt = d_inner <= 1024
    if fold_dt:
        w_delta = jnp.dot(p["w_xdt"], p["w_dt"],
                          precision=jax.lax.Precision.HIGHEST)
        w_xdbc = jnp.concatenate([w_delta, p["w_xB"], p["w_xC"]], axis=1)
    else:
        w_xdbc = jnp.concatenate([p["w_xdt"], p["w_xB"], p["w_xC"]], axis=1)
    return {
        "w_in":   jnp.concatenate([p["w_in_x"], p["w_in_z"]], axis=1).astype(wd),
        "w_conv": p["w_conv"].astype(jnp.float32),
        "b_conv": p["b_conv"].astype(jnp.float32),
        "w_xdbc": w_xdbc.astype(wd),
        "w_dt":   p["w_dt"].astype(wd),
        "b_dt":   p["b_dt"].astype(jnp.float32),
        "a_T":    (-jnp.exp(p["a_logT"])).astype(jnp.float32),  # hoisted -exp(A_log)
        "d":      p["d_param"].astype(jnp.float32),
        "w_out":  p["w_out"].astype(wd),
        "w_moe1": jnp.concatenate([p["w01"], p["w11"]], axis=1).astype(wd),
        "b_moe1": jnp.concatenate([p["b01"], p["b11"]], axis=1).astype(jnp.float32),
        "w_moe2": jnp.concatenate([p["w02"], p["w12"]], axis=0).astype(wd),
        "b_moe2": (p["b02"] + p["b12"]).astype(jnp.float32),
        "dt_folded": bool(fold_dt),
    }


def _vmem_cap_bytes():
    try:
        info = pltpu.get_tpu_info()
        cap = int(getattr(info, "vmem_capacity_bytes", 0) or 0)
        if cap > 0:
            return cap
    except Exception:
        pass
    return 64 << 20                      # conservative fallback (v7x-sized)


def _pick_l_chunk(L, target):
    c = min(L, max(target, 8))
    c -= c % 8
    while c > 8 and L % c != 0:
        c -= 8
    return max(c, 8)


def mamba_moe_layer(x, fused, *, l_chunk=None, exp_in_bf16=False):
    B, L, dim = x.shape
    d_conv, d_inner = fused["w_conv"].shape
    d_state = fused["a_T"].shape[0]
    dt_rank = fused["w_dt"].shape[0]
    dt_folded = bool(fused["dt_folded"])

    assert d_conv <= 9, "conv-history carry holds 8 rows (needs d_conv - 1 <= 8)"
    assert L % 8 == 0, "sequence length must be a multiple of 8"

    cap = _vmem_cap_bytes()
    if l_chunk is None:
        # big chunks on 128-MiB parts (v5e/v6e); smaller on v7x / very wide models
        target = 1024 if cap >= (96 << 20) else (256 if d_inner >= 1024 else 512)
        l_chunk = _pick_l_chunk(L, target)
    assert L % l_chunk == 0 and l_chunk % 8 == 0 and l_chunk >= 8

    n_l = L // l_chunk
    weights = [fused[name] for name in _FUSED_ORDER]

    # Resident, single-buffered weights: whole-array VMEM placement (constant
    # block index -> double-buffering them would only waste VMEM).
    resident = pl.BlockSpec(memory_space=pltpu.MemorySpace.VMEM)
    in_specs = [pl.BlockSpec((1, l_chunk, dim), lambda b, l: (b, l, 0))]
    in_specs += [resident] * len(weights)

    scratch_shapes = [
        pltpu.VMEM((l_chunk, d_inner), jnp.float32),       # xc -> gated scan out
        pltpu.VMEM((l_chunk, d_inner), jnp.float32),       # delta
        pltpu.VMEM((l_chunk, d_inner), jnp.float32),       # silu(z) gate
        pltpu.VMEM((l_chunk, 2 * d_state), jnp.float32),   # [B | C] staging
        pltpu.VMEM((l_chunk, dim), jnp.float32),           # LN(x) (reused)
        pltpu.VMEM((8, d_inner), jnp.float32),             # conv-input tail carry
        pltpu.VMEM((d_state, d_inner), jnp.float32),       # SSM state carry
    ]

    kernel = functools.partial(
        mamba_moe_kernel, d_conv=d_conv, dt_rank=dt_rank, d_state=d_state,
        d_inner=d_inner, dt_folded=dt_folded, exp_bf16=exp_in_bf16)

    # scoped-VMEM budget: resident weights (1x) + pipelined act tiles + scratch,
    # capped at 75% of physical VMEM (≈48 MiB on v7x, up to 96 MiB on v5e/v6e).
    w_bytes = sum(int(w.size) * w.dtype.itemsize for w in weights)
    tile_bytes = l_chunk * dim * x.dtype.itemsize
    scratch_bytes = 4 * (3 * l_chunk * d_inner + l_chunk * 2 * d_state
                         + l_chunk * dim + 8 * d_inner + d_state * d_inner)
    need = w_bytes + 4 * tile_bytes + scratch_bytes + (12 << 20)
    cap_limit = max(int(0.75 * cap), 32 << 20)
    vmem_limit = int(min(max(need, 32 << 20), cap_limit))

    # NOTE: the VMEM-carried SSM state / conv tail rely on the sequence axis
    # being iterated in order on one core: keep it innermost and "arbitrary".
    # On v7x megacore only the batch axis is split across the 2 TensorCores,
    # so prefer B >= 2 per call for full utilization.
    return pl.pallas_call(
        kernel,
        out_shape=jax.ShapeDtypeStruct((B, L, dim), x.dtype),
        grid=(B, n_l),
        in_specs=in_specs,
        out_specs=pl.BlockSpec((1, l_chunk, dim), lambda b, l: (b, l, 0)),
        scratch_shapes=scratch_shapes,
        compiler_params=pltpu.CompilerParams(
            dimension_semantics=("parallel", "arbitrary"),
            vmem_limit_bytes=vmem_limit,
        ),
    )(x, *weights)


def init_params(key, dim, d_state, d_conv, expand=2):
    d_inner = expand * dim
    dt_rank = math.ceil(dim / 16)
    hidden = 2 * dim
    ks = jax.random.split(key, 20)

    def rnd(k, shape, scale=0.1):
        return (scale * jax.random.normal(k, shape)).astype(jnp.float32)

    p = {}
    p["w_in_x"] = rnd(ks[0], (dim, d_inner))
    p["w_in_z"] = rnd(ks[1], (dim, d_inner))
    p["w_conv"] = rnd(ks[2], (d_conv, d_inner), 0.2)
    p["b_conv"] = rnd(ks[3], (1, d_inner))
    p["w_xdt"] = rnd(ks[4], (d_inner, dt_rank))
    p["w_xB"] = rnd(ks[5], (d_inner, d_state))
    p["w_xC"] = rnd(ks[6], (d_inner, d_state))
    p["w_dt"] = rnd(ks[7], (dt_rank, d_inner))
    p["b_dt"] = rnd(ks[8], (1, d_inner), 0.05)
    A = jnp.tile(jnp.arange(1, d_state + 1, dtype=jnp.float32)[:, None], (1, d_inner))
    p["a_logT"] = jnp.log(A)                        # (d_state, d_inner)
    p["d_param"] = jnp.ones((1, d_inner), jnp.float32)
    p["w_out"] = rnd(ks[9], (d_inner, dim))
    p["w01"] = rnd(ks[10], (dim, hidden))
    p["b01"] = rnd(ks[11], (1, hidden), 0.05)
    p["w02"] = rnd(ks[12], (hidden, dim))
    p["b02"] = rnd(ks[13], (1, dim), 0.05)
    p["w11"] = rnd(ks[14], (dim, hidden))
    p["b11"] = rnd(ks[15], (1, hidden), 0.05)
    p["w12"] = rnd(ks[16], (hidden, dim))
    p["b12"] = rnd(ks[17], (1, dim), 0.05)
    return p


def reference_forward(x, p, *, d_conv):
    # plain-JAX mirror of the PyTorch forward (HIGHEST-precision matmuls)
    hi = jax.lax.Precision.HIGHEST
    dot = functools.partial(jnp.dot, precision=hi)
    B, L, dim = x.shape
    skip = x
    h = _layernorm(x)
    xm = dot(h, p["w_in_x"])
    z = dot(h, p["w_in_z"])
    d_inner = xm.shape[-1]
    xpad = jnp.concatenate([jnp.zeros((B, d_conv - 1, d_inner), x.dtype), xm], axis=1)
    conv = jnp.broadcast_to(p["b_conv"], (B, L, d_inner))
    for k in range(d_conv):
        conv = conv + xpad[:, k:k + L, :] * p["w_conv"][k]
    xc = _silu(conv)
    dt_r = dot(xc, p["w_xdt"])
    Bm = dot(xc, p["w_xB"])
    Cm = dot(xc, p["w_xC"])
    delta = _softplus(dot(dt_r, p["w_dt"]) + p["b_dt"])
    A_T = -jnp.exp(p["a_logT"])                               # (d_state, d_inner)
    dA = jnp.exp(delta[:, :, None, :] * A_T[None, None])      # (B, L, n, d_inner)
    dBu = delta[:, :, None, :] * Bm[:, :, :, None] * xc[:, :, None, :]
    s = jnp.zeros((B, A_T.shape[0], d_inner), jnp.float32)
    ys = []
    for t in range(L):
        s = dA[:, t] * s + dBu[:, t]
        ys.append(jnp.einsum("bn,bnd->bd", Cm[:, t, :], s, precision=hi))
    y = jnp.stack(ys, axis=1)
    y = y + xc * p["d_param"]
    y = y * _silu(z)
    mamba_out = dot(y, p["w_out"])
    x2 = mamba_out + h
    h2 = _layernorm(x2)

    def ff(a, w1, b1, w2, b2):
        return dot(jnp.maximum(dot(a, w1) + b1, 0.0), w2) + b2

    e0 = ff(h2, p["w01"], p["b01"], p["w02"], p["b02"])
    e1 = ff(h2, p["w11"], p["b11"], p["w12"], p["b12"])
    return (e0 + e1) * 0.5 + skip


if __name__ == "__main__":
    # 128-aligned feature dims so matmul outputs / stores are lane-dense;
    # L split into two chunks so the SSM-state and conv-tail carries are used.
    dim, d_state, d_conv = 128, 16, 4
    B, L = 2, 32

    key = jax.random.PRNGKey(0)
    kx, kp = jax.random.split(key)
    x = jax.random.normal(kx, (B, L, dim), dtype=jnp.float32)
    params = init_params(kp, dim, d_state, d_conv)
    ref = reference_forward(x, params, d_conv=d_conv)

    # f32 weights, two-stage dt projection, f32 exp: tight correctness gate.
    fused32 = fuse_params(params, param_dtype=jnp.float32, fold_dt=False)
    out32 = jax.block_until_ready(mamba_moe_layer(x, fused32, l_chunk=16))
    assert out32.shape == (B, L, dim)
    assert bool(jnp.all(jnp.isfinite(out32)))
    err32 = float(jnp.max(jnp.abs(out32 - ref)))
    assert err32 < 2e-2, f"f32 max abs err {err32}"

    # bf16 weights + folded dt projection + bf16 exp (recommended on v6e/v7x;
    # keep exp_in_bf16=False on v5e).  f32 accumulation and f32 scan state.
    fused16 = fuse_params(params, param_dtype=jnp.bfloat16, fold_dt=True)
    out16 = jax.block_until_ready(
        mamba_moe_layer(x, fused16, l_chunk=16, exp_in_bf16=True))
    assert bool(jnp.all(jnp.isfinite(out16)))
    err16 = float(jnp.max(jnp.abs(out16 - ref)))
    assert err16 < 0.35, f"bf16 max abs err {err16}"

    print("KERNEL_OK")
</pallas_src>

<mosaic_0001>
module attributes {stable_mosaic.version = 11 : i64} {
  func.func @mamba_moe_kernel(%arg0: i32, %arg1: i32, %arg2: memref<1x16x128xf32, #tpu.memory_space<vmem>>, %arg3: memref<128x512xf32, #tpu.memory_space<vmem>>, %arg4: memref<4x256xf32, #tpu.memory_space<vmem>>, %arg5: memref<1x256xf32, #tpu.memory_space<vmem>>, %arg6: memref<256x40xf32, #tpu.memory_space<vmem>>, %arg7: memref<8x256xf32, #tpu.memory_space<vmem>>, %arg8: memref<1x256xf32, #tpu.memory_space<vmem>>, %arg9: memref<16x256xf32, #tpu.memory_space<vmem>>, %arg10: memref<1x256xf32, #tpu.memory_space<vmem>>, %arg11: memref<256x128xf32, #tpu.memory_space<vmem>>, %arg12: memref<128x512xf32, #tpu.memory_space<vmem>>, %arg13: memref<1x512xf32, #tpu.memory_space<vmem>>, %arg14: memref<512x128xf32, #tpu.memory_space<vmem>>, %arg15: memref<1x128xf32, #tpu.memory_space<vmem>>, %arg16: memref<1x16x128xf32, #tpu.memory_space<vmem>>, %arg17: memref<16x256xf32, #tpu.memory_space<vmem>>, %arg18: memref<16x256xf32, #tpu.memory_space<vmem>>, %arg19: memref<16x256xf32, #tpu.memory_space<vmem>>, %arg20: memref<16x32xf32, #tpu.memory_space<vmem>>, %arg21: memref<16x128xf32, #tpu.memory_space<vmem>>, %arg22: memref<8x256xf32, #tpu.memory_space<vmem>>, %arg23: memref<16x256xf32, #tpu.memory_space<vmem>>) attributes {dimension_semantics = [#tpu.dimension_semantics<parallel>, #tpu.dimension_semantics<arbitrary>], iteration_bounds = array<i64: 2, 2>, scalar_prefetch = 0 : i64, scratch_operands = 7 : i64, tpu.core_type = #tpu.core_type<tc>, window_params = [{transform_indices = @transform_0, window_bounds = array<i64: 1, 16, 128>}, {pipeline_mode = #tpu.pipeline_mode<synchronous>, transform_indices = @transform_1, window_bounds = array<i64: 128, 512>}, {pipeline_mode = #tpu.pipeline_mode<synchronous>, transform_indices = @transform_2, window_bounds = array<i64: 4, 256>}, {pipeline_mode = #tpu.pipeline_mode<synchronous>, transform_indices = @transform_3, window_bounds = array<i64: 1, 256>}, {pipeline_mode = #tpu.pipeline_mode<synchronous>, transform_indices = @transform_4, window_bounds = array<i64: 256, 40>}, {pipeline_mode = #tpu.pipeline_mode<synchronous>, transform_indices = @transform_5, window_bounds = array<i64: 8, 256>}, {pipeline_mode = #tpu.pipeline_mode<synchronous>, transform_indices = @transform_6, window_bounds = array<i64: 1, 256>}, {pipeline_mode = #tpu.pipeline_mode<synchronous>, transform_indices = @transform_7, window_bounds = array<i64: 16, 256>}, {pipeline_mode = #tpu.pipeline_mode<synchronous>, transform_indices = @transform_8, window_bounds = array<i64: 1, 256>}, {pipeline_mode = #tpu.pipeline_mode<synchronous>, transform_indices = @transform_9, window_bounds = array<i64: 256, 128>}, {pipeline_mode = #tpu.pipeline_mode<synchronous>, transform_indices = @transform_10, window_bounds = array<i64: 128, 512>}, {pipeline_mode = #tpu.pipeline_mode<synchronous>, transform_indices = @transform_11, window_bounds = array<i64: 1, 512>}, {pipeline_mode = #tpu.pipeline_mode<synchronous>, transform_indices = @transform_12, window_bounds = array<i64: 512, 128>}, {pipeline_mode = #tpu.pipeline_mode<synchronous>, transform_indices = @transform_13, window_bounds = array<i64: 1, 128>}, {transform_indices = @transform_14, window_bounds = array<i64: 1, 16, 128>}]} {
    %c0_i32 = arith.constant 0 : i32
    %0 = arith.cmpi eq, %arg1, %c0_i32 : i32
    %1 = arith.extui %0 : i1 to i32
    %c0_i32_0 = arith.constant 0 : i32
    %2 = arith.cmpi ne, %1, %c0_i32_0 : i32
    scf.if %2 {
      %cst_131 = arith.constant 0.000000e+00 : f32
      %555 = vector.broadcast %cst_131 : f32 to vector<8x256xf32>
      %c0_132 = arith.constant 0 : index
      %c0_133 = arith.constant 0 : index
      %556 = vector.load %arg22[%c0_132, %c0_133] : memref<8x256xf32, #tpu.memory_space<vmem>>, vector<8x256xf32>
      tpu.vector_store %arg22[%c0_132, %c0_133], %555 {strides = array<i32>} : memref<8x256xf32, #tpu.memory_space<vmem>>, vector<8x256xf32>,
      %cst_134 = arith.constant 0.000000e+00 : f32
      %557 = vector.broadcast %cst_134 : f32 to vector<16x256xf32>
      %c0_135 = arith.constant 0 : index
      %c0_136 = arith.constant 0 : index
      %558 = vector.load %arg23[%c0_135, %c0_136] : memref<16x256xf32, #tpu.memory_space<vmem>>, vector<16x256xf32>
      tpu.vector_store %arg23[%c0_135, %c0_136], %557 {strides = array<i32>} : memref<16x256xf32, #tpu.memory_space<vmem>>, vector<16x256xf32>,
    } else {
    }
    %c0 = arith.constant 0 : index
    %c0_1 = arith.constant 0 : index
    %c0_2 = arith.constant 0 : index
    %3 = vector.load %arg2[%c0, %c0_1, %c0_2] : memref<1x16x128xf32, #tpu.memory_space<vmem>>, vector<1x16x128xf32>
    %4 = vector.shape_cast %3 : vector<1x16x128xf32> to vector<16x128xf32>
    %cst = arith.constant dense<0.000000e+00> : vector<16xf32>
    %5 = vector.multi_reduction <add>, %4, %cst [1] : vector<16x128xf32> to vector<16xf32>
    %6 = vector.shape_cast %5 : vector<16xf32> to vector<16x1xf32>
    %cst_3 = arith.constant 1.280000e+02 : f32
    %7 = vector.broadcast %cst_3 : f32 to vector<16x1xf32>
    %8 = arith.divf %6, %7 : vector<16x1xf32>
    %9 = vector.broadcast %8 : vector<16x1xf32> to vector<16x128xf32>
    %10 = arith.subf %4, %9 : vector<16x128xf32>
    %11 = arith.mulf %10, %10 : vector<16x128xf32>
    %cst_4 = arith.constant dense<0.000000e+00> : vector<16xf32>
    %12 = vector.multi_reduction <add>, %11, %cst_4 [1] : vector<16x128xf32> to vector<16xf32>
    %13 = vector.shape_cast %12 : vector<16xf32> to vector<16x1xf32>
    %cst_5 = arith.constant 1.280000e+02 : f32
    %14 = vector.broadcast %cst_5 : f32 to vector<16x1xf32>
    %15 = arith.divf %13, %14 : vector<16x1xf32>
    %16 = vector.broadcast %8 : vector<16x1xf32> to vector<16x128xf32>
    %17 = arith.subf %4, %16 : vector<16x128xf32>
    %cst_6 = arith.constant 9.99999974E-6 : f32
    %18 = vector.broadcast %cst_6 : f32 to vector<16x1xf32>
    %19 = arith.addf %15, %18 : vector<16x1xf32>
    %20 = math.rsqrt %19 : vector<16x1xf32>
    %21 = vector.broadcast %20 : vector<16x1xf32> to vector<16x128xf32>
    %22 = arith.mulf %17, %21 : vector<16x128xf32>
    %c0_7 = arith.constant 0 : index
    %c0_8 = arith.constant 0 : index
    %23 = vector.load %arg21[%c0_7, %c0_8] : memref<16x128xf32, #tpu.memory_space<vmem>>, vector<16x128xf32>
    tpu.vector_store %arg21[%c0_7, %c0_8], %22 {strides = array<i32>} : memref<16x128xf32, #tpu.memory_space<vmem>>, vector<16x128xf32>,
    %c0_9 = arith.constant 0 : index
    %c0_10 = arith.constant 0 : index
    %24 = vector.load %arg3[%c0_9, %c0_10] : memref<128x512xf32, #tpu.memory_space<vmem>>, vector<128x512xf32>
    %cst_11 = arith.constant dense<0.000000e+00> : vector<16x512xf32>
    %25 = tpu.matmul %22, %24, %cst_11 {dimension_numbers = #tpu.dot_dimension_numbers<[1], [0], [0], [1], [0, 0, 1, 1], [], []>} : vector<16x128xf32>, vector<128x512xf32>, vector<16x512xf32> -> vector<16x512xf32>
    %26 = vector.extract_strided_slice %25 {offsets = [0, 0], sizes = [16, 256], strides = [1, 1]} : vector<16x512xf32> to vector<16x256xf32>
    %27 = vector.extract_strided_slice %25 {offsets = [0, 256], sizes = [16, 256], strides = [1, 1]} : vector<16x512xf32> to vector<16x256xf32>
    %cst_12 = arith.constant 0.000000e+00 : f32
    %28 = vector.broadcast %cst_12 : f32 to vector<16x256xf32>
    %29 = arith.subf %28, %27 : vector<16x256xf32>
    %30 = math.exp %29 : vector<16x256xf32>
    %cst_13 = arith.constant 1.000000e+00 : f32
    %31 = vector.broadcast %cst_13 : f32 to vector<16x256xf32>
    %32 = arith.addf %31, %30 : vector<16x256xf32>
    %cst_14 = arith.constant 1.000000e+00 : f32
    %33 = vector.broadcast %cst_14 : f32 to vector<16x256xf32>
    %34 = arith.divf %33, %32 : vector<16x256xf32>
    %35 = arith.mulf %27, %34 : vector<16x256xf32>
    %c0_15 = arith.constant 0 : index
    %c0_16 = arith.constant 0 : index
    %36 = vector.load %arg19[%c0_15, %c0_16] : memref<16x256xf32, #tpu.memory_space<vmem>>, vector<16x256xf32>
    tpu.vector_store %arg19[%c0_15, %c0_16], %35 {strides = array<i32>} : memref<16x256xf32, #tpu.memory_space<vmem>>, vector<16x256xf32>,
    %c0_17 = arith.constant 0 : index
    %c0_18 = arith.constant 0 : index
    %37 = vector.load %arg4[%c0_17, %c0_18] : memref<4x256xf32, #tpu.memory_space<vmem>>, vector<4x256xf32>
    %c0_19 = arith.constant 0 : index
    %c0_20 = arith.constant 0 : index
    %38 = vector.load %arg5[%c0_19, %c0_20] : memref<1x256xf32, #tpu.memory_space<vmem>>, vector<1x256xf32>
    %39 = vector.extract_strided_slice %37 {offsets = [3, 0], sizes = [1, 256], strides = [1, 1]} : vector<4x256xf32> to vector<1x256xf32>
    %40 = vector.broadcast %39 : vector<1x256xf32> to vector<16x256xf32>
    %41 = arith.mulf %26, %40 : vector<16x256xf32>
    %42 = vector.broadcast %38 : vector<1x256xf32> to vector<16x256xf32>
    %43 = arith.addf %41, %42 : vector<16x256xf32>
    %c3_i32 = arith.constant 3 : i32
    %44 = tpu.dynamic_rotate %26 by %c3_i32 dim 0 : vector<16x256xf32>, i32 -> vector<16x256xf32>
    %45 = vector.extract_strided_slice %37 {offsets = [0, 0], sizes = [1, 256], strides = [1, 1]} : vector<4x256xf32> to vector<1x256xf32>
    %46 = vector.broadcast %45 : vector<1x256xf32> to vector<16x256xf32>
    %47 = arith.mulf %44, %46 : vector<16x256xf32>
    %48 = arith.addf %43, %47 : vector<16x256xf32>
    %c2_i32 = arith.constant 2 : i32
    %49 = tpu.dynamic_rotate %26 by %c2_i32 dim 0 : vector<16x256xf32>, i32 -> vector<16x256xf32>
    %50 = vector.extract_strided_slice %37 {offsets = [1, 0], sizes = [1, 256], strides = [1, 1]} : vector<4x256xf32> to vector<1x256xf32>
    %51 = vector.broadcast %50 : vector<1x256xf32> to vector<16x256xf32>
    %52 = arith.mulf %49, %51 : vector<16x256xf32>
    %53 = arith.addf %48, %52 : vector<16x256xf32>
    %c1_i32 = arith.constant 1 : i32
    %54 = tpu.dynamic_rotate %26 by %c1_i32 dim 0 : vector<16x256xf32>, i32 -> vector<16x256xf32>
    %55 = vector.extract_strided_slice %37 {offsets = [2, 0], sizes = [1, 256], strides = [1, 1]} : vector<4x256xf32> to vector<1x256xf32>
    %56 = vector.broadcast %55 : vector<1x256xf32> to vector<16x256xf32>
    %57 = arith.mulf %54, %56 : vector<16x256xf32>
    %58 = arith.addf %53, %57 : vector<16x256xf32>
    %cst_21 = arith.constant 0.000000e+00 : f32
    %59 = vector.broadcast %cst_21 : f32 to vector<16x256xf32>
    %60 = arith.subf %59, %58 : vector<16x256xf32>
    %61 = math.exp %60 : vector<16x256xf32>
    %cst_22 = arith.constant 1.000000e+00 : f32
    %62 = vector.broadcast %cst_22 : f32 to vector<16x256xf32>
    %63 = arith.addf %62, %61 : vector<16x256xf32>
    %cst_23 = arith.constant 1.000000e+00 : f32
    %64 = vector.broadcast %cst_23 : f32 to vector<16x256xf32>
    %65 = arith.divf %64, %63 : vector<16x256xf32>
    %66 = arith.mulf %58, %65 : vector<16x256xf32>
    %c0_24 = arith.constant 0 : index
    %c0_25 = arith.constant 0 : index
    %67 = vector.load %arg17[%c0_24, %c0_25] : memref<16x256xf32, #tpu.memory_space<vmem>>, vector<16x256xf32>
    tpu.vector_store %arg17[%c0_24, %c0_25], %66 {strides = array<i32>} : memref<16x256xf32, #tpu.memory_space<vmem>>, vector<16x256xf32>,
    %c0_26 = arith.constant 0 : index
    %c0_27 = arith.constant 0 : index
    %68 = vector.load %arg22[%c0_26, %c0_27] : memref<8x256xf32, #tpu.memory_space<vmem>>, vector<8x256xf32>
    %69 = vector.extract_strided_slice %26 {offsets = [0, 0], sizes = [8, 256], strides = [1, 1]} : vector<16x256xf32> to vector<8x256xf32>
    %70 = tpu.iota {dimensions = array<i32: 0>} : vector<8x1xi32>
    %71 = vector.extract_strided_slice %37 {offsets = [3, 0], sizes = [1, 256], strides = [1, 1]} : vector<4x256xf32> to vector<1x256xf32>
    %72 = vector.broadcast %71 : vector<1x256xf32> to vector<8x256xf32>
    %73 = arith.mulf %69, %72 : vector<8x256xf32>
    %74 = vector.broadcast %38 : vector<1x256xf32> to vector<8x256xf32>
    %75 = arith.addf %73, %74 : vector<8x256xf32>
    %c3_i32_28 = arith.constant 3 : i32
    %76 = tpu.dynamic_rotate %69 by %c3_i32_28 dim 0 : vector<8x256xf32>, i32 -> vector<8x256xf32>
    %c3_i32_29 = arith.constant 3 : i32
    %77 = tpu.dynamic_rotate %68 by %c3_i32_29 dim 0 : vector<8x256xf32>, i32 -> vector<8x256xf32>
    %c3_i32_30 = arith.constant 3 : i32
    %78 = vector.broadcast %c3_i32_30 : i32 to vector<8x1xi32>
    %79 = arith.cmpi sge, %70, %78 : vector<8x1xi32>
    %80 = vector.shape_cast %79 : vector<8x1xi1> to vector<8x1xi1>
    %81 = vector.broadcast %80 : vector<8x1xi1> to vector<8x256xi1>
    %82 = arith.select %81, %76, %77 : vector<8x256xi1>, vector<8x256xf32>
    %83 = vector.extract_strided_slice %37 {offsets = [0, 0], sizes = [1, 256], strides = [1, 1]} : vector<4x256xf32> to vector<1x256xf32>
    %84 = vector.broadcast %83 : vector<1x256xf32> to vector<8x256xf32>
    %85 = arith.mulf %82, %84 : vector<8x256xf32>
    %86 = arith.addf %75, %85 : vector<8x256xf32>
    %c2_i32_31 = arith.constant 2 : i32
    %87 = tpu.dynamic_rotate %69 by %c2_i32_31 dim 0 : vector<8x256xf32>, i32 -> vector<8x256xf32>
    %c2_i32_32 = arith.constant 2 : i32
    %88 = tpu.dynamic_rotate %68 by %c2_i32_32 dim 0 : vector<8x256xf32>, i32 -> vector<8x256xf32>
    %c2_i32_33 = arith.constant 2 : i32
    %89 = vector.broadcast %c2_i32_33 : i32 to vector<8x1xi32>
    %90 = arith.cmpi sge, %70, %89 : vector<8x1xi32>
    %91 = vector.shape_cast %90 : vector<8x1xi1> to vector<8x1xi1>
    %92 = vector.broadcast %91 : vector<8x1xi1> to vector<8x256xi1>
    %93 = arith.select %92, %87, %88 : vector<8x256xi1>, vector<8x256xf32>
    %94 = vector.extract_strided_slice %37 {offsets = [1, 0], sizes = [1, 256], strides = [1, 1]} : vector<4x256xf32> to vector<1x256xf32>
    %95 = vector.broadcast %94 : vector<1x256xf32> to vector<8x256xf32>
    %96 = arith.mulf %93, %95 : vector<8x256xf32>
    %97 = arith.addf %86, %96 : vector<8x256xf32>
    %c1_i32_34 = arith.constant 1 : i32
    %98 = tpu.dynamic_rotate %69 by %c1_i32_34 dim 0 : vector<8x256xf32>, i32 -> vector<8x256xf32>
    %c1_i32_35 = arith.constant 1 : i32
    %99 = tpu.dynamic_rotate %68 by %c1_i32_35 dim 0 : vector<8x256xf32>, i32 -> vector<8x256xf32>
    %c1_i32_36 = arith.constant 1 : i32
    %100 = vector.broadcast %c1_i32_36 : i32 to vector<8x1xi32>
    %101 = arith.cmpi sge, %70, %100 : vector<8x1xi32>
    %102 = vector.shape_cast %101 : vector<8x1xi1> to vector<8x1xi1>
    %103 = vector.broadcast %102 : vector<8x1xi1> to vector<8x256xi1>
    %104 = arith.select %103, %98, %99 : vector<8x256xi1>, vector<8x256xf32>
    %105 = vector.extract_strided_slice %37 {offsets = [2, 0], sizes = [1, 256], strides = [1, 1]} : vector<4x256xf32> to vector<1x256xf32>
    %106 = vector.broadcast %105 : vector<1x256xf32> to vector<8x256xf32>
    %107 = arith.mulf %104, %106 : vector<8x256xf32>
    %108 = arith.addf %97, %107 : vector<8x256xf32>
    %cst_37 = arith.constant 0.000000e+00 : f32
    %109 = vector.broadcast %cst_37 : f32 to vector<8x256xf32>
    %110 = arith.subf %109, %108 : vector<8x256xf32>
    %111 = math.exp %110 : vector<8x256xf32>
    %cst_38 = arith.constant 1.000000e+00 : f32
    %112 = vector.broadcast %cst_38 : f32 to vector<8x256xf32>
    %113 = arith.addf %112, %111 : vector<8x256xf32>
    %cst_39 = arith.constant 1.000000e+00 : f32
    %114 = vector.broadcast %cst_39 : f32 to vector<8x256xf32>
    %115 = arith.divf %114, %113 : vector<8x256xf32>
    %116 = arith.mulf %108, %115 : vector<8x256xf32>
    %c0_40 = arith.constant 0 : index
    %c0_41 = arith.constant 0 : index
    %117 = vector.load %arg17[%c0_40, %c0_41] : memref<16x256xf32, #tpu.memory_space<vmem>>, vector<8x256xf32>
    tpu.vector_store %arg17[%c0_40, %c0_41], %116 {strides = array<i32>} : memref<16x256xf32, #tpu.memory_space<vmem>>, vector<8x256xf32>,
    %118 = vector.extract_strided_slice %26 {offsets = [8, 0], sizes = [8, 256], strides = [1, 1]} : vector<16x256xf32> to vector<8x256xf32>
    %c0_42 = arith.constant 0 : index
    %c0_43 = arith.constant 0 : index
    %119 = vector.load %arg22[%c0_42, %c0_43] : memref<8x256xf32, #tpu.memory_space<vmem>>, vector<8x256xf32>
    tpu.vector_store %arg22[%c0_42, %c0_43], %118 {strides = array<i32>} : memref<8x256xf32, #tpu.memory_space<vmem>>, vector<8x256xf32>,
    %c0_44 = arith.constant 0 : index
    %c0_45 = arith.constant 0 : index
    %120 = vector.load %arg17[%c0_44, %c0_45] : memref<16x256xf32, #tpu.memory_space<vmem>>, vector<16x256xf32>
    %c0_46 = arith.constant 0 : index
    %c0_47 = arith.constant 0 : index
    %121 = vector.load %arg6[%c0_46, %c0_47] : memref<256x40xf32, #tpu.memory_space<vmem>>, vector<256x40xf32>
    %cst_48 = arith.constant dense<0.000000e+00> : vector<16x40xf32>
    %122 = tpu.matmul %120, %121, %cst_48 {dimension_numbers = #tpu.dot_dimension_numbers<[1], [0], [0], [1], [0, 0, 1, 1], [], []>} : vector<16x256xf32>, vector<256x40xf32>, vector<16x40xf32> -> vector<16x40xf32>
    %123 = vector.extract_strided_slice %122 {offsets = [0, 0], sizes = [16, 8], strides = [1, 1]} : vector<16x40xf32> to vector<16x8xf32>
    %c0_49 = arith.constant 0 : index
    %c0_50 = arith.constant 0 : index
    %124 = vector.load %arg7[%c0_49, %c0_50] : memref<8x256xf32, #tpu.memory_space<vmem>>, vector<8x256xf32>
    %cst_51 = arith.constant dense<0.000000e+00> : vector<16x256xf32>
    %125 = tpu.matmul %123, %124, %cst_51 {dimension_numbers = #tpu.dot_dimension_numbers<[1], [0], [0], [1], [0, 0, 1, 1], [], []>} : vector<16x8xf32>, vector<8x256xf32>, vector<16x256xf32> -> vector<16x256xf32>
    %126 = vector.extract_strided_slice %122 {offsets = [0, 8], sizes = [16, 32], strides = [1, 1]} : vector<16x40xf32> to vector<16x32xf32>
    %c0_52 = arith.constant 0 : index
    %c0_53 = arith.constant 0 : index
    %127 = vector.load %arg20[%c0_52, %c0_53] : memref<16x32xf32, #tpu.memory_space<vmem>>, vector<16x32xf32>
    tpu.vector_store %arg20[%c0_52, %c0_53], %126 {strides = array<i32>} : memref<16x32xf32, #tpu.memory_space<vmem>>, vector<16x32xf32>,
    %c0_54 = arith.constant 0 : index
    %c0_55 = arith.constant 0 : index
    %128 = vector.load %arg8[%c0_54, %c0_55] : memref<1x256xf32, #tpu.memory_space<vmem>>, vector<1x256xf32>
    %129 = vector.broadcast %128 : vector<1x256xf32> to vector<16x256xf32>
    %130 = arith.addf %125, %129 : vector<16x256xf32>
    %cst_56 = arith.constant 2.000000e+01 : f32
    %131 = vector.broadcast %cst_56 : f32 to vector<16x256xf32>
    %132 = arith.cmpf ogt, %130, %131 : vector<16x256xf32>
    %cst_57 = arith.constant 2.000000e+01 : f32
    %133 = vector.broadcast %cst_57 : f32 to vector<16x256xf32>
    %134 = arith.minimumf %130, %133 : vector<16x256xf32>
    %135 = math.exp %134 : vector<16x256xf32>
    %136 = math.log1p %135 : vector<16x256xf32>
    %137 = arith.select %132, %130, %136 : vector<16x256xi1>, vector<16x256xf32>
    %c0_58 = arith.constant 0 : index
    %c0_59 = arith.constant 0 : index
    %138 = vector.load %arg18[%c0_58, %c0_59] : memref<16x256xf32, #tpu.memory_space<vmem>>, vector<16x256xf32>
    tpu.vector_store %arg18[%c0_58, %c0_59], %137 {strides = array<i32>} : memref<16x256xf32, #tpu.memory_space<vmem>>, vector<16x256xf32>,
    %c0_60 = arith.constant 0 : index
    %c0_61 = arith.constant 0 : index
    %139 = vector.load %arg9[%c0_60, %c0_61] : memref<16x256xf32, #tpu.memory_space<vmem>>, vector<16x256xf32>
    %c0_62 = arith.constant 0 : index
    %c0_63 = arith.constant 0 : index
    %140 = vector.load %arg10[%c0_62, %c0_63] : memref<1x256xf32, #tpu.memory_space<vmem>>, vector<1x256xf32>
    %141 = tpu.iota {dimensions = array<i32: 0>} : vector<32x32xi32>
    %142 = tpu.iota {dimensions = array<i32: 1>} : vector<32x32xi32>
    %143 = arith.cmpi eq, %141, %142 : vector<32x32xi32>
    %144 = arith.extui %143 : vector<32x32xi1> to vector<32x32xi32>
    %145 = arith.sitofp %144 : vector<32x32xi32> to vector<32x32xf32>
    %c0_i32_64 = arith.constant 0 : i32
    %c8_i32 = arith.constant 8 : i32
    %146 = arith.muli %c0_i32_64, %c8_i32 : i32
    %147 = tpu.assume_multiple %146, 8 : i32
    %148 = arith.index_cast %147 : i32 to index
    %c0_65 = arith.constant 0 : index
    %149 = vector.load %arg18[%148, %c0_65] : memref<16x256xf32, #tpu.memory_space<vmem>>, vector<8x256xf32>
    %150 = arith.index_cast %147 : i32 to index
    %c0_66 = arith.constant 0 : index
    %151 = vector.load %arg17[%150, %c0_66] : memref<16x256xf32, #tpu.memory_space<vmem>>, vector<8x256xf32>
    %152 = arith.index_cast %147 : i32 to index
    %c0_67 = arith.constant 0 : index
    %153 = vector.load %arg19[%152, %c0_67] : memref<16x256xf32, #tpu.memory_space<vmem>>, vector<8x256xf32>
    %154 = arith.index_cast %147 : i32 to index
    %c0_68 = arith.constant 0 : index
    %155 = vector.load %arg20[%154, %c0_68] : memref<16x32xf32, #tpu.memory_space<vmem>>, vector<8x32xf32>
    %cst_69 = arith.constant dense<0.000000e+00> : vector<32x8xf32>
    %156 = tpu.matmul %145, %155, %cst_69 {dimension_numbers = #tpu.dot_dimension_numbers<[1], [1], [0], [0], [0, 0, 1, 0], [], []>} : vector<32x32xf32>, vector<8x32xf32>, vector<32x8xf32> -> vector<32x8xf32>
    %c0_70 = arith.constant 0 : index
    %c0_71 = arith.constant 0 : index
    %157 = vector.load %arg23[%c0_70, %c0_71] : memref<16x256xf32, #tpu.memory_space<vmem>>, vector<16x256xf32>
    %158 = vector.extract_strided_slice %149 {offsets = [0, 0], sizes = [1, 256], strides = [1, 1]} : vector<8x256xf32> to vector<1x256xf32>
    %159 = vector.extract_strided_slice %151 {offsets = [0, 0], sizes = [1, 256], strides = [1, 1]} : vector<8x256xf32> to vector<1x256xf32>
    %160 = vector.broadcast %158 : vector<1x256xf32> to vector<16x256xf32>
    %161 = arith.mulf %160, %139 : vector<16x256xf32>
    %162 = math.exp %161 : vector<16x256xf32>
    %163 = vector.extract_strided_slice %156 {offsets = [0, 0], sizes = [16, 1], strides = [1, 1]} : vector<32x8xf32> to vector<16x1xf32>
    %164 = vector.extract_strided_slice %156 {offsets = [16, 0], sizes = [16, 1], strides = [1, 1]} : vector<32x8xf32> to vector<16x1xf32>
    %165 = arith.mulf %162, %157 : vector<16x256xf32>
    %166 = arith.mulf %158, %159 : vector<1x256xf32>
    %167 = vector.broadcast %166 : vector<1x256xf32> to vector<16x256xf32>
    %168 = vector.broadcast %163 : vector<16x1xf32> to vector<16x256xf32>
    %169 = arith.mulf %167, %168 : vector<16x256xf32>
    %170 = arith.addf %165, %169 : vector<16x256xf32>
    %171 = vector.broadcast %164 : vector<16x1xf32> to vector<16x256xf32>
    %172 = arith.mulf %171, %170 : vector<16x256xf32>
    %cst_72 = arith.constant dense<0.000000e+00> : vector<256xf32>
    %173 = vector.multi_reduction <add>, %172, %cst_72 [0] : vector<16x256xf32> to vector<256xf32>
    %174 = vector.shape_cast %173 : vector<256xf32> to vector<1x256xf32>
    %175 = arith.mulf %159, %140 : vector<1x256xf32>
    %176 = arith.addf %174, %175 : vector<1x256xf32>
    %177 = vector.extract_strided_slice %153 {offsets = [0, 0], sizes = [1, 256], strides = [1, 1]} : vector<8x256xf32> to vector<1x256xf32>
    %178 = arith.mulf %176, %177 : vector<1x256xf32>
    %179 = vector.extract_strided_slice %149 {offsets = [1, 0], sizes = [1, 256], strides = [1, 1]} : vector<8x256xf32> to vector<1x256xf32>
    %180 = vector.extract_strided_slice %151 {offsets = [1, 0], sizes = [1, 256], strides = [1, 1]} : vector<8x256xf32> to vector<1x256xf32>
    %181 = vector.broadcast %179 : vector<1x256xf32> to vector<16x256xf32>
    %182 = arith.mulf %181, %139 : vector<16x256xf32>
    %183 = math.exp %182 : vector<16x256xf32>
    %184 = vector.extract_strided_slice %156 {offsets = [0, 1], sizes = [16, 1], strides = [1, 1]} : vector<32x8xf32> to vector<16x1xf32>
    %185 = vector.extract_strided_slice %156 {offsets = [16, 1], sizes = [16, 1], strides = [1, 1]} : vector<32x8xf32> to vector<16x1xf32>
    %186 = arith.mulf %183, %170 : vector<16x256xf32>
    %187 = arith.mulf %179, %180 : vector<1x256xf32>
    %188 = vector.broadcast %187 : vector<1x256xf32> to vector<16x256xf32>
    %189 = vector.broadcast %184 : vector<16x1xf32> to vector<16x256xf32>
    %190 = arith.mulf %188, %189 : vector<16x256xf32>
    %191 = arith.addf %186, %190 : vector<16x256xf32>
    %192 = vector.broadcast %185 : vector<16x1xf32> to vector<16x256xf32>
    %193 = arith.mulf %192, %191 : vector<16x256xf32>
    %cst_73 = arith.constant dense<0.000000e+00> : vector<256xf32>
    %194 = vector.multi_reduction <add>, %193, %cst_73 [0] : vector<16x256xf32> to vector<256xf32>
    %195 = vector.shape_cast %194 : vector<256xf32> to vector<1x256xf32>
    %196 = arith.mulf %180, %140 : vector<1x256xf32>
    %197 = arith.addf %195, %196 : vector<1x256xf32>
    %198 = vector.extract_strided_slice %153 {offsets = [1, 0], sizes = [1, 256], strides = [1, 1]} : vector<8x256xf32> to vector<1x256xf32>
    %199 = arith.mulf %197, %198 : vector<1x256xf32>
    %200 = vector.extract_strided_slice %149 {offsets = [2, 0], sizes = [1, 256], strides = [1, 1]} : vector<8x256xf32> to vector<1x256xf32>
    %201 = vector.extract_strided_slice %151 {offsets = [2, 0], sizes = [1, 256], strides = [1, 1]} : vector<8x256xf32> to vector<1x256xf32>
    %202 = vector.broadcast %200 : vector<1x256xf32> to vector<16x256xf32>
    %203 = arith.mulf %202, %139 : vector<16x256xf32>
    %204 = math.exp %203 : vector<16x256xf32>
    %205 = vector.extract_strided_slice %156 {offsets = [0, 2], sizes = [16, 1], strides = [1, 1]} : vector<32x8xf32> to vector<16x1xf32>
    %206 = vector.extract_strided_slice %156 {offsets = [16, 2], sizes = [16, 1], strides = [1, 1]} : vector<32x8xf32> to vector<16x1xf32>
    %207 = arith.mulf %204, %191 : vector<16x256xf32>
    %208 = arith.mulf %200, %201 : vector<1x256xf32>
    %209 = vector.broadcast %208 : vector<1x256xf32> to vector<16x256xf32>
    %210 = vector.broadcast %205 : vector<16x1xf32> to vector<16x256xf32>
    %211 = arith.mulf %209, %210 : vector<16x256xf32>
    %212 = arith.addf %207, %211 : vector<16x256xf32>
    %213 = vector.broadcast %206 : vector<16x1xf32> to vector<16x256xf32>
    %214 = arith.mulf %213, %212 : vector<16x256xf32>
    %cst_74 = arith.constant dense<0.000000e+00> : vector<256xf32>
    %215 = vector.multi_reduction <add>, %214, %cst_74 [0] : vector<16x256xf32> to vector<256xf32>
    %216 = vector.shape_cast %215 : vector<256xf32> to vector<1x256xf32>
    %217 = arith.mulf %201, %140 : vector<1x256xf32>
    %218 = arith.addf %216, %217 : vector<1x256xf32>
    %219 = vector.extract_strided_slice %153 {offsets = [2, 0], sizes = [1, 256], strides = [1, 1]} : vector<8x256xf32> to vector<1x256xf32>
    %220 = arith.mulf %218, %219 : vector<1x256xf32>
    %221 = vector.extract_strided_slice %149 {offsets = [3, 0], sizes = [1, 256], strides = [1, 1]} : vector<8x256xf32> to vector<1x256xf32>
    %222 = vector.extract_strided_slice %151 {offsets = [3, 0], sizes = [1, 256], strides = [1, 1]} : vector<8x256xf32> to vector<1x256xf32>
    %223 = vector.broadcast %221 : vector<1x256xf32> to vector<16x256xf32>
    %224 = arith.mulf %223, %139 : vector<16x256xf32>
    %225 = math.exp %224 : vector<16x256xf32>
    %226 = vector.extract_strided_slice %156 {offsets = [0, 3], sizes = [16, 1], strides = [1, 1]} : vector<32x8xf32> to vector<16x1xf32>
    %227 = vector.extract_strided_slice %156 {offsets = [16, 3], sizes = [16, 1], strides = [1, 1]} : vector<32x8xf32> to vector<16x1xf32>
    %228 = arith.mulf %225, %212 : vector<16x256xf32>
    %229 = arith.mulf %221, %222 : vector<1x256xf32>
    %230 = vector.broadcast %229 : vector<1x256xf32> to vector<16x256xf32>
    %231 = vector.broadcast %226 : vector<16x1xf32> to vector<16x256xf32>
    %232 = arith.mulf %230, %231 : vector<16x256xf32>
    %233 = arith.addf %228, %232 : vector<16x256xf32>
    %234 = vector.broadcast %227 : vector<16x1xf32> to vector<16x256xf32>
    %235 = arith.mulf %234, %233 : vector<16x256xf32>
    %cst_75 = arith.constant dense<0.000000e+00> : vector<256xf32>
    %236 = vector.multi_reduction <add>, %235, %cst_75 [0] : vector<16x256xf32> to vector<256xf32>
    %237 = vector.shape_cast %236 : vector<256xf32> to vector<1x256xf32>
    %238 = arith.mulf %222, %140 : vector<1x256xf32>
    %239 = arith.addf %237, %238 : vector<1x256xf32>
    %240 = vector.extract_strided_slice %153 {offsets = [3, 0], sizes = [1, 256], strides = [1, 1]} : vector<8x256xf32> to vector<1x256xf32>
    %241 = arith.mulf %239, %240 : vector<1x256xf32>
    %242 = vector.extract_strided_slice %149 {offsets = [4, 0], sizes = [1, 256], strides = [1, 1]} : vector<8x256xf32> to vector<1x256xf32>
    %243 = vector.extract_strided_slice %151 {offsets = [4, 0], sizes = [1, 256], strides = [1, 1]} : vector<8x256xf32> to vector<1x256xf32>
    %244 = vector.broadcast %242 : vector<1x256xf32> to vector<16x256xf32>
    %245 = arith.mulf %244, %139 : vector<16x256xf32>
    %246 = math.exp %245 : vector<16x256xf32>
    %247 = vector.extract_strided_slice %156 {offsets = [0, 4], sizes = [16, 1], strides = [1, 1]} : vector<32x8xf32> to vector<16x1xf32>
    %248 = vector.extract_strided_slice %156 {offsets = [16, 4], sizes = [16, 1], strides = [1, 1]} : vector<32x8xf32> to vector<16x1xf32>
    %249 = arith.mulf %246, %233 : vector<16x256xf32>
    %250 = arith.mulf %242, %243 : vector<1x256xf32>
    %251 = vector.broadcast %250 : vector<1x256xf32> to vector<16x256xf32>
    %252 = vector.broadcast %247 : vector<16x1xf32> to vector<16x256xf32>
    %253 = arith.mulf %251, %252 : vector<16x256xf32>
    %254 = arith.addf %249, %253 : vector<16x256xf32>
    %255 = vector.broadcast %248 : vector<16x1xf32> to vector<16x256xf32>
    %256 = arith.mulf %255, %254 : vector<16x256xf32>
    %cst_76 = arith.constant dense<0.000000e+00> : vector<256xf32>
    %257 = vector.multi_reduction <add>, %256, %cst_76 [0] : vector<16x256xf32> to vector<256xf32>
    %258 = vector.shape_cast %257 : vector<256xf32> to vector<1x256xf32>
    %259 = arith.mulf %243, %140 : vector<1x256xf32>
    %260 = arith.addf %258, %259 : vector<1x256xf32>
    %261 = vector.extract_strided_slice %153 {offsets = [4, 0], sizes = [1, 256], strides = [1, 1]} : vector<8x256xf32> to vector<1x256xf32>
    %262 = arith.mulf %260, %261 : vector<1x256xf32>
    %263 = vector.extract_strided_slice %149 {offsets = [5, 0], sizes = [1, 256], strides = [1, 1]} : vector<8x256xf32> to vector<1x256xf32>
    %264 = vector.extract_strided_slice %151 {offsets = [5, 0], sizes = [1, 256], strides = [1, 1]} : vector<8x256xf32> to vector<1x256xf32>
    %265 = vector.broadcast %263 : vector<1x256xf32> to vector<16x256xf32>
    %266 = arith.mulf %265, %139 : vector<16x256xf32>
    %267 = math.exp %266 : vector<16x256xf32>
    %268 = vector.extract_strided_slice %156 {offsets = [0, 5], sizes = [16, 1], strides = [1, 1]} : vector<32x8xf32> to vector<16x1xf32>
    %269 = vector.extract_strided_slice %156 {offsets = [16, 5], sizes = [16, 1], strides = [1, 1]} : vector<32x8xf32> to vector<16x1xf32>
    %270 = arith.mulf %267, %254 : vector<16x256xf32>
    %271 = arith.mulf %263, %264 : vector<1x256xf32>
    %272 = vector.broadcast %271 : vector<1x256xf32> to vector<16x256xf32>
    %273 = vector.broadcast %268 : vector<16x1xf32> to vector<16x256xf32>
    %274 = arith.mulf %272, %273 : vector<16x256xf32>
    %275 = arith.addf %270, %274 : vector<16x256xf32>
    %276 = vector.broadcast %269 : vector<16x1xf32> to vector<16x256xf32>
    %277 = arith.mulf %276, %275 : vector<16x256xf32>
    %cst_77 = arith.constant dense<0.000000e+00> : vector<256xf32>
    %278 = vector.multi_reduction <add>, %277, %cst_77 [0] : vector<16x256xf32> to vector<256xf32>
    %279 = vector.shape_cast %278 : vector<256xf32> to vector<1x256xf32>
    %280 = arith.mulf %264, %140 : vector<1x256xf32>
    %281 = arith.addf %279, %280 : vector<1x256xf32>
    %282 = vector.extract_strided_slice %153 {offsets = [5, 0], sizes = [1, 256], strides = [1, 1]} : vector<8x256xf32> to vector<1x256xf32>
    %283 = arith.mulf %281, %282 : vector<1x256xf32>
    %284 = vector.extract_strided_slice %149 {offsets = [6, 0], sizes = [1, 256], strides = [1, 1]} : vector<8x256xf32> to vector<1x256xf32>
    %285 = vector.extract_strided_slice %151 {offsets = [6, 0], sizes = [1, 256], strides = [1, 1]} : vector<8x256xf32> to vector<1x256xf32>
    %286 = vector.broadcast %284 : vector<1x256xf32> to vector<16x256xf32>
    %287 = arith.mulf %286, %139 : vector<16x256xf32>
    %288 = math.exp %287 : vector<16x256xf32>
    %289 = vector.extract_strided_slice %156 {offsets = [0, 6], sizes = [16, 1], strides = [1, 1]} : vector<32x8xf32> to vector<16x1xf32>
    %290 = vector.extract_strided_slice %156 {offsets = [16, 6], sizes = [16, 1], strides = [1, 1]} : vector<32x8xf32> to vector<16x1xf32>
    %291 = arith.mulf %288, %275 : vector<16x256xf32>
    %292 = arith.mulf %284, %285 : vector<1x256xf32>
    %293 = vector.broadcast %292 : vector<1x256xf32> to vector<16x256xf32>
    %294 = vector.broadcast %289 : vector<16x1xf32> to vector<16x256xf32>
    %295 = arith.mulf %293, %294 : vector<16x256xf32>
    %296 = arith.addf %291, %295 : vector<16x256xf32>
    %297 = vector.broadcast %290 : vector<16x1xf32> to vector<16x256xf32>
    %298 = arith.mulf %297, %296 : vector<16x256xf32>
    %cst_78 = arith.constant dense<0.000000e+00> : vector<256xf32>
    %299 = vector.multi_reduction <add>, %298, %cst_78 [0] : vector<16x256xf32> to vector<256xf32>
    %300 = vector.shape_cast %299 : vector<256xf32> to vector<1x256xf32>
    %301 = arith.mulf %285, %140 : vector<1x256xf32>
    %302 = arith.addf %300, %301 : vector<1x256xf32>
    %303 = vector.extract_strided_slice %153 {offsets = [6, 0], sizes = [1, 256], strides = [1, 1]} : vector<8x256xf32> to vector<1x256xf32>
    %304 = arith.mulf %302, %303 : vector<1x256xf32>
    %305 = vector.extract_strided_slice %149 {offsets = [7, 0], sizes = [1, 256], strides = [1, 1]} : vector<8x256xf32> to vector<1x256xf32>
    %306 = vector.extract_strided_slice %151 {offsets = [7, 0], sizes = [1, 256], strides = [1, 1]} : vector<8x256xf32> to vector<1x256xf32>
    %307 = vector.broadcast %305 : vector<1x256xf32> to vector<16x256xf32>
    %308 = arith.mulf %307, %139 : vector<16x256xf32>
    %309 = math.exp %308 : vector<16x256xf32>
    %310 = vector.extract_strided_slice %156 {offsets = [0, 7], sizes = [16, 1], strides = [1, 1]} : vector<32x8xf32> to vector<16x1xf32>
    %311 = vector.extract_strided_slice %156 {offsets = [16, 7], sizes = [16, 1], strides = [1, 1]} : vector<32x8xf32> to vector<16x1xf32>
    %312 = arith.mulf %309, %296 : vector<16x256xf32>
    %313 = arith.mulf %305, %306 : vector<1x256xf32>
    %314 = vector.broadcast %313 : vector<1x256xf32> to vector<16x256xf32>
    %315 = vector.broadcast %310 : vector<16x1xf32> to vector<16x256xf32>
    %316 = arith.mulf %314, %315 : vector<16x256xf32>
    %317 = arith.addf %312, %316 : vector<16x256xf32>
    %318 = vector.broadcast %311 : vector<16x1xf32> to vector<16x256xf32>
    %319 = arith.mulf %318, %317 : vector<16x256xf32>
    %cst_79 = arith.constant dense<0.000000e+00> : vector<256xf32>
    %320 = vector.multi_reduction <add>, %319, %cst_79 [0] : vector<16x256xf32> to vector<256xf32>
    %321 = vector.shape_cast %320 : vector<256xf32> to vector<1x256xf32>
    %322 = arith.mulf %306, %140 : vector<1x256xf32>
    %323 = arith.addf %321, %322 : vector<1x256xf32>
    %324 = vector.extract_strided_slice %153 {offsets = [7, 0], sizes = [1, 256], strides = [1, 1]} : vector<8x256xf32> to vector<1x256xf32>
    %325 = arith.mulf %323, %324 : vector<1x256xf32>
    %c0_80 = arith.constant 0 : index
    %c0_81 = arith.constant 0 : index
    %326 = vector.load %arg23[%c0_80, %c0_81] : memref<16x256xf32, #tpu.memory_space<vmem>>, vector<16x256xf32>
    tpu.vector_store %arg23[%c0_80, %c0_81], %317 {strides = array<i32>} : memref<16x256xf32, #tpu.memory_space<vmem>>, vector<16x256xf32>,
    %327 = tpu.concatenate %178, %199, %220, %241, %262, %283, %304, %325 in 0 : vector<1x256xf32>, vector<1x256xf32>, vector<1x256xf32>, vector<1x256xf32>, vector<1x256xf32>, vector<1x256xf32>, vector<1x256xf32>, vector<1x256xf32> -> vector<8x256xf32>
    %328 = arith.index_cast %147 : i32 to index
    %c0_82 = arith.constant 0 : index
    %329 = vector.load %arg17[%328, %c0_82] : memref<16x256xf32, #tpu.memory_space<vmem>>, vector<8x256xf32>
    tpu.vector_store %arg17[%328, %c0_82], %327 {strides = array<i32>} : memref<16x256xf32, #tpu.memory_space<vmem>>, vector<8x256xf32>,
    %c1_i32_83 = arith.constant 1 : i32
    %c8_i32_84 = arith.constant 8 : i32
    %330 = arith.muli %c1_i32_83, %c8_i32_84 : i32
    %331 = tpu.assume_multiple %330, 8 : i32
    %332 = arith.index_cast %331 : i32 to index
    %c0_85 = arith.constant 0 : index
    %333 = vector.load %arg18[%332, %c0_85] : memref<16x256xf32, #tpu.memory_space<vmem>>, vector<8x256xf32>
    %334 = arith.index_cast %331 : i32 to index
    %c0_86 = arith.constant 0 : index
    %335 = vector.load %arg17[%334, %c0_86] : memref<16x256xf32, #tpu.memory_space<vmem>>, vector<8x256xf32>
    %336 = arith.index_cast %331 : i32 to index
    %c0_87 = arith.constant 0 : index
    %337 = vector.load %arg19[%336, %c0_87] : memref<16x256xf32, #tpu.memory_space<vmem>>, vector<8x256xf32>
    %338 = arith.index_cast %331 : i32 to index
    %c0_88 = arith.constant 0 : index
    %339 = vector.load %arg20[%338, %c0_88] : memref<16x32xf32, #tpu.memory_space<vmem>>, vector<8x32xf32>
    %cst_89 = arith.constant dense<0.000000e+00> : vector<32x8xf32>
    %340 = tpu.matmul %145, %339, %cst_89 {dimension_numbers = #tpu.dot_dimension_numbers<[1], [1], [0], [0], [0, 0, 1, 0], [], []>} : vector<32x32xf32>, vector<8x32xf32>, vector<32x8xf32> -> vector<32x8xf32>
    %c0_90 = arith.constant 0 : index
    %c0_91 = arith.constant 0 : index
    %341 = vector.load %arg23[%c0_90, %c0_91] : memref<16x256xf32, #tpu.memory_space<vmem>>, vector<16x256xf32>
    %342 = vector.extract_strided_slice %333 {offsets = [0, 0], sizes = [1, 256], strides = [1, 1]} : vector<8x256xf32> to vector<1x256xf32>
    %343 = vector.extract_strided_slice %335 {offsets = [0, 0], sizes = [1, 256], strides = [1, 1]} : vector<8x256xf32> to vector<1x256xf32>
    %344 = vector.broadcast %342 : vector<1x256xf32> to vector<16x256xf32>
    %345 = arith.mulf %344, %139 : vector<16x256xf32>
    %346 = math.exp %345 : vector<16x256xf32>
    %347 = vector.extract_strided_slice %340 {offsets = [0, 0], sizes = [16, 1], strides = [1, 1]} : vector<32x8xf32> to vector<16x1xf32>
    %348 = vector.extract_strided_slice %340 {offsets = [16, 0], sizes = [16, 1], strides = [1, 1]} : vector<32x8xf32> to vector<16x1xf32>
    %349 = arith.mulf %346, %341 : vector<16x256xf32>
    %350 = arith.mulf %342, %343 : vector<1x256xf32>
    %351 = vector.broadcast %350 : vector<1x256xf32> to vector<16x256xf32>
    %352 = vector.broadcast %347 : vector<16x1xf32> to vector<16x256xf32>
    %353 = arith.mulf %351, %352 : vector<16x256xf32>
    %354 = arith.addf %349, %353 : vector<16x256xf32>
    %355 = vector.broadcast %348 : vector<16x1xf32> to vector<16x256xf32>
    %356 = arith.mulf %355, %354 : vector<16x256xf32>
    %cst_92 = arith.constant dense<0.000000e+00> : vector<256xf32>
    %357 = vector.multi_reduction <add>, %356, %cst_92 [0] : vector<16x256xf32> to vector<256xf32>
    %358 = vector.shape_cast %357 : vector<256xf32> to vector<1x256xf32>
    %359 = arith.mulf %343, %140 : vector<1x256xf32>
    %360 = arith.addf %358, %359 : vector<1x256xf32>
    %361 = vector.extract_strided_slice %337 {offsets = [0, 0], sizes = [1, 256], strides = [1, 1]} : vector<8x256xf32> to vector<1x256xf32>
    %362 = arith.mulf %360, %361 : vector<1x256xf32>
    %363 = vector.extract_strided_slice %333 {offsets = [1, 0], sizes = [1, 256], strides = [1, 1]} : vector<8x256xf32> to vector<1x256xf32>
    %364 = vector.extract_strided_slice %335 {offsets = [1, 0], sizes = [1, 256], strides = [1, 1]} : vector<8x256xf32> to vector<1x256xf32>
    %365 = vector.broadcast %363 : vector<1x256xf32> to vector<16x256xf32>
    %366 = arith.mulf %365, %139 : vector<16x256xf32>
    %367 = math.exp %366 : vector<16x256xf32>
    %368 = vector.extract_strided_slice %340 {offsets = [0, 1], sizes = [16, 1], strides = [1, 1]} : vector<32x8xf32> to vector<16x1xf32>
    %369 = vector.extract_strided_slice %340 {offsets = [16, 1], sizes = [16, 1], strides = [1, 1]} : vector<32x8xf32> to vector<16x1xf32>
    %370 = arith.mulf %367, %354 : vector<16x256xf32>
    %371 = arith.mulf %363, %364 : vector<1x256xf32>
    %372 = vector.broadcast %371 : vector<1x256xf32> to vector<16x256xf32>
    %373 = vector.broadcast %368 : vector<16x1xf32> to vector<16x256xf32>
    %374 = arith.mulf %372, %373 : vector<16x256xf32>
    %375 = arith.addf %370, %374 : vector<16x256xf32>
    %376 = vector.broadcast %369 : vector<16x1xf32> to vector<16x256xf32>
    %377 = arith.mulf %376, %375 : vector<16x256xf32>
    %cst_93 = arith.constant dense<0.000000e+00> : vector<256xf32>
    %378 = vector.multi_reduction <add>, %377, %cst_93 [0] : vector<16x256xf32> to vector<256xf32>
    %379 = vector.shape_cast %378 : vector<256xf32> to vector<1x256xf32>
    %380 = arith.mulf %364, %140 : vector<1x256xf32>
    %381 = arith.addf %379, %380 : vector<1x256xf32>
    %382 = vector.extract_strided_slice %337 {offsets = [1, 0], sizes = [1, 256], strides = [1, 1]} : vector<8x256xf32> to vector<1x256xf32>
    %383 = arith.mulf %381, %382 : vector<1x256xf32>
    %384 = vector.extract_strided_slice %333 {offsets = [2, 0], sizes = [1, 256], strides = [1, 1]} : vector<8x256xf32> to vector<1x256xf32>
    %385 = vector.extract_strided_slice %335 {offsets = [2, 0], sizes = [1, 256], strides = [1, 1]} : vector<8x256xf32> to vector<1x256xf32>
    %386 = vector.broadcast %384 : vector<1x256xf32> to vector<16x256xf32>
    %387 = arith.mulf %386, %139 : vector<16x256xf32>
    %388 = math.exp %387 : vector<16x256xf32>
    %389 = vector.extract_strided_slice %340 {offsets = [0, 2], sizes = [16, 1], strides = [1, 1]} : vector<32x8xf32> to vector<16x1xf32>
    %390 = vector.extract_strided_slice %340 {offsets = [16, 2], sizes = [16, 1], strides = [1, 1]} : vector<32x8xf32> to vector<16x1xf32>
    %391 = arith.mulf %388, %375 : vector<16x256xf32>
    %392 = arith.mulf %384, %385 : vector<1x256xf32>
    %393 = vector.broadcast %392 : vector<1x256xf32> to vector<16x256xf32>
    %394 = vector.broadcast %389 : vector<16x1xf32> to vector<16x256xf32>
    %395 = arith.mulf %393, %394 : vector<16x256xf32>
    %396 = arith.addf %391, %395 : vector<16x256xf32>
    %397 = vector.broadcast %390 : vector<16x1xf32> to vector<16x256xf32>
    %398 = arith.mulf %397, %396 : vector<16x256xf32>
    %cst_94 = arith.constant dense<0.000000e+00> : vector<256xf32>
    %399 = vector.multi_reduction <add>, %398, %cst_94 [0] : vector<16x256xf32> to vector<256xf32>
    %400 = vector.shape_cast %399 : vector<256xf32> to vector<1x256xf32>
    %401 = arith.mulf %385, %140 : vector<1x256xf32>
    %402 = arith.addf %400, %401 : vector<1x256xf32>
    %403 = vector.extract_strided_slice %337 {offsets = [2, 0], sizes = [1, 256], strides = [1, 1]} : vector<8x256xf32> to vector<1x256xf32>
    %404 = arith.mulf %402, %403 : vector<1x256xf32>
    %405 = vector.extract_strided_slice %333 {offsets = [3, 0], sizes = [1, 256], strides = [1, 1]} : vector<8x256xf32> to vector<1x256xf32>
    %406 = vector.extract_strided_slice %335 {offsets = [3, 0], sizes = [1, 256], strides = [1, 1]} : vector<8x256xf32> to vector<1x256xf32>
    %407 = vector.broadcast %405 : vector<1x256xf32> to vector<16x256xf32>
    %408 = arith.mulf %407, %139 : vector<16x256xf32>
    %409 = math.exp %408 : vector<16x256xf32>
    %410 = vector.extract_strided_slice %340 {offsets = [0, 3], sizes = [16, 1], strides = [1, 1]} : vector<32x8xf32> to vector<16x1xf32>
    %411 = vector.extract_strided_slice %340 {offsets = [16, 3], sizes = [16, 1], strides = [1, 1]} : vector<32x8xf32> to vector<16x1xf32>
    %412 = arith.mulf %409, %396 : vector<16x256xf32>
    %413 = arith.mulf %405, %406 : vector<1x256xf32>
    %414 = vector.broadcast %413 : vector<1x256xf32> to vector<16x256xf32>
    %415 = vector.broadcast %410 : vector<16x1xf32> to vector<16x256xf32>
    %416 = arith.mulf %414, %415 : vector<16x256xf32>
    %417 = arith.addf %412, %416 : vector<16x256xf32>
    %418 = vector.broadcast %411 : vector<16x1xf32> to vector<16x256xf32>
    %419 = arith.mulf %418, %417 : vector<16x256xf32>
    %cst_95 = arith.constant dense<0.000000e+00> : vector<256xf32>
    %420 = vector.multi_reduction <add>, %419, %cst_95 [0] : vector<16x256xf32> to vector<256xf32>
    %421 = vector.shape_cast %420 : vector<256xf32> to vector<1x256xf32>
    %422 = arith.mulf %406, %140 : vector<1x256xf32>
    %423 = arith.addf %421, %422 : vector<1x256xf32>
    %424 = vector.extract_strided_slice %337 {offsets = [3, 0], sizes = [1, 256], strides = [1, 1]} : vector<8x256xf32> to vector<1x256xf32>
    %425 = arith.mulf %423, %424 : vector<1x256xf32>
    %426 = vector.extract_strided_slice %333 {offsets = [4, 0], sizes = [1, 256], strides = [1, 1]} : vector<8x256xf32> to vector<1x256xf32>
    %427 = vector.extract_strided_slice %335 {offsets = [4, 0], sizes = [1, 256], strides = [1, 1]} : vector<8x256xf32> to vector<1x256xf32>
    %428 = vector.broadcast %426 : vector<1x256xf32> to vector<16x256xf32>
    %429 = arith.mulf %428, %139 : vector<16x256xf32>
    %430 = math.exp %429 : vector<16x256xf32>
    %431 = vector.extract_strided_slice %340 {offsets = [0, 4], sizes = [16, 1], strides = [1, 1]} : vector<32x8xf32> to vector<16x1xf32>
    %432 = vector.extract_strided_slice %340 {offsets = [16, 4], sizes = [16, 1], strides = [1, 1]} : vector<32x8xf32> to vector<16x1xf32>
    %433 = arith.mulf %430, %417 : vector<16x256xf32>
    %434 = arith.mulf %426, %427 : vector<1x256xf32>
    %435 = vector.broadcast %434 : vector<1x256xf32> to vector<16x256xf32>
    %436 = vector.broadcast %431 : vector<16x1xf32> to vector<16x256xf32>
    %437 = arith.mulf %435, %436 : vector<16x256xf32>
    %438 = arith.addf %433, %437 : vector<16x256xf32>
    %439 = vector.broadcast %432 : vector<16x1xf32> to vector<16x256xf32>
    %440 = arith.mulf %439, %438 : vector<16x256xf32>
    %cst_96 = arith.constant dense<0.000000e+00> : vector<256xf32>
    %441 = vector.multi_reduction <add>, %440, %cst_96 [0] : vector<16x256xf32> to vector<256xf32>
    %442 = vector.shape_cast %441 : vector<256xf32> to vector<1x256xf32>
    %443 = arith.mulf %427, %140 : vector<1x256xf32>
    %444 = arith.addf %442, %443 : vector<1x256xf32>
    %445 = vector.extract_strided_slice %337 {offsets = [4, 0], sizes = [1, 256], strides = [1, 1]} : vector<8x256xf32> to vector<1x256xf32>
    %446 = arith.mulf %444, %445 : vector<1x256xf32>
    %447 = vector.extract_strided_slice %333 {offsets = [5, 0], sizes = [1, 256], strides = [1, 1]} : vector<8x256xf32> to vector<1x256xf32>
    %448 = vector.extract_strided_slice %335 {offsets = [5, 0], sizes = [1, 256], strides = [1, 1]} : vector<8x256xf32> to vector<1x256xf32>
    %449 = vector.broadcast %447 : vector<1x256xf32> to vector<16x256xf32>
    %450 = arith.mulf %449, %139 : vector<16x256xf32>
    %451 = math.exp %450 : vector<16x256xf32>
    %452 = vector.extract_strided_slice %340 {offsets = [0, 5], sizes = [16, 1], strides = [1, 1]} : vector<32x8xf32> to vector<16x1xf32>
    %453 = vector.extract_strided_slice %340 {offsets = [16, 5], sizes = [16, 1], strides = [1, 1]} : vector<32x8xf32> to vector<16x1xf32>
    %454 = arith.mulf %451, %438 : vector<16x256xf32>
    %455 = arith.mulf %447, %448 : vector<1x256xf32>
    %456 = vector.broadcast %455 : vector<1x256xf32> to vector<16x256xf32>
    %457 = vector.broadcast %452 : vector<16x1xf32> to vector<16x256xf32>
    %458 = arith.mulf %456, %457 : vector<16x256xf32>
    %459 = arith.addf %454, %458 : vector<16x256xf32>
    %460 = vector.broadcast %453 : vector<16x1xf32> to vector<16x256xf32>
    %461 = arith.mulf %460, %459 : vector<16x256xf32>
    %cst_97 = arith.constant dense<0.000000e+00> : vector<256xf32>
    %462 = vector.multi_reduction <add>, %461, %cst_97 [0] : vector<16x256xf32> to vector<256xf32>
    %463 = vector.shape_cast %462 : vector<256xf32> to vector<1x256xf32>
    %464 = arith.mulf %448, %140 : vector<1x256xf32>
    %465 = arith.addf %463, %464 : vector<1x256xf32>
    %466 = vector.extract_strided_slice %337 {offsets = [5, 0], sizes = [1, 256], strides = [1, 1]} : vector<8x256xf32> to vector<1x256xf32>
    %467 = arith.mulf %465, %466 : vector<1x256xf32>
    %468 = vector.extract_strided_slice %333 {offsets = [6, 0], sizes = [1, 256], strides = [1, 1]} : vector<8x256xf32> to vector<1x256xf32>
    %469 = vector.extract_strided_slice %335 {offsets = [6, 0], sizes = [1, 256], strides = [1, 1]} : vector<8x256xf32> to vector<1x256xf32>
    %470 = vector.broadcast %468 : vector<1x256xf32> to vector<16x256xf32>
    %471 = arith.mulf %470, %139 : vector<16x256xf32>
    %472 = math.exp %471 : vector<16x256xf32>
    %473 = vector.extract_strided_slice %340 {offsets = [0, 6], sizes = [16, 1], strides = [1, 1]} : vector<32x8xf32> to vector<16x1xf32>
    %474 = vector.extract_strided_slice %340 {offsets = [16, 6], sizes = [16, 1], strides = [1, 1]} : vector<32x8xf32> to vector<16x1xf32>
    %475 = arith.mulf %472, %459 : vector<16x256xf32>
    %476 = arith.mulf %468, %469 : vector<1x256xf32>
    %477 = vector.broadcast %476 : vector<1x256xf32> to vector<16x256xf32>
    %478 = vector.broadcast %473 : vector<16x1xf32> to vector<16x256xf32>
    %479 = arith.mulf %477, %478 : vector<16x256xf32>
    %480 = arith.addf %475, %479 : vector<16x256xf32>
    %481 = vector.broadcast %474 : vector<16x1xf32> to vector<16x256xf32>
    %482 = arith.mulf %481, %480 : vector<16x256xf32>
    %cst_98 = arith.constant dense<0.000000e+00> : vector<256xf32>
    %483 = vector.multi_reduction <add>, %482, %cst_98 [0] : vector<16x256xf32> to vector<256xf32>
    %484 = vector.shape_cast %483 : vector<256xf32> to vector<1x256xf32>
    %485 = arith.mulf %469, %140 : vector<1x256xf32>
    %486 = arith.addf %484, %485 : vector<1x256xf32>
    %487 = vector.extract_strided_slice %337 {offsets = [6, 0], sizes = [1, 256], strides = [1, 1]} : vector<8x256xf32> to vector<1x256xf32>
    %488 = arith.mulf %486, %487 : vector<1x256xf32>
    %489 = vector.extract_strided_slice %333 {offsets = [7, 0], sizes = [1, 256], strides = [1, 1]} : vector<8x256xf32> to vector<1x256xf32>
    %490 = vector.extract_strided_slice %335 {offsets = [7, 0], sizes = [1, 256], strides = [1, 1]} : vector<8x256xf32> to vector<1x256xf32>
    %491 = vector.broadcast %489 : vector<1x256xf32> to vector<16x256xf32>
    %492 = arith.mulf %491, %139 : vector<16x256xf32>
    %493 = math.exp %492 : vector<16x256xf32>
    %494 = vector.extract_strided_slice %340 {offsets = [0, 7], sizes = [16, 1], strides = [1, 1]} : vector<32x8xf32> to vector<16x1xf32>
    %495 = vector.extract_strided_slice %340 {offsets = [16, 7], sizes = [16, 1], strides = [1, 1]} : vector<32x8xf32> to vector<16x1xf32>
    %496 = arith.mulf %493, %480 : vector<16x256xf32>
    %497 = arith.mulf %489, %490 : vector<1x256xf32>
    %498 = vector.broadcast %497 : vector<1x256xf32> to vector<16x256xf32>
    %499 = vector.broadcast %494 : vector<16x1xf32> to vector<16x256xf32>
    %500 = arith.mulf %498, %499 : vector<16x256xf32>
    %501 = arith.addf %496, %500 : vector<16x256xf32>
    %502 = vector.broadcast %495 : vector<16x1xf32> to vector<16x256xf32>
    %503 = arith.mulf %502, %501 : vector<16x256xf32>
    %cst_99 = arith.constant dense<0.000000e+00> : vector<256xf32>
    %504 = vector.multi_reduction <add>, %503, %cst_99 [0] : vector<16x256xf32> to vector<256xf32>
    %505 = vector.shape_cast %504 : vector<256xf32> to vector<1x256xf32>
    %506 = arith.mulf %490, %140 : vector<1x256xf32>
    %507 = arith.addf %505, %506 : vector<1x256xf32>
    %508 = vector.extract_strided_slice %337 {offsets = [7, 0], sizes = [1, 256], strides = [1, 1]} : vector<8x256xf32> to vector<1x256xf32>
    %509 = arith.mulf %507, %508 : vector<1x256xf32>
    %c0_100 = arith.constant 0 : index
    %c0_101 = arith.constant 0 : index
    %510 = vector.load %arg23[%c0_100, %c0_101] : memref<16x256xf32, #tpu.memory_space<vmem>>, vector<16x256xf32>
    tpu.vector_store %arg23[%c0_100, %c0_101], %501 {strides = array<i32>} : memref<16x256xf32, #tpu.memory_space<vmem>>, vector<16x256xf32>,
    %511 = tpu.concatenate %362, %383, %404, %425, %446, %467, %488, %509 in 0 : vector<1x256xf32>, vector<1x256xf32>, vector<1x256xf32>, vector<1x256xf32>, vector<1x256xf32>, vector<1x256xf32>, vector<1x256xf32>, vector<1x256xf32> -> vector<8x256xf32>
    %512 = arith.index_cast %331 : i32 to index
    %c0_102 = arith.constant 0 : index
    %513 = vector.load %arg17[%512, %c0_102] : memref<16x256xf32, #tpu.memory_space<vmem>>, vector<8x256xf32>
    tpu.vector_store %arg17[%512, %c0_102], %511 {strides = array<i32>} : memref<16x256xf32, #tpu.memory_space<vmem>>, vector<8x256xf32>,
    %c2_i32_103 = arith.constant 2 : i32
    %c0_104 = arith.constant 0 : index
    %c0_105 = arith.constant 0 : index
    %514 = vector.load %arg17[%c0_104, %c0_105] : memref<16x256xf32, #tpu.memory_space<vmem>>, vector<16x256xf32>
    %c0_106 = arith.constant 0 : index
    %c0_107 = arith.constant 0 : index
    %515 = vector.load %arg11[%c0_106, %c0_107] : memref<256x128xf32, #tpu.memory_space<vmem>>, vector<256x128xf32>
    %cst_108 = arith.constant dense<0.000000e+00> : vector<16x128xf32>
    %516 = tpu.matmul %514, %515, %cst_108 {dimension_numbers = #tpu.dot_dimension_numbers<[1], [0], [0], [1], [0, 0, 1, 1], [], []>} : vector<16x256xf32>, vector<256x128xf32>, vector<16x128xf32> -> vector<16x128xf32>
    %c0_109 = arith.constant 0 : index
    %c0_110 = arith.constant 0 : index
    %517 = vector.load %arg21[%c0_109, %c0_110] : memref<16x128xf32, #tpu.memory_space<vmem>>, vector<16x128xf32>
    %518 = arith.addf %516, %517 : vector<16x128xf32>
    %cst_111 = arith.constant dense<0.000000e+00> : vector<16xf32>
    %519 = vector.multi_reduction <add>, %518, %cst_111 [1] : vector<16x128xf32> to vector<16xf32>
    %520 = vector.shape_cast %519 : vector<16xf32> to vector<16x1xf32>
    %cst_112 = arith.constant 1.280000e+02 : f32
    %521 = vector.broadcast %cst_112 : f32 to vector<16x1xf32>
    %522 = arith.divf %520, %521 : vector<16x1xf32>
    %523 = vector.broadcast %522 : vector<16x1xf32> to vector<16x128xf32>
    %524 = arith.subf %518, %523 : vector<16x128xf32>
    %525 = arith.mulf %524, %524 : vector<16x128xf32>
    %cst_113 = arith.constant dense<0.000000e+00> : vector<16xf32>
    %526 = vector.multi_reduction <add>, %525, %cst_113 [1] : vector<16x128xf32> to vector<16xf32>
    %527 = vector.shape_cast %526 : vector<16xf32> to vector<16x1xf32>
    %cst_114 = arith.constant 1.280000e+02 : f32
    %528 = vector.broadcast %cst_114 : f32 to vector<16x1xf32>
    %529 = arith.divf %527, %528 : vector<16x1xf32>
    %530 = vector.broadcast %522 : vector<16x1xf32> to vector<16x128xf32>
    %531 = arith.subf %518, %530 : vector<16x128xf32>
    %cst_115 = arith.constant 9.99999974E-6 : f32
    %532 = vector.broadcast %cst_115 : f32 to vector<16x1xf32>
    %533 = arith.addf %529, %532 : vector<16x1xf32>
    %534 = math.rsqrt %533 : vector<16x1xf32>
    %535 = vector.broadcast %534 : vector<16x1xf32> to vector<16x128xf32>
    %536 = arith.mulf %531, %535 : vector<16x128xf32>
    %c0_116 = arith.constant 0 : index
    %c0_117 = arith.constant 0 : index
    %537 = vector.load %arg12[%c0_116, %c0_117] : memref<128x512xf32, #tpu.memory_space<vmem>>, vector<128x512xf32>
    %cst_118 = arith.constant dense<0.000000e+00> : vector<16x512xf32>
    %538 = tpu.matmul %536, %537, %cst_118 {dimension_numbers = #tpu.dot_dimension_numbers<[1], [0], [0], [1], [0, 0, 1, 1], [], []>} : vector<16x128xf32>, vector<128x512xf32>, vector<16x512xf32> -> vector<16x512xf32>
    %c0_119 = arith.constant 0 : index
    %c0_120 = arith.constant 0 : index
    %539 = vector.load %arg13[%c0_119, %c0_120] : memref<1x512xf32, #tpu.memory_space<vmem>>, vector<1x512xf32>
    %540 = vector.broadcast %539 : vector<1x512xf32> to vector<16x512xf32>
    %541 = arith.addf %538, %540 : vector<16x512xf32>
    %cst_121 = arith.constant 0.000000e+00 : f32
    %542 = vector.broadcast %cst_121 : f32 to vector<16x512xf32>
    %543 = arith.maximumf %541, %542 : vector<16x512xf32>
    %c0_122 = arith.constant 0 : index
    %c0_123 = arith.constant 0 : index
    %544 = vector.load %arg14[%c0_122, %c0_123] : memref<512x128xf32, #tpu.memory_space<vmem>>, vector<512x128xf32>
    %cst_124 = arith.constant dense<0.000000e+00> : vector<16x128xf32>
    %545 = tpu.matmul %543, %544, %cst_124 {dimension_numbers = #tpu.dot_dimension_numbers<[1], [0], [0], [1], [0, 0, 1, 1], [], []>} : vector<16x512xf32>, vector<512x128xf32>, vector<16x128xf32> -> vector<16x128xf32>
    %c0_125 = arith.constant 0 : index
    %c0_126 = arith.constant 0 : index
    %546 = vector.load %arg15[%c0_125, %c0_126] : memref<1x128xf32, #tpu.memory_space<vmem>>, vector<1x128xf32>
    %547 = vector.broadcast %546 : vector<1x128xf32> to vector<16x128xf32>
    %548 = arith.addf %545, %547 : vector<16x128xf32>
    %cst_127 = arith.constant 5.000000e-01 : f32
    %549 = vector.broadcast %cst_127 : f32 to vector<16x128xf32>
    %550 = arith.mulf %549, %548 : vector<16x128xf32>
    %551 = arith.addf %550, %4 : vector<16x128xf32>
    %c0_128 = arith.constant 0 : index
    %c0_129 = arith.constant 0 : index
    %c0_130 = arith.constant 0 : index
    %552 = vector.load %arg16[%c0_128, %c0_129, %c0_130] : memref<1x16x128xf32, #tpu.memory_space<vmem>>, vector<1x16x128xf32>
    %553 = vector.shape_cast %552 : vector<1x16x128xf32> to vector<16x128xf32>
    %554 = vector.shape_cast %551 : vector<16x128xf32> to vector<1x16x128xf32>
    tpu.vector_store %arg16[%c0_128, %c0_129, %c0_130], %554 {strides = array<i32>} : memref<1x16x128xf32, #tpu.memory_space<vmem>>, vector<1x16x128xf32>,
    return
  }
  func.func @transform_0(%arg0: i32, %arg1: i32) -> (i32, i32, i32) {
    %c0_i32 = arith.constant 0 : i32
    %c0_i32_0 = arith.constant 0 : i32
    return %arg0, %arg1, %c0_i32 : i32, i32, i32
  }
  func.func @transform_1(%arg0: i32, %arg1: i32) -> (i32, i32) {
    %c0_i32 = arith.constant 0 : i32
    %c0_i32_0 = arith.constant 0 : i32
    %c0_i32_1 = arith.constant 0 : i32
    return %c0_i32, %c0_i32_0 : i32, i32
  }
  func.func @transform_2(%arg0: i32, %arg1: i32) -> (i32, i32) {
    %c0_i32 = arith.constant 0 : i32
    %c0_i32_0 = arith.constant 0 : i32
    %c0_i32_1 = arith.constant 0 : i32
    return %c0_i32, %c0_i32_0 : i32, i32
  }
  func.func @transform_3(%arg0: i32, %arg1: i32) -> (i32, i32) {
    %c0_i32 = arith.constant 0 : i32
    %c0_i32_0 = arith.constant 0 : i32
    %c0_i32_1 = arith.constant 0 : i32
    return %c0_i32, %c0_i32_0 : i32, i32
  }
  func.func @transform_4(%arg0: i32, %arg1: i32) -> (i32, i32) {
    %c0_i32 = arith.constant 0 : i32
    %c0_i32_0 = arith.constant 0 : i32
    %c0_i32_1 = arith.constant 0 : i32
    return %c0_i32, %c0_i32_0 : i32, i32
  }
  func.func @transform_5(%arg0: i32, %arg1: i32) -> (i32, i32) {
    %c0_i32 = arith.constant 0 : i32
    %c0_i32_0 = arith.constant 0 : i32
    %c0_i32_1 = arith.constant 0 : i32
    return %c0_i32, %c0_i32_0 : i32, i32
  }
  func.func @transform_6(%arg0: i32, %arg1: i32) -> (i32, i32) {
    %c0_i32 = arith.constant 0 : i32
    %c0_i32_0 = arith.constant 0 : i32
    %c0_i32_1 = arith.constant 0 : i32
    return %c0_i32, %c0_i32_0 : i32, i32
  }
  func.func @transform_7(%arg0: i32, %arg1: i32) -> (i32, i32) {
    %c0_i32 = arith.constant 0 : i32
    %c0_i32_0 = arith.constant 0 : i32
    %c0_i32_1 = arith.constant 0 : i32
    return %c0_i32, %c0_i32_0 : i32, i32
  }
  func.func @transform_8(%arg0: i32, %arg1: i32) -> (i32, i32) {
    %c0_i32 = arith.constant 0 : i32
    %c0_i32_0 = arith.constant 0 : i32
    %c0_i32_1 = arith.constant 0 : i32
    return %c0_i32, %c0_i32_0 : i32, i32
  }
  func.func @transform_9(%arg0: i32, %arg1: i32) -> (i32, i32) {
    %c0_i32 = arith.constant 0 : i32
    %c0_i32_0 = arith.constant 0 : i32
    %c0_i32_1 = arith.constant 0 : i32
    return %c0_i32, %c0_i32_0 : i32, i32
  }
  func.func @transform_10(%arg0: i32, %arg1: i32) -> (i32, i32) {
    %c0_i32 = arith.constant 0 : i32
    %c0_i32_0 = arith.constant 0 : i32
    %c0_i32_1 = arith.constant 0 : i32
    return %c0_i32, %c0_i32_0 : i32, i32
  }
  func.func @transform_11(%arg0: i32, %arg1: i32) -> (i32, i32) {
    %c0_i32 = arith.constant 0 : i32
    %c0_i32_0 = arith.constant 0 : i32
    %c0_i32_1 = arith.constant 0 : i32
    return %c0_i32, %c0_i32_0 : i32, i32
  }
  func.func @transform_12(%arg0: i32, %arg1: i32) -> (i32, i32) {
    %c0_i32 = arith.constant 0 : i32
    %c0_i32_0 = arith.constant 0 : i32
    %c0_i32_1 = arith.constant 0 : i32
    return %c0_i32, %c0_i32_0 : i32, i32
  }
  func.func @transform_13(%arg0: i32, %arg1: i32) -> (i32, i32) {
    %c0_i32 = arith.constant 0 : i32
    %c0_i32_0 = arith.constant 0 : i32
    %c0_i32_1 = arith.constant 0 : i32
    return %c0_i32, %c0_i32_0 : i32, i32
  }
  func.func @transform_14(%arg0: i32, %arg1: i32) -> (i32, i32, i32) {
    %c0_i32 = arith.constant 0 : i32
    %c0_i32_0 = arith.constant 0 : i32
    return %arg0, %arg1, %c0_i32 : i32, i32, i32
  }
}

</mosaic_0001>

<llo_original>
// kernel: tpu_custom_call.1
$region0: #{tpu_custom_call.1}
  #allocation0 [shape = 'u32[]', space=smem, size = 0x4, offset = 0x4, fixed_abs, tag = 'smem constant byte address 0x4 - core index']
  #allocation1 [shape = 'u32[144,128]{1,0:T(1,128)}', space=vmem, size = 0x12000, scoped, tag = 'internal scratch']
  #allocation2 [shape = 'f32[16,256]{1,0:T(8,128)}', space=vmem, size = 0x4000, scoped, tag = 'scratch operand']
  #allocation3 [shape = 'f32[16,256]{1,0:T(8,128)}', space=vmem, size = 0x4000, scoped, tag = 'scratch operand']
  #allocation4 [shape = 'f32[16,256]{1,0:T(8,128)}', space=vmem, size = 0x4000, scoped, tag = 'scratch operand']
  #allocation5 [shape = 'f32[16,32]{1,0:T(8,128)}', space=vmem, size = 0x2000, scoped, tag = 'scratch operand']
  #allocation6 [shape = 'f32[16,128]{1,0:T(8,128)}', space=vmem, size = 0x2000, scoped, tag = 'scratch operand']
  #allocation7 [shape = 'f32[8,256]{1,0:T(8,128)}', space=vmem, size = 0x2000, scoped, tag = 'scratch operand']
  #allocation8 [shape = 'f32[16,256]{1,0:T(8,128)}', space=vmem, size = 0x4000, scoped, tag = 'scratch operand']
  %s0 = inlined_call_operand.vmem [shape: f32[2,32,128], index: 0, kind: input, shape index: {}]
  %s1 = inlined_call_operand.hbm [shape: f32[128,512], index: 1, kind: input, shape index: {}]
  %s2 = inlined_call_operand.hbm [shape: f32[4,256], index: 2, kind: input, shape index: {}]
  %s3 = inlined_call_operand.hbm [shape: f32[1,256], index: 3, kind: input, shape index: {}]
  %s4 = inlined_call_operand.vmem [shape: f32[256,40], index: 4, kind: input, shape index: {}]
  %s5 = inlined_call_operand.hbm [shape: f32[8,256], index: 5, kind: input, shape index: {}]
  %s6 = inlined_call_operand.hbm [shape: f32[1,256], index: 6, kind: input, shape index: {}]
  %s7 = inlined_call_operand.vmem [shape: f32[16,256], index: 7, kind: input, shape index: {}]
  %s8 = inlined_call_operand.hbm [shape: f32[1,256], index: 8, kind: input, shape index: {}]
  %s9 = inlined_call_operand.vmem [shape: f32[256,128], index: 9, kind: input, shape index: {}]
  %s10 = inlined_call_operand.hbm [shape: f32[128,512], index: 10, kind: input, shape index: {}]
  %s11 = inlined_call_operand.hbm [shape: f32[1,512], index: 11, kind: input, shape index: {}]
  %s12 = inlined_call_operand.hbm [shape: f32[512,128], index: 12, kind: input, shape index: {}]
  %s13 = inlined_call_operand.vmem [shape: f32[1,128], index: 13, kind: input, shape index: {}]
  %s14 = inlined_call_operand.hbm [shape: f32[2,32,128], index: 14, kind: output, shape index: {}]
  %s15 = sld [smem:[#allocation0]]
  $region129: #{tpu_custom_call.1} parent=0
    _
  %s17 = ssub.s32 1, %s15
  %s18 = scalar_select 0, %s17, %s15
  $region1: #{tpu_custom_call.1} parent=0
    #allocation9 [shape = 'u8[262144]{0}', space=vmem, size = 0x40000, scoped, tag = 'input window, operand 1, single buffered']
    #allocation10 [shape = 's32[2]{0}', space=sflag, size = 0x8, scoped, tag = 'scoped memory for tpu_custom_call.1']
    #allocation11 [shape = 's32[2]{0}', space=sflag, size = 0x8, scoped, tag = 'scoped memory for tpu_custom_call.1']
    #allocation12 [shape = 'u8[4096]{0}', space=vmem, size = 0x1000, scoped, tag = 'input window, operand 2, single buffered']
    #allocation13 [shape = 's32[1]{0}', space=sflag, size = 0x4, scoped, tag = 'scoped memory for tpu_custom_call.1']
    #allocation14 [shape = 'u8[1024]{0}', space=vmem, size = 0x400, scoped, tag = 'input window, operand 3, single buffered']
    #allocation15 [shape = 'u8[8192]{0}', space=vmem, size = 0x2000, scoped, tag = 'input window, operand 5, single buffered']
    #allocation16 [shape = 's32[1]{0}', space=sflag, size = 0x4, scoped, tag = 'scoped memory for tpu_custom_call.1']
    #allocation17 [shape = 'u8[1024]{0}', space=vmem, size = 0x400, scoped, tag = 'input window, operand 6, single buffered']
    #allocation18 [shape = 'u8[1024]{0}', space=vmem, size = 0x400, scoped, tag = 'input window, operand 8, single buffered']
    #allocation19 [shape = 's32[1]{0}', space=sflag, size = 0x4, scoped, tag = 'scoped memory for tpu_custom_call.1']
    #allocation20 [shape = 'u8[262144]{0}', space=vmem, size = 0x40000, scoped, tag = 'input window, operand 10, single buffered']
    #allocation21 [shape = 'u8[2048]{0}', space=vmem, size = 0x800, scoped, tag = 'input window, operand 11, single buffered']
    #allocation22 [shape = 's32[1]{0}', space=sflag, size = 0x4, scoped, tag = 'scoped memory for tpu_custom_call.1']
    #allocation23 [shape = 'u8[262144]{0}', space=vmem, size = 0x40000, scoped, tag = 'input window, operand 12, single buffered']
    #allocation24 [shape = 'u8[16384]{0}', space=vmem, size = 0x4000, scoped, tag = 'output window, operand 0']
    %19 = vsyncpa [#allocation10], 0
    %20 = vsyncpa [#allocation13], 0
    %21 = vsyncpa [#allocation16], 0
    %22 = vsyncpa [#allocation19], 0
    %23 = vsyncpa [#allocation22], 0
    %24 = vsyncpa [#allocation11], 0
    %s25 = scalar_lea.sflag [#allocation11], 1
    %26 = vsyncpa %s25, 0
    loop: start=0, step=1, limit=6
    $region2: #{tpu_custom_call.1} parent=1 // loop_pre_header
      _
    $region3: #{tpu_custom_call.1} parent=1 // loop_header
      %s28 = sphi 0, %s32
      %p29 = scmp.ge.s32.totalorder %s28, 6
      %s35 = sphi 0, %s47
      %s36 = sphi 0, %s43
      %s37 = sphi 0, %s35
      %s38 = sphi 0, %s36
      %s39 = sphi 0, %s37
      %s40 = sphi 0, %s38
      %s52 = sphi 0, %s54
      %s55 = sphi 0, %s52
      %s56 = sphi 0, %s55
      %s72 = sphi 0, %s56
      %s76 = sphi 0, %s76
      %s78 = sphi 0, %s76
      %s79 = sphi 0, %s78
      %s93 = sphi 0, %s79
      %s97 = sphi 0, %s97
      %s99 = sphi 0, %s97
      %s100 = sphi 0, %s99
      %s114 = sphi 0, %s100
      %s118 = sphi 0, %s118
      %s120 = sphi 0, %s118
      %s121 = sphi 0, %s120
      %s135 = sphi 0, %s121
      %s139 = sphi 0, %s139
      %s141 = sphi 0, %s139
      %s142 = sphi 0, %s141
      %s156 = sphi 0, %s142
      %s160 = sphi 0, %s160
      %s162 = sphi 0, %s160
      %s163 = sphi 0, %s162
      %s177 = sphi 0, %s163
      %s181 = sphi 0, %s181
      %s183 = sphi 0, %s181
      %s184 = sphi 0, %s183
      %s198 = sphi 0, %s184
      %s202 = sphi 0, %s202
      %s204 = sphi 0, %s202
      %s205 = sphi 0, %s204
      %s219 = sphi 0, %s205
      %s223 = sphi 0, %s223
      %s225 = sphi 0, %s223
      %s226 = sphi 0, %s225
      %s240 = sphi 0, %s226
      %s244 = sphi 0, %s244
      %s246 = sphi 0, %s244
      %s247 = sphi 0, %s246
      %s261 = sphi 0, %s247
      %s265 = sphi 0, %s265
      %s267 = sphi 0, %s265
      %s268 = sphi 0, %s267
      %s282 = sphi 0, %s268
      %s286 = sphi 0, %s286
      %s288 = sphi 0, %s286
      %s289 = sphi 0, %s288
      %s303 = sphi 0, %s289
      %s307 = sphi 0, %s307
      %s309 = sphi 0, %s307
      %s310 = sphi 0, %s309
      %s324 = sphi 0, %s310
      %s328 = sphi 0, %s328
      %s330 = sphi 0, %s328
      %s331 = sphi 0, %s330
      %s345 = sphi 0, %s331
      %s353 = sphi 0, %s355
      %s356 = sphi 0, %s353
      %s357 = sphi 0, %s356
      %s373 = sphi 0, %s357
    $region4: #{tpu_custom_call.1} parent=1 // loop_header_branch
      %31 = sbr.rel (%p29) target = $region8
    $region5: #{tpu_custom_call.1} parent=1 // loop_body
      %s33 = ssub.s32 %s28, 1
      %s34 = ssub.s32 %s28, 2
      %s41 = sadd.s32 1, %s36
      %p42 = scmp.ge.s32.totalorder %s41, 2
      %s43 = scalar_select %p42, 0, %s41
      %s44 = sadd.s32 1, %s35
      %s45 = scalar_select %p42, %s44, %s35
      %p46 = scmp.ge.s32.totalorder %s45, 2
      %s47 = scalar_select %p46, 0, %s45
      %s48 = ssub.s32 %s35, %s47
      %s49 = ssub.s32 %s36, %s43
      %s50 = sor.u32 %s48, %s49
      %p51 = scmp.eq.s32.totalorder %s50, 0
      %s53 = sadd.s32 %s52, 1
      %s54 = scalar_select %p51, %s52, %s53
      %p57 = pneg %p51
      %p58 = scmp.eq.s32.totalorder %s28, 3
      %p59 = por %p57, %p58
      %p60 = scmp.ne.s32.totalorder %s52, %s55
      %p61 = scmp.eq.s32.totalorder %s28, 0
      %p62 = por %p60, %p61
      %p63 = scmp.ne.s32.totalorder %s52, %s55
      %p64 = scmp.eq.s32.totalorder %s33, 3
      %p65 = por %p63, %p64
      %p66 = scmp.ne.s32.totalorder %s55, %s56
      %p67 = scmp.eq.s32.totalorder %s33, 0
      %p68 = por %p66, %p67
      %p69 = scmp.ne.s32.totalorder %s55, %s56
      %p70 = scmp.eq.s32.totalorder %s34, 3
      %p71 = por %p69, %p70
      %p73 = scmp.ne.s32.totalorder %s56, %s72
      %p74 = scmp.eq.s32.totalorder %s34, 0
      %p75 = por %p73, %p74
      %s77 = sadd.s32 %s76, 1
      %p80 = scmp.eq.s32.totalorder %s28, 3
      %p81 = scmp.ne.s32.totalorder %s76, %s78
      %p82 = scmp.eq.s32.totalorder %s28, 0
      %p83 = por %p81, %p82
      %p84 = scmp.ne.s32.totalorder %s76, %s78
      %p85 = scmp.eq.s32.totalorder %s33, 3
      %p86 = por %p84, %p85
      %p87 = scmp.ne.s32.totalorder %s78, %s79
      %p88 = scmp.eq.s32.totalorder %s33, 0
      %p89 = por %p87, %p88
      %p90 = scmp.ne.s32.totalorder %s78, %s79
      %p91 = scmp.eq.s32.totalorder %s34, 3
      %p92 = por %p90, %p91
      %p94 = scmp.ne.s32.totalorder %s79, %s93
      %p95 = scmp.eq.s32.totalorder %s34, 0
      %p96 = por %p94, %p95
      %s98 = sadd.s32 %s97, 1
      %p101 = scmp.eq.s32.totalorder %s28, 3
      %p102 = scmp.ne.s32.totalorder %s97, %s99
      %p103 = scmp.eq.s32.totalorder %s28, 0
      %p104 = por %p102, %p103
      %p105 = scmp.ne.s32.totalorder %s97, %s99
      %p106 = scmp.eq.s32.totalorder %s33, 3
      %p107 = por %p105, %p106
      %p108 = scmp.ne.s32.totalorder %s99, %s100
      %p109 = scmp.eq.s32.totalorder %s33, 0
      %p110 = por %p108, %p109
      %p111 = scmp.ne.s32.totalorder %s99, %s100
      %p112 = scmp.eq.s32.totalorder %s34, 3
      %p113 = por %p111, %p112
      %p115 = scmp.ne.s32.totalorder %s100, %s114
      %p116 = scmp.eq.s32.totalorder %s34, 0
      %p117 = por %p115, %p116
      %s119 = sadd.s32 %s118, 1
      %p122 = scmp.eq.s32.totalorder %s28, 3
      %p123 = scmp.ne.s32.totalorder %s118, %s120
      %p124 = scmp.eq.s32.totalorder %s28, 0
      %p125 = por %p123, %p124
      %p126 = scmp.ne.s32.totalorder %s118, %s120
      %p127 = scmp.eq.s32.totalorder %s33, 3
      %p128 = por %p126, %p127
      %p129 = scmp.ne.s32.totalorder %s120, %s121
      %p130 = scmp.eq.s32.totalorder %s33, 0
      %p131 = por %p129, %p130
      %p132 = scmp.ne.s32.totalorder %s120, %s121
      %p133 = scmp.eq.s32.totalorder %s34, 3
      %p134 = por %p132, %p133
      %p136 = scmp.ne.s32.totalorder %s121, %s135
      %p137 = scmp.eq.s32.totalorder %s34, 0
      %p138 = por %p136, %p137
      %s140 = sadd.s32 %s139, 1
      %p143 = scmp.eq.s32.totalorder %s28, 3
      %p144 = scmp.ne.s32.totalorder %s139, %s141
      %p145 = scmp.eq.s32.totalorder %s28, 0
      %p146 = por %p144, %p145
      %p147 = scmp.ne.s32.totalorder %s139, %s141
      %p148 = scmp.eq.s32.totalorder %s33, 3
      %p149 = por %p147, %p148
      %p150 = scmp.ne.s32.totalorder %s141, %s142
      %p151 = scmp.eq.s32.totalorder %s33, 0
      %p152 = por %p150, %p151
      %p153 = scmp.ne.s32.totalorder %s141, %s142
      %p154 = scmp.eq.s32.totalorder %s34, 3
      %p155 = por %p153, %p154
      %p157 = scmp.ne.s32.totalorder %s142, %s156
      %p158 = scmp.eq.s32.totalorder %s34, 0
      %p159 = por %p157, %p158
      %s161 = sadd.s32 %s160, 1
      %p164 = scmp.eq.s32.totalorder %s28, 3
      %p165 = scmp.ne.s32.totalorder %s160, %s162
      %p166 = scmp.eq.s32.totalorder %s28, 0
      %p167 = por %p165, %p166
      %p168 = scmp.ne.s32.totalorder %s160, %s162
      %p169 = scmp.eq.s32.totalorder %s33, 3
      %p170 = por %p168, %p169
      %p171 = scmp.ne.s32.totalorder %s162, %s163
      %p172 = scmp.eq.s32.totalorder %s33, 0
      %p173 = por %p171, %p172
      %p174 = scmp.ne.s32.totalorder %s162, %s163
      %p175 = scmp.eq.s32.totalorder %s34, 3
      %p176 = por %p174, %p175
      %p178 = scmp.ne.s32.totalorder %s163, %s177
      %p179 = scmp.eq.s32.totalorder %s34, 0
      %p180 = por %p178, %p179
      %s182 = sadd.s32 %s181, 1
      %p185 = scmp.eq.s32.totalorder %s28, 3
      %p186 = scmp.ne.s32.totalorder %s181, %s183
      %p187 = scmp.eq.s32.totalorder %s28, 0
      %p188 = por %p186, %p187
      %p189 = scmp.ne.s32.totalorder %s181, %s183
      %p190 = scmp.eq.s32.totalorder %s33, 3
      %p191 = por %p189, %p190
      %p192 = scmp.ne.s32.totalorder %s183, %s184
      %p193 = scmp.eq.s32.totalorder %s33, 0
      %p194 = por %p192, %p193
      %p195 = scmp.ne.s32.totalorder %s183, %s184
      %p196 = scmp.eq.s32.totalorder %s34, 3
      %p197 = por %p195, %p196
      %p199 = scmp.ne.s32.totalorder %s184, %s198
      %p200 = scmp.eq.s32.totalorder %s34, 0
      %p201 = por %p199, %p200
      %s203 = sadd.s32 %s202, 1
      %p206 = scmp.eq.s32.totalorder %s28, 3
      %p207 = scmp.ne.s32.totalorder %s202, %s204
      %p208 = scmp.eq.s32.totalorder %s28, 0
      %p209 = por %p207, %p208
      %p210 = scmp.ne.s32.totalorder %s202, %s204
      %p211 = scmp.eq.s32.totalorder %s33, 3
      %p212 = por %p210, %p211
      %p213 = scmp.ne.s32.totalorder %s204, %s205
      %p214 = scmp.eq.s32.totalorder %s33, 0
      %p215 = por %p213, %p214
      %p216 = scmp.ne.s32.totalorder %s204, %s205
      %p217 = scmp.eq.s32.totalorder %s34, 3
      %p218 = por %p216, %p217
      %p220 = scmp.ne.s32.totalorder %s205, %s219
      %p221 = scmp.eq.s32.totalorder %s34, 0
      %p222 = por %p220, %p221
      %s224 = sadd.s32 %s223, 1
      %p227 = scmp.eq.s32.totalorder %s28, 3
      %p228 = scmp.ne.s32.totalorder %s223, %s225
      %p229 = scmp.eq.s32.totalorder %s28, 0
      %p230 = por %p228, %p229
      %p231 = scmp.ne.s32.totalorder %s223, %s225
      %p232 = scmp.eq.s32.totalorder %s33, 3
      %p233 = por %p231, %p232
      %p234 = scmp.ne.s32.totalorder %s225, %s226
      %p235 = scmp.eq.s32.totalorder %s33, 0
      %p236 = por %p234, %p235
      %p237 = scmp.ne.s32.totalorder %s225, %s226
      %p238 = scmp.eq.s32.totalorder %s34, 3
      %p239 = por %p237, %p238
      %p241 = scmp.ne.s32.totalorder %s226, %s240
      %p242 = scmp.eq.s32.totalorder %s34, 0
      %p243 = por %p241, %p242
      %s245 = sadd.s32 %s244, 1
      %p248 = scmp.eq.s32.totalorder %s28, 3
      %p249 = scmp.ne.s32.totalorder %s244, %s246
      %p250 = scmp.eq.s32.totalorder %s28, 0
      %p251 = por %p249, %p250
      %p252 = scmp.ne.s32.totalorder %s244, %s246
      %p253 = scmp.eq.s32.totalorder %s33, 3
      %p254 = por %p252, %p253
      %p255 = scmp.ne.s32.totalorder %s246, %s247
      %p256 = scmp.eq.s32.totalorder %s33, 0
      %p257 = por %p255, %p256
      %p258 = scmp.ne.s32.totalorder %s246, %s247
      %p259 = scmp.eq.s32.totalorder %s34, 3
      %p260 = por %p258, %p259
      %p262 = scmp.ne.s32.totalorder %s247, %s261
      %p263 = scmp.eq.s32.totalorder %s34, 0
      %p264 = por %p262, %p263
      %s266 = sadd.s32 %s265, 1
      %p269 = scmp.eq.s32.totalorder %s28, 3
      %p270 = scmp.ne.s32.totalorder %s265, %s267
      %p271 = scmp.eq.s32.totalorder %s28, 0
      %p272 = por %p270, %p271
      %p273 = scmp.ne.s32.totalorder %s265, %s267
      %p274 = scmp.eq.s32.totalorder %s33, 3
      %p275 = por %p273, %p274
      %p276 = scmp.ne.s32.totalorder %s267, %s268
      %p277 = scmp.eq.s32.totalorder %s33, 0
      %p278 = por %p276, %p277
      %p279 = scmp.ne.s32.totalorder %s267, %s268
      %p280 = scmp.eq.s32.totalorder %s34, 3
      %p281 = por %p279, %p280
      %p283 = scmp.ne.s32.totalorder %s268, %s282
      %p284 = scmp.eq.s32.totalorder %s34, 0
      %p285 = por %p283, %p284
      %s287 = sadd.s32 %s286, 1
      %p290 = scmp.eq.s32.totalorder %s28, 3
      %p291 = scmp.ne.s32.totalorder %s286, %s288
      %p292 = scmp.eq.s32.totalorder %s28, 0
      %p293 = por %p291, %p292
      %p294 = scmp.ne.s32.totalorder %s286, %s288
      %p295 = scmp.eq.s32.totalorder %s33, 3
      %p296 = por %p294, %p295
      %p297 = scmp.ne.s32.totalorder %s288, %s289
      %p298 = scmp.eq.s32.totalorder %s33, 0
      %p299 = por %p297, %p298
      %p300 = scmp.ne.s32.totalorder %s288, %s289
      %p301 = scmp.eq.s32.totalorder %s34, 3
      %p302 = por %p300, %p301
      %p304 = scmp.ne.s32.totalorder %s289, %s303
      %p305 = scmp.eq.s32.totalorder %s34, 0
      %p306 = por %p304, %p305
      %s308 = sadd.s32 %s307, 1
      %p311 = scmp.eq.s32.totalorder %s28, 3
      %p312 = scmp.ne.s32.totalorder %s307, %s309
      %p313 = scmp.eq.s32.totalorder %s28, 0
      %p314 = por %p312, %p313
      %p315 = scmp.ne.s32.totalorder %s307, %s309
      %p316 = scmp.eq.s32.totalorder %s33, 3
      %p317 = por %p315, %p316
      %p318 = scmp.ne.s32.totalorder %s309, %s310
      %p319 = scmp.eq.s32.totalorder %s33, 0
      %p320 = por %p318, %p319
      %p321 = scmp.ne.s32.totalorder %s309, %s310
      %p322 = scmp.eq.s32.totalorder %s34, 3
      %p323 = por %p321, %p322
      %p325 = scmp.ne.s32.totalorder %s310, %s324
      %p326 = scmp.eq.s32.totalorder %s34, 0
      %p327 = por %p325, %p326
      %s329 = sadd.s32 %s328, 1
      %p332 = scmp.eq.s32.totalorder %s28, 3
      %p333 = scmp.ne.s32.totalorder %s328, %s330
      %p334 = scmp.eq.s32.totalorder %s28, 0
      %p335 = por %p333, %p334
      %p336 = scmp.ne.s32.totalorder %s328, %s330
      %p337 = scmp.eq.s32.totalorder %s33, 3
      %p338 = por %p336, %p337
      %p339 = scmp.ne.s32.totalorder %s330, %s331
      %p340 = scmp.eq.s32.totalorder %s33, 0
      %p341 = por %p339, %p340
      %p342 = scmp.ne.s32.totalorder %s330, %s331
      %p343 = scmp.eq.s32.totalorder %s34, 3
      %p344 = por %p342, %p343
      %p346 = scmp.ne.s32.totalorder %s331, %s345
      %p347 = scmp.eq.s32.totalorder %s34, 0
      %p348 = por %p346, %p347
      %s349 = ssub.s32 %s35, %s47
      %s350 = ssub.s32 %s36, %s43
      %s351 = sor.u32 %s349, %s350
      %p352 = scmp.eq.s32.totalorder %s351, 0
      %s354 = sadd.s32 %s353, 1
      %s355 = scalar_select %p352, %s353, %s354
      %p358 = pneg %p352
      %p359 = scmp.eq.s32.totalorder %s28, 3
      %p360 = por %p358, %p359
      %p361 = scmp.ne.s32.totalorder %s353, %s356
      %p362 = scmp.eq.s32.totalorder %s28, 0
      %p363 = por %p361, %p362
      %p364 = scmp.ne.s32.totalorder %s353, %s356
      %p365 = scmp.eq.s32.totalorder %s33, 3
      %p366 = por %p364, %p365
      %p367 = scmp.ne.s32.totalorder %s356, %s357
      %p368 = scmp.eq.s32.totalorder %s33, 0
      %p369 = por %p367, %p368
      %p370 = scmp.ne.s32.totalorder %s356, %s357
      %p371 = scmp.eq.s32.totalorder %s34, 3
      %p372 = por %p370, %p371
      %p374 = scmp.ne.s32.totalorder %s357, %s373
      %p375 = scmp.eq.s32.totalorder %s34, 0
      %p376 = por %p374, %p375
      %p377 = scmp.le.s32.totalorder 1, %s28
      %p378 = scmp.lt.s32.totalorder %s28, 5
      %p379 = pnand %p377, %p378
      %p380 = pneg %p379
      // Predicated region
      $region9: #{tpu_custom_call.1} parent=5 // pred_check
        _
      $region10: #{tpu_custom_call.1} parent=5 // pred_check_branch
        %382 = sbr.rel (%p379) target = $region12
      $region11: #{tpu_custom_call.1} parent=5 // pred_region
        %s383 = ssub.s32 %s28, 1
        // Predicated region
        $region13: #{tpu_custom_call.1} parent=11 // pred_check
          %p384 = pneg %p89
        $region14: #{tpu_custom_call.1} parent=11 // pred_check_branch
          %386 = sbr.rel (%p384) target = $region16
        $region15: #{tpu_custom_call.1} parent=11 // pred_region
          %s388 = ssub.s32 8192, 8192
          %389 = vsyncadd [#allocation10], %s388
          %s390 = sshll.u32 [#allocation9], 4
          %s391 = int_to_ptr.vmem [resolvable:$true] %s390
          %396 = dma.hbm_to_vmem [thread:$0]  %s1, 8192, %s391, [#allocation10], 512, 512, 32
        $region16: #{tpu_custom_call.1} parent=11 // pred_fallthru
          _
        // Predicated region
        $region17: #{tpu_custom_call.1} parent=11 // pred_check
          %p397 = pneg %p110
        $region18: #{tpu_custom_call.1} parent=11 // pred_check_branch
          %399 = sbr.rel (%p397) target = $region20
        $region19: #{tpu_custom_call.1} parent=11 // pred_region
          %s401 = ssub.s32 128, 128
          %402 = vsyncadd [#allocation13], %s401
          %s404 = sshll.u32 [#allocation12], 4
          %s405 = int_to_ptr.vmem [resolvable:$true] %s404
          %407 = dma.hbm_to_vmem [thread:$0]  %s2, 128, %s405, [#allocation13]
        $region20: #{tpu_custom_call.1} parent=11 // pred_fallthru
          _
        // Predicated region
        $region21: #{tpu_custom_call.1} parent=11 // pred_check
          %p408 = pneg %p131
        $region22: #{tpu_custom_call.1} parent=11 // pred_check_branch
          %410 = sbr.rel (%p408) target = $region24
        $region23: #{tpu_custom_call.1} parent=11 // pred_region
          %s412 = ssub.s32 32, 32
          %413 = vsyncadd [#allocation13], %s412
          %s415 = sshll.u32 [#allocation14], 4
          %s416 = int_to_ptr.vmem [resolvable:$true] %s415
          %418 = dma.hbm_to_vmem [thread:$0]  %s3, 32, %s416, [#allocation13]
        $region24: #{tpu_custom_call.1} parent=11 // pred_fallthru
          _
        // Predicated region
        $region25: #{tpu_custom_call.1} parent=11 // pred_check
          %p419 = pneg %p152
        $region26: #{tpu_custom_call.1} parent=11 // pred_check_branch
          %421 = sbr.rel (%p419) target = $region28
        $region27: #{tpu_custom_call.1} parent=11 // pred_region
          _
        $region28: #{tpu_custom_call.1} parent=11 // pred_fallthru
          _
        // Predicated region
        $region29: #{tpu_custom_call.1} parent=11 // pred_check
          %p422 = pneg %p173
        $region30: #{tpu_custom_call.1} parent=11 // pred_check_branch
          %424 = sbr.rel (%p422) target = $region32
        $region31: #{tpu_custom_call.1} parent=11 // pred_region
          %s426 = ssub.s32 256, 256
          %427 = vsyncadd [#allocation16], %s426
          %s429 = sshll.u32 [#allocation15], 4
          %s430 = int_to_ptr.vmem [resolvable:$true] %s429
          %432 = dma.hbm_to_vmem [thread:$0]  %s5, 256, %s430, [#allocation16]
        $region32: #{tpu_custom_call.1} parent=11 // pred_fallthru
          _
        // Predicated region
        $region33: #{tpu_custom_call.1} parent=11 // pred_check
          %p433 = pneg %p194
        $region34: #{tpu_custom_call.1} parent=11 // pred_check_branch
          %435 = sbr.rel (%p433) target = $region36
        $region35: #{tpu_custom_call.1} parent=11 // pred_region
          %s437 = ssub.s32 32, 32
          %438 = vsyncadd [#allocation16], %s437
          %s440 = sshll.u32 [#allocation17], 4
          %s441 = int_to_ptr.vmem [resolvable:$true] %s440
          %443 = dma.hbm_to_vmem [thread:$0]  %s6, 32, %s441, [#allocation16]
        $region36: #{tpu_custom_call.1} parent=11 // pred_fallthru
          _
        // Predicated region
        $region37: #{tpu_custom_call.1} parent=11 // pred_check
          %p444 = pneg %p215
        $region38: #{tpu_custom_call.1} parent=11 // pred_check_branch
          %446 = sbr.rel (%p444) target = $region40
        $region39: #{tpu_custom_call.1} parent=11 // pred_region
          _
        $region40: #{tpu_custom_call.1} parent=11 // pred_fallthru
          _
        // Predicated region
        $region41: #{tpu_custom_call.1} parent=11 // pred_check
          %p447 = pneg %p236
        $region42: #{tpu_custom_call.1} parent=11 // pred_check_branch
          %449 = sbr.rel (%p447) target = $region44
        $region43: #{tpu_custom_call.1} parent=11 // pred_region
          %s451 = ssub.s32 32, 32
          %452 = vsyncadd [#allocation19], %s451
          %s454 = sshll.u32 [#allocation18], 4
          %s455 = int_to_ptr.vmem [resolvable:$true] %s454
          %457 = dma.hbm_to_vmem [thread:$0]  %s8, 32, %s455, [#allocation19]
        $region44: #{tpu_custom_call.1} parent=11 // pred_fallthru
          _
        // Predicated region
        $region45: #{tpu_custom_call.1} parent=11 // pred_check
          %p458 = pneg %p257
        $region46: #{tpu_custom_call.1} parent=11 // pred_check_branch
          %460 = sbr.rel (%p458) target = $region48
        $region47: #{tpu_custom_call.1} parent=11 // pred_region
          _
        $region48: #{tpu_custom_call.1} parent=11 // pred_fallthru
          _
        // Predicated region
        $region49: #{tpu_custom_call.1} parent=11 // pred_check
          %p461 = pneg %p278
        $region50: #{tpu_custom_call.1} parent=11 // pred_check_branch
          %463 = sbr.rel (%p461) target = $region52
        $region51: #{tpu_custom_call.1} parent=11 // pred_region
          %s465 = ssub.s32 8192, 8192
          %466 = vsyncadd [#allocation19], %s465
          %s467 = sshll.u32 [#allocation20], 4
          %s468 = int_to_ptr.vmem [resolvable:$true] %s467
          %473 = dma.hbm_to_vmem [thread:$0]  %s10, 8192, %s468, [#allocation19], 512, 512, 32
        $region52: #{tpu_custom_call.1} parent=11 // pred_fallthru
          _
        // Predicated region
        $region53: #{tpu_custom_call.1} parent=11 // pred_check
          %p474 = pneg %p299
        $region54: #{tpu_custom_call.1} parent=11 // pred_check_branch
          %476 = sbr.rel (%p474) target = $region56
        $region55: #{tpu_custom_call.1} parent=11 // pred_region
          %s478 = ssub.s32 64, 64
          %479 = vsyncadd [#allocation22], %s478
          %s481 = sshll.u32 [#allocation21], 4
          %s482 = int_to_ptr.vmem [resolvable:$true] %s481
          %484 = dma.hbm_to_vmem [thread:$0]  %s11, 64, %s482, [#allocation22]
        $region56: #{tpu_custom_call.1} parent=11 // pred_fallthru
          _
        // Predicated region
        $region57: #{tpu_custom_call.1} parent=11 // pred_check
          %p485 = pneg %p320
        $region58: #{tpu_custom_call.1} parent=11 // pred_check_branch
          %487 = sbr.rel (%p485) target = $region60
        $region59: #{tpu_custom_call.1} parent=11 // pred_region
          %s489 = ssub.s32 8192, 8192
          %490 = vsyncadd [#allocation22], %s489
          %s491 = sshll.u32 [#allocation23], 4
          %s492 = int_to_ptr.vmem [resolvable:$true] %s491
          %497 = dma.hbm_to_vmem [thread:$0]  %s12, 8192, %s492, [#allocation22], 128, 128, 8
        $region60: #{tpu_custom_call.1} parent=11 // pred_fallthru
          _
        // Predicated region
        $region61: #{tpu_custom_call.1} parent=11 // pred_check
          %p498 = pneg %p341
        $region62: #{tpu_custom_call.1} parent=11 // pred_check_branch
          %500 = sbr.rel (%p498) target = $region64
        $region63: #{tpu_custom_call.1} parent=11 // pred_region
          _
        $region64: #{tpu_custom_call.1} parent=11 // pred_fallthru
          _
      $region12: #{tpu_custom_call.1} parent=5 // pred_fallthru
        _
      %p501 = scmp.lt.s32.totalorder %s28, 4
      // Predicated region
      $region65: #{tpu_custom_call.1} parent=5 // pred_check
        %p502 = pneg %p501
      $region66: #{tpu_custom_call.1} parent=5 // pred_check_branch
        %504 = sbr.rel (%p502) target = $region68
      $region67: #{tpu_custom_call.1} parent=5 // pred_region
        // Predicated region
        $region69: #{tpu_custom_call.1} parent=67 // pred_check
          %p505 = pneg %p62
        $region70: #{tpu_custom_call.1} parent=67 // pred_check_branch
          %507 = sbr.rel (%p505) target = $region72
        $region71: #{tpu_custom_call.1} parent=67 // pred_region
          %s508 = smul.u32 2, %s36
          %p509 = scmp.lt.s32.totalorder %s35, 1
          %s510 = scalar_select %p509, %s35, 1
          %p511 = scmp.lt.s32.totalorder %s508, 3
          %s512 = scalar_select %p511, %s508, 3
          %s513 = smul.addr %s510, 4
          %s514 = sadd.s32 %s512, %s513
          %s515 = smul.addr %s514, 8
          %s516 = scalar_lea.vmem %s0, %s515
          %s517 = smul.u32 2, %s36
        $region72: #{tpu_custom_call.1} parent=67 // pred_fallthru
          _
      $region68: #{tpu_custom_call.1} parent=5 // pred_fallthru
        _
      %p518 = scmp.le.s32.totalorder 1, %s28
      %p519 = scmp.lt.s32.totalorder %s28, 5
      %p520 = pnand %p518, %p519
      %p521 = pneg %p520
      // Predicated region
      $region73: #{tpu_custom_call.1} parent=5 // pred_check
        _
      $region74: #{tpu_custom_call.1} parent=5 // pred_check_branch
        %523 = sbr.rel (%p520) target = $region76
      $region75: #{tpu_custom_call.1} parent=5 // pred_region
        %s524 = ssub.s32 %s28, 1
        // Predicated region
        $region77: #{tpu_custom_call.1} parent=75 // pred_check
          %p525 = pneg %p89
        $region78: #{tpu_custom_call.1} parent=75 // pred_check_branch
          %527 = sbr.rel (%p525) target = $region80
        $region79: #{tpu_custom_call.1} parent=75 // pred_region
          %528 = dma.done [#allocation10], 8192
        $region80: #{tpu_custom_call.1} parent=75 // pred_fallthru
          _
        // Predicated region
        $region81: #{tpu_custom_call.1} parent=75 // pred_check
          %p529 = pneg %p110
        $region82: #{tpu_custom_call.1} parent=75 // pred_check_branch
          %531 = sbr.rel (%p529) target = $region84
        $region83: #{tpu_custom_call.1} parent=75 // pred_region
          %532 = dma.done [#allocation13], 128
        $region84: #{tpu_custom_call.1} parent=75 // pred_fallthru
          _
        // Predicated region
        $region85: #{tpu_custom_call.1} parent=75 // pred_check
          %p533 = pneg %p131
        $region86: #{tpu_custom_call.1} parent=75 // pred_check_branch
          %535 = sbr.rel (%p533) target = $region88
        $region87: #{tpu_custom_call.1} parent=75 // pred_region
          %536 = dma.done [#allocation13], 32
        $region88: #{tpu_custom_call.1} parent=75 // pred_fallthru
          _
        // Predicated region
        $region89: #{tpu_custom_call.1} parent=75 // pred_check
          %p537 = pneg %p173
        $region90: #{tpu_custom_call.1} parent=75 // pred_check_branch
          %539 = sbr.rel (%p537) target = $region92
        $region91: #{tpu_custom_call.1} parent=75 // pred_region
          %540 = dma.done [#allocation16], 256
        $region92: #{tpu_custom_call.1} parent=75 // pred_fallthru
          _
        // Predicated region
        $region93: #{tpu_custom_call.1} parent=75 // pred_check
          %p541 = pneg %p194
        $region94: #{tpu_custom_call.1} parent=75 // pred_check_branch
          %543 = sbr.rel (%p541) target = $region96
        $region95: #{tpu_custom_call.1} parent=75 // pred_region
          %544 = dma.done [#allocation16], 32
        $region96: #{tpu_custom_call.1} parent=75 // pred_fallthru
          _
        // Predicated region
        $region97: #{tpu_custom_call.1} parent=75 // pred_check
          %p545 = pneg %p236
        $region98: #{tpu_custom_call.1} parent=75 // pred_check_branch
          %547 = sbr.rel (%p545) target = $region100
        $region99: #{tpu_custom_call.1} parent=75 // pred_region
          %548 = dma.done [#allocation19], 32
        $region100: #{tpu_custom_call.1} parent=75 // pred_fallthru
          _
        // Predicated region
        $region101: #{tpu_custom_call.1} parent=75 // pred_check
          %p549 = pneg %p278
        $region102: #{tpu_custom_call.1} parent=75 // pred_check_branch
          %551 = sbr.rel (%p549) target = $region104
        $region103: #{tpu_custom_call.1} parent=75 // pred_region
          %552 = dma.done [#allocation19], 8192
        $region104: #{tpu_custom_call.1} parent=75 // pred_fallthru
          _
        // Predicated region
        $region105: #{tpu_custom_call.1} parent=75 // pred_check
          %p553 = pneg %p299
        $region106: #{tpu_custom_call.1} parent=75 // pred_check_branch
          %555 = sbr.rel (%p553) target = $region108
        $region107: #{tpu_custom_call.1} parent=75 // pred_region
          %556 = dma.done [#allocation22], 64
        $region108: #{tpu_custom_call.1} parent=75 // pred_fallthru
          _
        // Predicated region
        $region109: #{tpu_custom_call.1} parent=75 // pred_check
          %p557 = pneg %p320
        $region110: #{tpu_custom_call.1} parent=75 // pred_check_branch
          %559 = sbr.rel (%p557) target = $region112
        $region111: #{tpu_custom_call.1} parent=75 // pred_region
          %560 = dma.done [#allocation22], 8192
        $region112: #{tpu_custom_call.1} parent=75 // pred_fallthru
          _
        %s561 = smul.u32 2, %s38
        %p562 = scmp.lt.s32.totalorder %s37, 1
        %s563 = scalar_select %p562, %s37, 1
        %p564 = scmp.lt.s32.totalorder %s561, 3
        %s565 = scalar_select %p564, %s561, 3
        %s566 = smul.addr %s563, 4
        %s567 = sadd.s32 %s565, %s566
        %s568 = smul.addr %s567, 8
        %s569 = scalar_lea.vmem %s0, %s568
        %p570 = pneg %p68
        %p571 = pneg %p65
        %p572 = pneg %p89
        %p573 = pneg %p86
        %p574 = pneg %p110
        %p575 = pneg %p107
        %p576 = pneg %p131
        %p577 = pneg %p128
        %p578 = pneg %p152
        %p579 = pneg %p149
        %p580 = pneg %p173
        %p581 = pneg %p170
        %p582 = pneg %p194
        %p583 = pneg %p191
        %p584 = pneg %p215
        %p585 = pneg %p212
        %p586 = pneg %p236
        %p587 = pneg %p233
        %p588 = pneg %p257
        %p589 = pneg %p254
        %p590 = pneg %p278
        %p591 = pneg %p275
        %p592 = pneg %p299
        %p593 = pneg %p296
        %p594 = pneg %p320
        %p595 = pneg %p317
        %p596 = pneg %p341
        %p597 = pneg %p338
        %p598 = pneg %p369
        %p599 = pneg %p366
        %s600 = sand.u32 %s356, 1
        %s601 = scalar_lea.sflag [#allocation11], %s600
        %s602 = sand.u32 %s356, 1
        %s603 = smul.addr %s602, 16
        %s604 = scalar_lea.vmem [#allocation24], %s603
        %s605 = smul.u32 2, %s38
        %p606 = scmp.lt.s32.totalorder %s37, 1
        %s607 = scalar_select %p606, %s37, 1
        %p608 = scmp.lt.s32.totalorder %s605, 3
        %s609 = scalar_select %p608, %s605, 3
        %s610 = smul.addr %s607, 4
        %s611 = sadd.s32 %s609, %s610
        %s612 = smul.addr %s611, 8
        %s613 = scalar_lea.vmem %s0, %s612
        %s614 = smul.u32 2, %s38
        %s615 = smul.u32 2, %s38
        %p616 = scmp.eq.s32.totalorder %s38, 0
        // Predicated region
        $region113: #{tpu_custom_call.1} parent=75 // pred_check
          %p617 = pneg %p616
        $region114: #{tpu_custom_call.1} parent=75 // pred_check_branch
          %619 = sbr.rel (%p617) target = $region116
        $region115: #{tpu_custom_call.1} parent=75 // pred_region
          %620 = vst [vmem:[#allocation7] sm:$0xff] 0.0
          %621 = vst [vmem:[#allocation7 + $0x8] sm:$0xff] 0.0
          %622 = vst [vmem:[#allocation8] sm:$0xff] 0.0
          %623 = vst [vmem:[#allocation8 + $0x8] sm:$0xff] 0.0
          %624 = vst [vmem:[#allocation8 + $0x10] sm:$0xff] 0.0
          %625 = vst [vmem:[#allocation8 + $0x18] sm:$0xff] 0.0
        $region116: #{tpu_custom_call.1} parent=75 // pred_fallthru
          _
        %v626 = vld [vmem:[%s613] sm:$0xff]
        %v627 = vld [vmem:[%s613 + $0x8] sm:$0xff]
        %628 = vadd.xlane.f32.xlu0 %v626
        %v629 = vpop.xlane.xlu0 %628
        %630 = vadd.xlane.f32.xlu0 %v627
        %v631 = vpop.xlane.xlu0 %630
        %v632 = vrcp.pop 128.0
        %v633 = vmul.f32 %v629, %v632
        %v634 = vmul.f32 %v631, %v632
        %v635 = vsub.f32 %v626, %v633
        %v636 = vsub.f32 %v627, %v634
        %v637 = vmul.f32 %v635, %v635
        %v638 = vmul.f32 %v636, %v636
        %639 = vadd.xlane.f32.xlu0 %v637
        %v640 = vpop.xlane.xlu0 %639
        %641 = vadd.xlane.f32.xlu0 %v638
        %v642 = vpop.xlane.xlu0 %641
        %v643 = vmul.f32 %v640, %v632
        %v644 = vmul.f32 %v642, %v632
        %v645 = vadd.f32 %v643, 1e-05
        %v646 = vadd.f32 %v644, 1e-05
        %v647 = vrsqrt.pop %v645
        %v648 = vrsqrt.pop %v646
        %v649 = vmul.f32 %v635, %v647
        %v650 = vmul.f32 %v636, %v648
        %651 = vst [vmem:[#allocation6] sm:$0xff] %v649
        %652 = vst [vmem:[#allocation6 + $0x8] sm:$0xff] %v650
        %v653 = vld [vmem:[#allocation9] sm:$0xff]
        %v654 = vld [vmem:[#allocation9 + $0x8] sm:$0xff]
        %v655 = vld [vmem:[#allocation9 + $0x10] sm:$0xff]
        %v656 = vld [vmem:[#allocation9 + $0x18] sm:$0xff]
        %v657 = vld [vmem:[#allocation9 + $0x20] sm:$0xff]
        %v658 = vld [vmem:[#allocation9 + $0x28] sm:$0xff]
        %v659 = vld [vmem:[#allocation9 + $0x30] sm:$0xff]
        %v660 = vld [vmem:[#allocation9 + $0x38] sm:$0xff]
        %v661 = vld [vmem:[#allocation9 + $0x40] sm:$0xff]
        %v662 = vld [vmem:[#allocation9 + $0x48] sm:$0xff]
        %v663 = vld [vmem:[#allocation9 + $0x50] sm:$0xff]
        %v664 = vld [vmem:[#allocation9 + $0x58] sm:$0xff]
        %v665 = vld [vmem:[#allocation9 + $0x60] sm:$0xff]
        %v666 = vld [vmem:[#allocation9 + $0x68] sm:$0xff]
        %v667 = vld [vmem:[#allocation9 + $0x70] sm:$0xff]
        %v668 = vld [vmem:[#allocation9 + $0x78] sm:$0xff]
        %v669 = vld [vmem:[#allocation9 + $0x80] sm:$0xff]
        %v670 = vld [vmem:[#allocation9 + $0x88] sm:$0xff]
        %v671 = vld [vmem:[#allocation9 + $0x90] sm:$0xff]
        %v672 = vld [vmem:[#allocation9 + $0x98] sm:$0xff]
        %v673 = vld [vmem:[#allocation9 + $0xa0] sm:$0xff]
        %v674 = vld [vmem:[#allocation9 + $0xa8] sm:$0xff]
        %v675 = vld [vmem:[#allocation9 + $0xb0] sm:$0xff]
        %v676 = vld [vmem:[#allocation9 + $0xb8] sm:$0xff]
        %v677 = vld [vmem:[#allocation9 + $0xc0] sm:$0xff]
        %v678 = vld [vmem:[#allocation9 + $0xc8] sm:$0xff]
        %v679 = vld [vmem:[#allocation9 + $0xd0] sm:$0xff]
        %v680 = vld [vmem:[#allocation9 + $0xd8] sm:$0xff]
        %v681 = vld [vmem:[#allocation9 + $0xe0] sm:$0xff]
        %v682 = vld [vmem:[#allocation9 + $0xe8] sm:$0xff]
        %v683 = vld [vmem:[#allocation9 + $0xf0] sm:$0xff]
        %v684 = vld [vmem:[#allocation9 + $0xf8] sm:$0xff]
        %v685 = vld [vmem:[#allocation9 + $0x100] sm:$0xff]
        %v686 = vld [vmem:[#allocation9 + $0x108] sm:$0xff]
        %v687 = vld [vmem:[#allocation9 + $0x110] sm:$0xff]
        %v688 = vld [vmem:[#allocation9 + $0x118] sm:$0xff]
        %v689 = vld [vmem:[#allocation9 + $0x120] sm:$0xff]
        %v690 = vld [vmem:[#allocation9 + $0x128] sm:$0xff]
        %v691 = vld [vmem:[#allocation9 + $0x130] sm:$0xff]
        %v692 = vld [vmem:[#allocation9 + $0x138] sm:$0xff]
        %v693 = vld [vmem:[#allocation9 + $0x140] sm:$0xff]
        %v694 = vld [vmem:[#allocation9 + $0x148] sm:$0xff]
        %v695 = vld [vmem:[#allocation9 + $0x150] sm:$0xff]
        %v696 = vld [vmem:[#allocation9 + $0x158] sm:$0xff]
        %v697 = vld [vmem:[#allocation9 + $0x160] sm:$0xff]
        %v698 = vld [vmem:[#allocation9 + $0x168] sm:$0xff]
        %v699 = vld [vmem:[#allocation9 + $0x170] sm:$0xff]
        %v700 = vld [vmem:[#allocation9 + $0x178] sm:$0xff]
        %v701 = vld [vmem:[#allocation9 + $0x180] sm:$0xff]
        %v702 = vld [vmem:[#allocation9 + $0x188] sm:$0xff]
        %v703 = vld [vmem:[#allocation9 + $0x190] sm:$0xff]
        %v704 = vld [vmem:[#allocation9 + $0x198] sm:$0xff]
        %v705 = vld [vmem:[#allocation9 + $0x1a0] sm:$0xff]
        %v706 = vld [vmem:[#allocation9 + $0x1a8] sm:$0xff]
        %v707 = vld [vmem:[#allocation9 + $0x1b0] sm:$0xff]
        %v708 = vld [vmem:[#allocation9 + $0x1b8] sm:$0xff]
        %v709 = vld [vmem:[#allocation9 + $0x1c0] sm:$0xff]
        %v710 = vld [vmem:[#allocation9 + $0x1c8] sm:$0xff]
        %v711 = vld [vmem:[#allocation9 + $0x1d0] sm:$0xff]
        %v712 = vld [vmem:[#allocation9 + $0x1d8] sm:$0xff]
        %v713 = vld [vmem:[#allocation9 + $0x1e0] sm:$0xff]
        %v714 = vld [vmem:[#allocation9 + $0x1e8] sm:$0xff]
        %v715 = vld [vmem:[#allocation9 + $0x1f0] sm:$0xff]
        %v716 = vld [vmem:[#allocation9 + $0x1f8] sm:$0xff]
        %717 = vmatprep.subr.mxu0 %v714
        %718 = vmatpush1.msra.mxu0 %v713
        %719 = vmatprep.subr.mxu0 %v710
        %720 = vmatpush1.msra.mxu0 %v709
        %721 = vmatprep.subr.mxu0 %v706
        %722 = vmatpush1.msra.mxu0 %v705
        %723 = vmatprep.subr.mxu0 %v702
        %724 = vmatpush1.msra.mxu0 %v701
        %725 = vmatprep.subr.mxu0 %v698
        %726 = vmatpush1.msra.mxu0 %v697
        %727 = vmatprep.subr.mxu0 %v694
        %728 = vmatpush1.msra.mxu0 %v693
        %729 = vmatprep.subr.mxu0 %v690
        %730 = vmatpush1.msra.mxu0 %v689
        %731 = vmatprep.subr.mxu0 %v686
        %732 = vmatpush1.msra.mxu0 %v685
        %733 = vmatprep.subr.mxu0 %v682
        %734 = vmatpush1.msra.mxu0 %v681
        %735 = vmatprep.subr.mxu0 %v678
        %736 = vmatpush1.msra.mxu0 %v677
        %737 = vmatprep.subr.mxu0 %v674
        %738 = vmatpush1.msra.mxu0 %v673
        %739 = vmatprep.subr.mxu0 %v670
        %740 = vmatpush1.msra.mxu0 %v669
        %741 = vmatprep.subr.mxu0 %v666
        %742 = vmatpush1.msra.mxu0 %v665
        %743 = vmatprep.subr.mxu0 %v662
        %744 = vmatpush1.msra.mxu0 %v661
        %745 = vmatprep.subr.mxu0 %v658
        %746 = vmatpush1.msra.mxu0 %v657
        %747 = vmatprep.subr.mxu0 %v654
        %748 = vmatpush1.msra.mxu0 %v653
        %749 = vmatprep.subr.mxu0 0.0
        %750 = vmatpush2.msra.mxu0 0.0
        %751 = vmatprep.subr.mxu0 0.0
        %752 = vmatpush2.msra.mxu0 0.0
        %753 = vmatprep.subr.mxu0 0.0
        %754 = vmatpush2.msra.mxu0 0.0
        %755 = vmatprep.subr.mxu0 0.0
        %756 = vmatpush2.msra.mxu0 0.0
        %757 = vmatprep.subr.mxu0 0.0
        %758 = vmatpush2.msra.mxu0 0.0
        %759 = vmatprep.subr.mxu0 0.0
        %760 = vmatpush2.msra.mxu0 0.0
        %761 = vmatprep.subr.mxu0 0.0
        %762 = vmatpush2.msra.mxu0 0.0
        %763 = vmatprep.subr.mxu0 0.0
        %764 = vmatpush2.msra.mxu0 0.0
        %765 = vmatprep.subr.mxu0 0.0
        %766 = vmatpush2.msra.mxu0 0.0
        %767 = vmatprep.subr.mxu0 0.0
        %768 = vmatpush2.msra.mxu0 0.0
        %769 = vmatprep.subr.mxu0 0.0
        %770 = vmatpush2.msra.mxu0 0.0
        %771 = vmatprep.subr.mxu0 0.0
        %772 = vmatpush2.msra.mxu0 0.0
        %773 = vmatprep.subr.mxu0 0.0
        %774 = vmatpush2.msra.mxu0 0.0
        %775 = vmatprep.subr.mxu0 0.0
        %776 = vmatpush2.msra.mxu0 0.0
        %777 = vmatprep.subr.mxu0 0.0
        %778 = vmatpush2.msra.mxu0 0.0
        %779 = vmatprep.subr.mxu0 0.0
        %780 = vmatpush2.msra.mxu0 0.0
        %781 = vmatprep.mubr.f32.mxu0 0.0
        %782 = vmatmul.mubr.f32.gmra.mxu0 %v649
        %v783 = vpop.f32.mrf.mxu0
        %v784 = vadd.f32 0.0, %v783
        %v785 = vpop.f32.mrf.mxu0
        %v786 = vadd.f32 0.0, %v785
        %787 = vmatprep.mubr.f32.mxu0 0.0
        %788 = vmatmul.mubr.f32.gmra.mxu0 %v650
        %v789 = vpop.f32.mrf.mxu0
        %v790 = vadd.f32 0.0, %v789
        %v791 = vpop.f32.mrf.mxu0
        %v792 = vadd.f32 0.0, %v791
        %793 = vdwg.mxu0
        %794 = vmatprep.subr.mxu0 %v716
        %795 = vmatpush1.msra.mxu0 %v715
        %796 = vmatprep.subr.mxu0 %v712
        %797 = vmatpush1.msra.mxu0 %v711
        %798 = vmatprep.subr.mxu0 %v708
        %799 = vmatpush1.msra.mxu0 %v707
        %800 = vmatprep.subr.mxu0 %v704
        %801 = vmatpush1.msra.mxu0 %v703
        %802 = vmatprep.subr.mxu0 %v700
        %803 = vmatpush1.msra.mxu0 %v699
        %804 = vmatprep.subr.mxu0 %v696
        %805 = vmatpush1.msra.mxu0 %v695
        %806 = vmatprep.subr.mxu0 %v692
        %807 = vmatpush1.msra.mxu0 %v691
        %808 = vmatprep.subr.mxu0 %v688
        %809 = vmatpush1.msra.mxu0 %v687
        %810 = vmatprep.subr.mxu0 %v684
        %811 = vmatpush1.msra.mxu0 %v683
        %812 = vmatprep.subr.mxu0 %v680
        %813 = vmatpush1.msra.mxu0 %v679
        %814 = vmatprep.subr.mxu0 %v676
        %815 = vmatpush1.msra.mxu0 %v675
        %816 = vmatprep.subr.mxu0 %v672
        %817 = vmatpush1.msra.mxu0 %v671
        %818 = vmatprep.subr.mxu0 %v668
        %819 = vmatpush1.msra.mxu0 %v667
        %820 = vmatprep.subr.mxu0 %v664
        %821 = vmatpush1.msra.mxu0 %v663
        %822 = vmatprep.subr.mxu0 %v660
        %823 = vmatpush1.msra.mxu0 %v659
        %824 = vmatprep.subr.mxu0 %v656
        %825 = vmatpush1.msra.mxu0 %v655
        %826 = vmatprep.subr.mxu0 0.0
        %827 = vmatpush2.msra.mxu0 0.0
        %828 = vmatprep.subr.mxu0 0.0
        %829 = vmatpush2.msra.mxu0 0.0
        %830 = vmatprep.subr.mxu0 0.0
        %831 = vmatpush2.msra.mxu0 0.0
        %832 = vmatprep.subr.mxu0 0.0
        %833 = vmatpush2.msra.mxu0 0.0
        %834 = vmatprep.subr.mxu0 0.0
        %835 = vmatpush2.msra.mxu0 0.0
        %836 = vmatprep.subr.mxu0 0.0
        %837 = vmatpush2.msra.mxu0 0.0
        %838 = vmatprep.subr.mxu0 0.0
        %839 = vmatpush2.msra.mxu0 0.0
        %840 = vmatprep.subr.mxu0 0.0
        %841 = vmatpush2.msra.mxu0 0.0
        %842 = vmatprep.subr.mxu0 0.0
        %843 = vmatpush2.msra.mxu0 0.0
        %844 = vmatprep.subr.mxu0 0.0
        %845 = vmatpush2.msra.mxu0 0.0
        %846 = vmatprep.subr.mxu0 0.0
        %847 = vmatpush2.msra.mxu0 0.0
        %848 = vmatprep.subr.mxu0 0.0
        %849 = vmatpush2.msra.mxu0 0.0
        %850 = vmatprep.subr.mxu0 0.0
        %851 = vmatpush2.msra.mxu0 0.0
        %852 = vmatprep.subr.mxu0 0.0
        %853 = vmatpush2.msra.mxu0 0.0
        %854 = vmatprep.subr.mxu0 0.0
        %855 = vmatpush2.msra.mxu0 0.0
        %856 = vmatprep.subr.mxu0 0.0
        %857 = vmatpush2.msra.mxu0 0.0
        %858 = vmatprep.mubr.f32.mxu0 0.0
        %859 = vmatmul.mubr.f32.gmra.mxu0 %v649
        %v860 = vpop.f32.mrf.mxu0
        %v861 = vadd.f32 0.0, %v860
        %v862 = vpop.f32.mrf.mxu0
        %v863 = vadd.f32 0.0, %v862
        %864 = vmatprep.mubr.f32.mxu0 0.0
        %865 = vmatmul.mubr.f32.gmra.mxu0 %v650
        %v866 = vpop.f32.mrf.mxu0
        %v867 = vadd.f32 0.0, %v866
        %v868 = vpop.f32.mrf.mxu0
        %v869 = vadd.f32 0.0, %v868
        %870 = vdwg.mxu0
        %v871 = vsub.f32 0.0, %v861
        %v872 = vsub.f32 0.0, %v863
        %v873 = vsub.f32 0.0, %v867
        %v874 = vsub.f32 0.0, %v869
        %v875 = vmul.f32 %v871, 1.442695
        %v876 = vpow.pop %v875
        %v877 = vmul.f32 %v872, 1.442695
        %v878 = vpow.pop %v877
        %v879 = vmul.f32 %v873, 1.442695
        %v880 = vpow.pop %v879
        %v881 = vmul.f32 %v874, 1.442695
        %v882 = vpow.pop %v881
        %v883 = vadd.f32 %v876, 1.0
        %v884 = vadd.f32 %v878, 1.0
        %v885 = vadd.f32 %v880, 1.0
        %v886 = vadd.f32 %v882, 1.0
        %v887 = vrcp.pop %v883
        %v888 = vmul.f32 1.0, %v887
        %v889 = vrcp.pop %v884
        %v890 = vmul.f32 1.0, %v889
        %v891 = vrcp.pop %v885
        %v892 = vmul.f32 1.0, %v891
        %v893 = vrcp.pop %v886
        %v894 = vmul.f32 1.0, %v893
        %v895 = vmul.f32 %v861, %v888
        %v896 = vmul.f32 %v863, %v890
        %v897 = vmul.f32 %v867, %v892
        %v898 = vmul.f32 %v869, %v894
        %899 = vst [vmem:[#allocation4] sm:$0xff] %v895
        %900 = vst [vmem:[#allocation4 + $0x8] sm:$0xff] %v896
        %901 = vst [vmem:[#allocation4 + $0x10] sm:$0xff] %v897
        %902 = vst [vmem:[#allocation4 + $0x18] sm:$0xff] %v898
        %v903 = vld [vmem:[#allocation12] sm:$0xff]
        %v904 = vld [vmem:[#allocation14] sm:$0x3]
        %v906 = vlaneseq
        %v907 = vshrl.u32 %v906, 7
        %v908 = vsub.s32 3, %v907
        %v909 = vrot.slane %v903, %v908
        %v910 = vlaneseq
        %v911 = vshrl.u32 %v910, 7
        %v912 = vsub.s32 7, %v911
        %v913 = vrot.slane %v903, %v912
        %v916 = vlaneseq
        %v917 = vshrl.u32 %v916, 7
        %v918 = vsub.s32 3, %v917
        %v919 = vrot.slane %v909, %v918
        %v920 = vlaneseq
        %v921 = vshrl.u32 %v920, 7
        %v922 = vsub.s32 3, %v921
        %v923 = vrot.slane %v913, %v922
        %v924 = vmul.f32 %v784, %v919
        %v925 = vmul.f32 %v786, %v923
        %v926 = vmul.f32 %v790, %v919
        %v927 = vmul.f32 %v792, %v923
        %v929 = vlaneseq
        %v930 = vshrl.u32 %v929, 7
        %v931 = vsub.s32 0, %v930
        %v932 = vrot.slane %v904, %v931
        %v933 = vlaneseq
        %v934 = vshrl.u32 %v933, 7
        %v935 = vsub.s32 1, %v934
        %v936 = vrot.slane %v904, %v935
        %v939 = vadd.f32 %v924, %v932
        %v940 = vadd.f32 %v925, %v936
        %v941 = vadd.f32 %v926, %v932
        %v942 = vadd.f32 %v927, %v936
        %v943 = vrot.slane %v784, 5
        %v944 = vrot.slane %v786, 5
        %v945 = vrot.slane %v790, 5
        %v946 = vrot.slane %v792, 5
        %v947 = vlaneseq
        %v948 = vshrl.u32 %v947, 7
        %vm949 = vcmp.lt.s32.totalorder %v948, 3
        %v950 = vsel %vm949, %v943, %v945
        %v951 = vsel %vm949, %v944, %v946
        %v952 = vsel %vm949, %v945, %v943
        %v953 = vsel %vm949, %v946, %v944
        %v954 = vlaneseq
        %v955 = vshrl.u32 %v954, 7
        %v956 = vsub.s32 0, %v955
        %v957 = vrot.slane %v903, %v956
        %v958 = vlaneseq
        %v959 = vshrl.u32 %v958, 7
        %v960 = vsub.s32 4, %v959
        %v961 = vrot.slane %v903, %v960
        %v964 = vlaneseq
        %v965 = vshrl.u32 %v964, 7
        %v966 = vsub.s32 0, %v965
        %v967 = vrot.slane %v957, %v966
        %v968 = vlaneseq
        %v969 = vshrl.u32 %v968, 7
        %v970 = vsub.s32 0, %v969
        %v971 = vrot.slane %v961, %v970
        %v972 = vmul.f32 %v952, %v967
        %v973 = vmul.f32 %v953, %v971
        %v974 = vmul.f32 %v950, %v967
        %v975 = vmul.f32 %v951, %v971
        %v976 = vadd.f32 %v939, %v972
        %v977 = vadd.f32 %v940, %v973
        %v978 = vadd.f32 %v941, %v974
        %v979 = vadd.f32 %v942, %v975
        %v980 = vrot.slane %v784, 6
        %v981 = vrot.slane %v786, 6
        %v982 = vrot.slane %v790, 6
        %v983 = vrot.slane %v792, 6
        %vm984 = vcmp.lt.s32.totalorder %v948, 2
        %v985 = vsel %vm984, %v980, %v982
        %v986 = vsel %vm984, %v981, %v983
        %v987 = vsel %vm984, %v982, %v980
        %v988 = vsel %vm984, %v983, %v981
        %v989 = vlaneseq
        %v990 = vshrl.u32 %v989, 7
        %v991 = vsub.s32 1, %v990
        %v992 = vrot.slane %v903, %v991
        %v993 = vlaneseq
        %v994 = vshrl.u32 %v993, 7
        %v995 = vsub.s32 5, %v994
        %v996 = vrot.slane %v903, %v995
        %v999 = vlaneseq
        %v1000 = vshrl.u32 %v999, 7
        %v1001 = vsub.s32 1, %v1000
        %v1002 = vrot.slane %v992, %v1001
        %v1003 = vlaneseq
        %v1004 = vshrl.u32 %v1003, 7
        %v1005 = vsub.s32 1, %v1004
        %v1006 = vrot.slane %v996, %v1005
        %v1007 = vmul.f32 %v987, %v1002
        %v1008 = vmul.f32 %v988, %v1006
        %v1009 = vmul.f32 %v985, %v1002
        %v1010 = vmul.f32 %v986, %v1006
        %v1011 = vadd.f32 %v976, %v1007
        %v1012 = vadd.f32 %v977, %v1008
        %v1013 = vadd.f32 %v978, %v1009
        %v1014 = vadd.f32 %v979, %v1010
        %v1015 = vrot.slane %v784, 7
        %v1016 = vrot.slane %v786, 7
        %v1017 = vrot.slane %v790, 7
        %v1018 = vrot.slane %v792, 7
        %vm1019 = vcmp.lt.s32.totalorder %v948, 1
        %v1020 = vsel %vm1019, %v1015, %v1017
        %v1021 = vsel %vm1019, %v1016, %v1018
        %v1022 = vsel %vm1019, %v1017, %v1015
        %v1023 = vsel %vm1019, %v1018, %v1016
        %v1024 = vlaneseq
        %v1025 = vshrl.u32 %v1024, 7
        %v1026 = vsub.s32 2, %v1025
        %v1027 = vrot.slane %v903, %v1026
        %v1028 = vlaneseq
        %v1029 = vshrl.u32 %v1028, 7
        %v1030 = vsub.s32 6, %v1029
        %v1031 = vrot.slane %v903, %v1030
        %v1034 = vlaneseq
        %v1035 = vshrl.u32 %v1034, 7
        %v1036 = vsub.s32 2, %v1035
        %v1037 = vrot.slane %v1027, %v1036
        %v1038 = vlaneseq
        %v1039 = vshrl.u32 %v1038, 7
        %v1040 = vsub.s32 2, %v1039
        %v1041 = vrot.slane %v1031, %v1040
        %v1042 = vmul.f32 %v1022, %v1037
        %v1043 = vmul.f32 %v1023, %v1041
        %v1044 = vmul.f32 %v1020, %v1037
        %v1045 = vmul.f32 %v1021, %v1041
        %v1046 = vadd.f32 %v1011, %v1042
        %v1047 = vadd.f32 %v1012, %v1043
        %v1048 = vadd.f32 %v1013, %v1044
        %v1049 = vadd.f32 %v1014, %v1045
        %v1050 = vsub.f32 0.0, %v1046
        %v1051 = vsub.f32 0.0, %v1047
        %v1052 = vsub.f32 0.0, %v1048
        %v1053 = vsub.f32 0.0, %v1049
        %v1054 = vmul.f32 %v1050, 1.442695
        %v1055 = vpow.pop %v1054
        %v1056 = vmul.f32 %v1051, 1.442695
        %v1057 = vpow.pop %v1056
        %v1058 = vmul.f32 %v1052, 1.442695
        %v1059 = vpow.pop %v1058
        %v1060 = vmul.f32 %v1053, 1.442695
        %v1061 = vpow.pop %v1060
        %v1062 = vadd.f32 %v1055, 1.0
        %v1063 = vadd.f32 %v1057, 1.0
        %v1064 = vadd.f32 %v1059, 1.0
        %v1065 = vadd.f32 %v1061, 1.0
        %v1066 = vrcp.pop %v1062
        %v1067 = vmul.f32 1.0, %v1066
        %v1068 = vrcp.pop %v1063
        %v1069 = vmul.f32 1.0, %v1068
        %v1070 = vrcp.pop %v1064
        %v1071 = vmul.f32 1.0, %v1070
        %v1072 = vrcp.pop %v1065
        %v1073 = vmul.f32 1.0, %v1072
        %v1074 = vmul.f32 %v1046, %v1067
        %v1075 = vmul.f32 %v1047, %v1069
        %v1076 = vmul.f32 %v1048, %v1071
        %v1077 = vmul.f32 %v1049, %v1073
        %1078 = vst [vmem:[#allocation2] sm:$0xff] %v1074
        %1079 = vst [vmem:[#allocation2 + $0x8] sm:$0xff] %v1075
        %1080 = vst [vmem:[#allocation2 + $0x10] sm:$0xff] %v1076
        %1081 = vst [vmem:[#allocation2 + $0x18] sm:$0xff] %v1077
        %v1082 = vld [vmem:[#allocation7] sm:$0xff]
        %v1083 = vld [vmem:[#allocation7 + $0x8] sm:$0xff]
        %v1084 = vrot.slane %v1082, 5
        %v1085 = vrot.slane %v1083, 5
        %vm1086 = vcmp.ge.s32.totalorder %v948, 3
        %v1087 = vsel %vm1086, 1, 0
        %vm1088 = vcmp.eq.s32.totalorder %v1087, 1
        %v1089 = vsel %vm1088, %v943, %v1084
        %v1090 = vsel %vm1088, %v944, %v1085
        %v1091 = vmul.f32 %v1089, %v967
        %v1092 = vmul.f32 %v1090, %v971
        %v1093 = vadd.f32 %v939, %v1091
        %v1094 = vadd.f32 %v940, %v1092
        %v1095 = vrot.slane %v1082, 6
        %v1096 = vrot.slane %v1083, 6
        %vm1097 = vcmp.ge.s32.totalorder %v948, 2
        %v1098 = vsel %vm1097, 1, 0
        %vm1099 = vcmp.eq.s32.totalorder %v1098, 1
        %v1100 = vsel %vm1099, %v980, %v1095
        %v1101 = vsel %vm1099, %v981, %v1096
        %v1102 = vmul.f32 %v1100, %v1002
        %v1103 = vmul.f32 %v1101, %v1006
        %v1104 = vadd.f32 %v1093, %v1102
        %v1105 = vadd.f32 %v1094, %v1103
        %v1106 = vrot.slane %v1082, 7
        %v1107 = vrot.slane %v1083, 7
        %vm1108 = vcmp.ge.s32.totalorder %v948, 1
        %v1109 = vsel %vm1108, 1, 0
        %vm1110 = vcmp.eq.s32.totalorder %v1109, 1
        %v1111 = vsel %vm1110, %v1015, %v1106
        %v1112 = vsel %vm1110, %v1016, %v1107
        %v1113 = vmul.f32 %v1111, %v1037
        %v1114 = vmul.f32 %v1112, %v1041
        %v1115 = vadd.f32 %v1104, %v1113
        %v1116 = vadd.f32 %v1105, %v1114
        %v1117 = vsub.f32 0.0, %v1115
        %v1118 = vsub.f32 0.0, %v1116
        %v1119 = vmul.f32 %v1117, 1.442695
        %v1120 = vpow.pop %v1119
        %v1121 = vmul.f32 %v1118, 1.442695
        %v1122 = vpow.pop %v1121
        %v1123 = vadd.f32 %v1120, 1.0
        %v1124 = vadd.f32 %v1122, 1.0
        %v1125 = vrcp.pop %v1123
        %v1126 = vmul.f32 1.0, %v1125
        %v1127 = vrcp.pop %v1124
        %v1128 = vmul.f32 1.0, %v1127
        %v1129 = vmul.f32 %v1115, %v1126
        %v1130 = vmul.f32 %v1116, %v1128
        %1131 = vst [vmem:[#allocation2] sm:$0xff] %v1129
        %1132 = vst [vmem:[#allocation2 + $0x8] sm:$0xff] %v1130
        %1133 = vst [vmem:[#allocation7] sm:$0xff] %v790
        %1134 = vst [vmem:[#allocation7 + $0x8] sm:$0xff] %v792
        %v1135 = vld [vmem:[#allocation2] sm:$0xff]
        %v1136 = vld [vmem:[#allocation2 + $0x8] sm:$0xff]
        %v1137 = vld [vmem:[#allocation2 + $0x10] sm:$0xff]
        %v1138 = vld [vmem:[#allocation2 + $0x18] sm:$0xff]
        %v1139 = vld [vmem:[%s4] sm:$0xff]
        %v1140 = vld [vmem:[%s4 + $0x8] sm:$0xff]
        %v1141 = vld [vmem:[%s4 + $0x10] sm:$0xff]
        %v1142 = vld [vmem:[%s4 + $0x18] sm:$0xff]
        %v1143 = vld [vmem:[%s4 + $0x20] sm:$0xff]
        %v1144 = vld [vmem:[%s4 + $0x28] sm:$0xff]
        %v1145 = vld [vmem:[%s4 + $0x30] sm:$0xff]
        %v1146 = vld [vmem:[%s4 + $0x38] sm:$0xff]
        %v1147 = vld [vmem:[%s4 + $0x40] sm:$0xff]
        %v1148 = vld [vmem:[%s4 + $0x48] sm:$0xff]
        %v1149 = vld [vmem:[%s4 + $0x50] sm:$0xff]
        %v1150 = vld [vmem:[%s4 + $0x58] sm:$0xff]
        %v1151 = vld [vmem:[%s4 + $0x60] sm:$0xff]
        %v1152 = vld [vmem:[%s4 + $0x68] sm:$0xff]
        %v1153 = vld [vmem:[%s4 + $0x70] sm:$0xff]
        %v1154 = vld [vmem:[%s4 + $0x78] sm:$0xff]
        %v1155 = vld [vmem:[%s4 + $0x80] sm:$0xff]
        %v1156 = vld [vmem:[%s4 + $0x88] sm:$0xff]
        %v1157 = vld [vmem:[%s4 + $0x90] sm:$0xff]
        %v1158 = vld [vmem:[%s4 + $0x98] sm:$0xff]
        %v1159 = vld [vmem:[%s4 + $0xa0] sm:$0xff]
        %v1160 = vld [vmem:[%s4 + $0xa8] sm:$0xff]
        %v1161 = vld [vmem:[%s4 + $0xb0] sm:$0xff]
        %v1162 = vld [vmem:[%s4 + $0xb8] sm:$0xff]
        %v1163 = vld [vmem:[%s4 + $0xc0] sm:$0xff]
        %v1164 = vld [vmem:[%s4 + $0xc8] sm:$0xff]
        %v1165 = vld [vmem:[%s4 + $0xd0] sm:$0xff]
        %v1166 = vld [vmem:[%s4 + $0xd8] sm:$0xff]
        %v1167 = vld [vmem:[%s4 + $0xe0] sm:$0xff]
        %v1168 = vld [vmem:[%s4 + $0xe8] sm:$0xff]
        %v1169 = vld [vmem:[%s4 + $0xf0] sm:$0xff]
        %v1170 = vld [vmem:[%s4 + $0xf8] sm:$0xff]
        %1171 = vmatprep.subr.mxu0 0.0
        %1172 = vmatpush1.msra.mxu0 %v1154
        %1173 = vmatprep.subr.mxu0 0.0
        %1174 = vmatpush1.msra.mxu0 %v1153
        %1175 = vmatprep.subr.mxu0 0.0
        %1176 = vmatpush1.msra.mxu0 %v1152
        %1177 = vmatprep.subr.mxu0 0.0
        %1178 = vmatpush1.msra.mxu0 %v1151
        %1179 = vmatprep.subr.mxu0 0.0
        %1180 = vmatpush1.msra.mxu0 %v1150
        %1181 = vmatprep.subr.mxu0 0.0
        %1182 = vmatpush1.msra.mxu0 %v1149
        %1183 = vmatprep.subr.mxu0 0.0
        %1184 = vmatpush1.msra.mxu0 %v1148
        %1185 = vmatprep.subr.mxu0 0.0
        %1186 = vmatpush1.msra.mxu0 %v1147
        %1187 = vmatprep.subr.mxu0 0.0
        %1188 = vmatpush1.msra.mxu0 %v1146
        %1189 = vmatprep.subr.mxu0 0.0
        %1190 = vmatpush1.msra.mxu0 %v1145
        %1191 = vmatprep.subr.mxu0 0.0
        %1192 = vmatpush1.msra.mxu0 %v1144
        %1193 = vmatprep.subr.mxu0 0.0
        %1194 = vmatpush1.msra.mxu0 %v1143
        %1195 = vmatprep.subr.mxu0 0.0
        %1196 = vmatpush1.msra.mxu0 %v1142
        %1197 = vmatprep.subr.mxu0 0.0
        %1198 = vmatpush1.msra.mxu0 %v1141
        %1199 = vmatprep.subr.mxu0 0.0
        %1200 = vmatpush1.msra.mxu0 %v1140
        %1201 = vmatprep.subr.mxu0 0.0
        %1202 = vmatpush1.msra.mxu0 %v1139
        %1203 = vmatprep.subr.mxu0 0.0
        %1204 = vmatpush2.msra.mxu0 %v1170
        %1205 = vmatprep.subr.mxu0 0.0
        %1206 = vmatpush2.msra.mxu0 %v1169
        %1207 = vmatprep.subr.mxu0 0.0
        %1208 = vmatpush2.msra.mxu0 %v1168
        %1209 = vmatprep.subr.mxu0 0.0
        %1210 = vmatpush2.msra.mxu0 %v1167
        %1211 = vmatprep.subr.mxu0 0.0
        %1212 = vmatpush2.msra.mxu0 %v1166
        %1213 = vmatprep.subr.mxu0 0.0
        %1214 = vmatpush2.msra.mxu0 %v1165
        %1215 = vmatprep.subr.mxu0 0.0
        %1216 = vmatpush2.msra.mxu0 %v1164
        %1217 = vmatprep.subr.mxu0 0.0
        %1218 = vmatpush2.msra.mxu0 %v1163
        %1219 = vmatprep.subr.mxu0 0.0
        %1220 = vmatpush2.msra.mxu0 %v1162
        %1221 = vmatprep.subr.mxu0 0.0
        %1222 = vmatpush2.msra.mxu0 %v1161
        %1223 = vmatprep.subr.mxu0 0.0
        %1224 = vmatpush2.msra.mxu0 %v1160
        %1225 = vmatprep.subr.mxu0 0.0
        %1226 = vmatpush2.msra.mxu0 %v1159
        %1227 = vmatprep.subr.mxu0 0.0
        %1228 = vmatpush2.msra.mxu0 %v1158
        %1229 = vmatprep.subr.mxu0 0.0
        %1230 = vmatpush2.msra.mxu0 %v1157
        %1231 = vmatprep.subr.mxu0 0.0
        %1232 = vmatpush2.msra.mxu0 %v1156
        %1233 = vmatprep.subr.mxu0 0.0
        %1234 = vmatpush2.msra.mxu0 %v1155
        %1235 = vmatprep.mubr.f32.mxu0 %v1136
        %1236 = vmatmul.mubr.f32.gmra.mxu0 %v1135
        %v1237 = vpop.f32.mrf.mxu0
        %v1238 = vadd.f32 0.0, %v1237
        %v1239 = vpop.f32.mrf.mxu0
        %1240 = vmatprep.mubr.f32.mxu0 %v1138
        %1241 = vmatmul.mubr.f32.gmra.mxu0 %v1137
        %v1242 = vpop.f32.mrf.mxu0
        %v1243 = vadd.f32 0.0, %v1242
        %v1244 = vpop.f32.mrf.mxu0
        %1245 = vdwg.mxu0
        %v1246 = vld [vmem:[#allocation15] sm:$0xff]
        %v1247 = vld [vmem:[#allocation15 + $0x8] sm:$0xff]
        %1250 = vrot.lane.b32.xlu0 %v1238, 120
        %v1251 = vpop.permute.xlu0 %1250
        %1252 = vrot.lane.b32.xlu0 %v1243, 120
        %v1253 = vpop.permute.xlu0 %1252
        %vm1256 = vcmask 261120
        %1257 = vst.msk [vmem:[#allocation5] sm:$0xff] %vm1256, %v1251
        %1258 = vst.msk [vmem:[#allocation5 + $0x8] sm:$0xff] %vm1256, %v1253
        %v1259 = vld [vmem:[#allocation17] sm:$0x3]
        %v1261 = vlaneseq
        %v1262 = vshrl.u32 %v1261, 7
        %v1263 = vsub.s32 0, %v1262
        %v1264 = vrot.slane %v1259, %v1263
        %v1265 = vlaneseq
        %v1266 = vshrl.u32 %v1265, 7
        %v1267 = vsub.s32 1, %v1266
        %v1268 = vrot.slane %v1259, %v1267
        %vm1271 = vcmask 64512
        %v1272 = vsel %vm1271, %v1238, 0
        %v1274 = vsel %vm1271, %v1243, 0
        %1276 = vmatprep.subr.mxu0 0.0
        %1277 = vmatpush1.msra.mxu0 0.0
        %1278 = vmatprep.subr.mxu0 0.0
        %1279 = vmatpush1.msra.mxu0 0.0
        %1280 = vmatprep.subr.mxu0 0.0
        %1281 = vmatpush1.msra.mxu0 0.0
        %1282 = vmatprep.subr.mxu0 0.0
        %1283 = vmatpush1.msra.mxu0 0.0
        %1284 = vmatprep.subr.mxu0 0.0
        %1285 = vmatpush1.msra.mxu0 0.0
        %1286 = vmatprep.subr.mxu0 0.0
        %1287 = vmatpush1.msra.mxu0 0.0
        %1288 = vmatprep.subr.mxu0 0.0
        %1289 = vmatpush1.msra.mxu0 0.0
        %1290 = vmatprep.subr.mxu0 0.0
        %1291 = vmatpush1.msra.mxu0 0.0
        %1292 = vmatprep.subr.mxu0 0.0
        %1293 = vmatpush1.msra.mxu0 0.0
        %1294 = vmatprep.subr.mxu0 0.0
        %1295 = vmatpush1.msra.mxu0 0.0
        %1296 = vmatprep.subr.mxu0 0.0
        %1297 = vmatpush1.msra.mxu0 0.0
        %1298 = vmatprep.subr.mxu0 0.0
        %1299 = vmatpush1.msra.mxu0 0.0
        %1300 = vmatprep.subr.mxu0 0.0
        %1301 = vmatpush1.msra.mxu0 0.0
        %1302 = vmatprep.subr.mxu0 0.0
        %1303 = vmatpush1.msra.mxu0 0.0
        %1304 = vmatprep.subr.mxu0 0.0
        %1305 = vmatpush1.msra.mxu0 0.0
        %1306 = vmatprep.subr.mxu0 %v1247
        %1307 = vmatpush1.msra.mxu0 %v1246
        %1308 = vmatprep.subr.mxu0 0.0
        %1309 = vmatpush2.msra.mxu0 0.0
        %1310 = vmatprep.subr.mxu0 0.0
        %1311 = vmatpush2.msra.mxu0 0.0
        %1312 = vmatprep.subr.mxu0 0.0
        %1313 = vmatpush2.msra.mxu0 0.0
        %1314 = vmatprep.subr.mxu0 0.0
        %1315 = vmatpush2.msra.mxu0 0.0
        %1316 = vmatprep.subr.mxu0 0.0
        %1317 = vmatpush2.msra.mxu0 0.0
        %1318 = vmatprep.subr.mxu0 0.0
        %1319 = vmatpush2.msra.mxu0 0.0
        %1320 = vmatprep.subr.mxu0 0.0
        %1321 = vmatpush2.msra.mxu0 0.0
        %1322 = vmatprep.subr.mxu0 0.0
        %1323 = vmatpush2.msra.mxu0 0.0
        %1324 = vmatprep.subr.mxu0 0.0
        %1325 = vmatpush2.msra.mxu0 0.0
        %1326 = vmatprep.subr.mxu0 0.0
        %1327 = vmatpush2.msra.mxu0 0.0
        %1328 = vmatprep.subr.mxu0 0.0
        %1329 = vmatpush2.msra.mxu0 0.0
        %1330 = vmatprep.subr.mxu0 0.0
        %1331 = vmatpush2.msra.mxu0 0.0
        %1332 = vmatprep.subr.mxu0 0.0
        %1333 = vmatpush2.msra.mxu0 0.0
        %1334 = vmatprep.subr.mxu0 0.0
        %1335 = vmatpush2.msra.mxu0 0.0
        %1336 = vmatprep.subr.mxu0 0.0
        %1337 = vmatpush2.msra.mxu0 0.0
        %1338 = vmatprep.subr.mxu0 0.0
        %1339 = vmatpush2.msra.mxu0 0.0
        %1340 = vmatprep.mubr.f32.mxu0 0.0
        %1341 = vmatmul.mubr.f32.gmra.mxu0 %v1272
        %v1342 = vpop.f32.mrf.mxu0
        %v1343 = vadd.f32 %v1264, %v1342
        %v1344 = vpop.f32.mrf.mxu0
        %v1345 = vadd.f32 %v1268, %v1344
        %1346 = vmatprep.mubr.f32.mxu0 0.0
        %1347 = vmatmul.mubr.f32.gmra.mxu0 %v1274
        %v1348 = vpop.f32.mrf.mxu0
        %v1349 = vadd.f32 %v1264, %v1348
        %v1350 = vpop.f32.mrf.mxu0
        %v1351 = vadd.f32 %v1268, %v1350
        %1352 = vdwg.mxu0
        %vm1353 = vcmp.gt.f32.partialorder %v1343, 20.0
        %vm1354 = vcmp.gt.f32.partialorder %v1345, 20.0
        %vm1355 = vcmp.gt.f32.partialorder %v1349, 20.0
        %vm1356 = vcmp.gt.f32.partialorder %v1351, 20.0
        %v1357 = vmin.f32 %v1343, 20.0
        %v1358 = vmin.f32 %v1345, 20.0
        %v1359 = vmin.f32 %v1349, 20.0
        %v1360 = vmin.f32 %v1351, 20.0
        %v1361 = vmul.f32 %v1357, 1.442695
        %v1362 = vpow.pop %v1361
        %v1363 = vmul.f32 %v1358, 1.442695
        %v1364 = vpow.pop %v1363
        %v1365 = vmul.f32 %v1359, 1.442695
        %v1366 = vpow.pop %v1365
        %v1367 = vmul.f32 %v1360, 1.442695
        %v1368 = vpow.pop %v1367
        %v1369 = vadd.f32 %v1362, 1.0
        %v1370 = vlog2.pop %v1369
        %v1371 = vmul.f32 %v1370, 0.6931472
        %v1372 = vmul.f32 -0.5, %v1362
        %v1373 = vadd.f32 %v1372, 1.0
        %v1374 = vmul.f32 %v1373, %v1362
        %v1375 = vand.u32 2147483647, %v1362
        %vm1376 = vcmp.lt.f32.partialorder %v1375, 0.0004427343
        %v1377 = vsel %vm1376, %v1374, %v1371
        %v1378 = vadd.f32 %v1364, 1.0
        %v1379 = vlog2.pop %v1378
        %v1380 = vmul.f32 %v1379, 0.6931472
        %v1381 = vmul.f32 -0.5, %v1364
        %v1382 = vadd.f32 %v1381, 1.0
        %v1383 = vmul.f32 %v1382, %v1364
        %v1384 = vand.u32 2147483647, %v1364
        %vm1385 = vcmp.lt.f32.partialorder %v1384, 0.0004427343
        %v1386 = vsel %vm1385, %v1383, %v1380
        %v1387 = vadd.f32 %v1366, 1.0
        %v1388 = vlog2.pop %v1387
        %v1389 = vmul.f32 %v1388, 0.6931472
        %v1390 = vmul.f32 -0.5, %v1366
        %v1391 = vadd.f32 %v1390, 1.0
        %v1392 = vmul.f32 %v1391, %v1366
        %v1393 = vand.u32 2147483647, %v1366
        %vm1394 = vcmp.lt.f32.partialorder %v1393, 0.0004427343
        %v1395 = vsel %vm1394, %v1392, %v1389
        %v1396 = vadd.f32 %v1368, 1.0
        %v1397 = vlog2.pop %v1396
        %v1398 = vmul.f32 %v1397, 0.6931472
        %v1399 = vmul.f32 -0.5, %v1368
        %v1400 = vadd.f32 %v1399, 1.0
        %v1401 = vmul.f32 %v1400, %v1368
        %v1402 = vand.u32 2147483647, %v1368
        %vm1403 = vcmp.lt.f32.partialorder %v1402, 0.0004427343
        %v1404 = vsel %vm1403, %v1401, %v1398
        %v1405 = vsel %vm1353, %v1343, %v1377
        %v1406 = vsel %vm1354, %v1345, %v1386
        %v1407 = vsel %vm1355, %v1349, %v1395
        %v1408 = vsel %vm1356, %v1351, %v1404
        %1409 = vst [vmem:[#allocation3] sm:$0xff] %v1405
        %1410 = vst [vmem:[#allocation3 + $0x8] sm:$0xff] %v1406
        %1411 = vst [vmem:[#allocation3 + $0x10] sm:$0xff] %v1407
        %1412 = vst [vmem:[#allocation3 + $0x18] sm:$0xff] %v1408
        %v1413 = vld [vmem:[%s7] sm:$0xff]
        %v1414 = vld [vmem:[%s7 + $0x8] sm:$0xff]
        %v1415 = vld [vmem:[%s7 + $0x10] sm:$0xff]
        %v1416 = vld [vmem:[%s7 + $0x18] sm:$0xff]
        %v1417 = vld [vmem:[#allocation18] sm:$0x3]
        %v1418 = vadd.s32 %v948, 8
        %v1419 = vadd.s32 %v948, 16
        %v1420 = vadd.s32 %v948, 24
        %v1421 = vlaneseq
        %v1422 = vand.u32 %v1421, 127
        %vm1423 = vcmp.eq.s32.totalorder %v948, %v1422
        %vm1424 = vcmp.eq.s32.totalorder %v1418, %v1422
        %vm1425 = vcmp.eq.s32.totalorder %v1419, %v1422
        %vm1426 = vcmp.eq.s32.totalorder %v1420, %v1422
        %v1427 = vsel %vm1423, 1, 0
        %v1428 = vsel %vm1424, 1, 0
        %v1429 = vsel %vm1425, 1, 0
        %v1430 = vsel %vm1426, 1, 0
        %v1431 = vcvt.s32.f32 %v1427
        %v1432 = vcvt.s32.f32 %v1428
        %v1433 = vcvt.s32.f32 %v1429
        %v1434 = vcvt.s32.f32 %v1430
        %s1435 = smul.u32 0, 2
        %s1436 = smul.addr %s1435, 8
        %s1437 = scalar_lea.vmem [#allocation3], %s1436
        %v1438 = vld [vmem:[%s1437] sm:$0xff]
        %v1439 = vld [vmem:[%s1437 + $0x8] sm:$0xff]
        %s1440 = smul.addr %s1435, 8
        %s1441 = scalar_lea.vmem [#allocation2], %s1440
        %v1442 = vld [vmem:[%s1441] sm:$0xff]
        %v1443 = vld [vmem:[%s1441 + $0x8] sm:$0xff]
        %s1444 = smul.addr %s1435, 8
        %s1445 = scalar_lea.vmem [#allocation4], %s1444
        %v1446 = vld [vmem:[%s1445] sm:$0xff]
        %v1447 = vld [vmem:[%s1445 + $0x8] sm:$0xff]
        %v1448 = vld [vmem:[#allocation5] sm:$0xff]
        %v1450 = vsel %vm1256, %v1431, 0
        %v1453 = vsel %vm1256, %v1432, 0
        %v1456 = vsel %vm1256, %v1433, 0
        %v1459 = vsel %vm1256, %v1434, 0
        %v1462 = vsel %vm1256, %v1448, 0
        %1464 = vmatprep.subr.mxu0 0.0
        %1465 = vmatpush1.xpose.msra.mxu0 0.0
        %1466 = vmatprep.subr.mxu0 0.0
        %1467 = vmatpush1.xpose.msra.mxu0 0.0
        %1468 = vmatprep.subr.mxu0 0.0
        %1469 = vmatpush1.xpose.msra.mxu0 0.0
        %1470 = vmatprep.subr.mxu0 0.0
        %1471 = vmatpush1.xpose.msra.mxu0 0.0
        %1472 = vmatprep.subr.mxu0 0.0
        %1473 = vmatpush1.xpose.msra.mxu0 0.0
        %1474 = vmatprep.subr.mxu0 0.0
        %1475 = vmatpush1.xpose.msra.mxu0 0.0
        %1476 = vmatprep.subr.mxu0 0.0
        %1477 = vmatpush1.xpose.msra.mxu0 0.0
        %1478 = vmatprep.subr.mxu0 0.0
        %1479 = vmatpush1.xpose.msra.mxu0 0.0
        %1480 = vmatprep.subr.mxu0 0.0
        %1481 = vmatpush1.xpose.msra.mxu0 0.0
        %1482 = vmatprep.subr.mxu0 0.0
        %1483 = vmatpush1.xpose.msra.mxu0 0.0
        %1484 = vmatprep.subr.mxu0 0.0
        %1485 = vmatpush1.xpose.msra.mxu0 0.0
        %1486 = vmatprep.subr.mxu0 0.0
        %1487 = vmatpush1.xpose.msra.mxu0 0.0
        %1488 = vmatprep.subr.mxu0 0.0
        %1489 = vmatpush1.xpose.msra.mxu0 0.0
        %1490 = vmatprep.subr.mxu0 0.0
        %1491 = vmatpush1.xpose.msra.mxu0 0.0
        %1492 = vmatprep.subr.mxu0 0.0
        %1493 = vmatpush1.xpose.msra.mxu0 0.0
        %1494 = vmatprep.subr.mxu0 0.0
        %1495 = vmatpush1.xpose.msra.mxu0 %v1462
        %1496 = vmatprep.subr.mxu0 0.0
        %1497 = vmatpush2.xpose.msra.mxu0 0.0
        %1498 = vmatprep.subr.mxu0 0.0
        %1499 = vmatpush2.xpose.msra.mxu0 0.0
        %1500 = vmatprep.subr.mxu0 0.0
        %1501 = vmatpush2.xpose.msra.mxu0 0.0
        %1502 = vmatprep.subr.mxu0 0.0
        %1503 = vmatpush2.xpose.msra.mxu0 0.0
        %1504 = vmatprep.subr.mxu0 0.0
        %1505 = vmatpush2.xpose.msra.mxu0 0.0
        %1506 = vmatprep.subr.mxu0 0.0
        %1507 = vmatpush2.xpose.msra.mxu0 0.0
        %1508 = vmatprep.subr.mxu0 0.0
        %1509 = vmatpush2.xpose.msra.mxu0 0.0
        %1510 = vmatprep.subr.mxu0 0.0
        %1511 = vmatpush2.xpose.msra.mxu0 0.0
        %1512 = vmatprep.subr.mxu0 0.0
        %1513 = vmatpush2.xpose.msra.mxu0 0.0
        %1514 = vmatprep.subr.mxu0 0.0
        %1515 = vmatpush2.xpose.msra.mxu0 0.0
        %1516 = vmatprep.subr.mxu0 0.0
        %1517 = vmatpush2.xpose.msra.mxu0 0.0
        %1518 = vmatprep.subr.mxu0 0.0
        %1519 = vmatpush2.xpose.msra.mxu0 0.0
        %1520 = vmatprep.subr.mxu0 0.0
        %1521 = vmatpush2.xpose.msra.mxu0 0.0
        %1522 = vmatprep.subr.mxu0 0.0
        %1523 = vmatpush2.xpose.msra.mxu0 0.0
        %1524 = vmatprep.subr.mxu0 0.0
        %1525 = vmatpush2.xpose.msra.mxu0 0.0
        %1526 = vmatprep.subr.mxu0 0.0
        %1527 = vmatpush2.xpose.msra.mxu0 0.0
        %1528 = vmatprep.mubr.f32.mxu0 0.0
        %1529 = vmatmul.mubr.f32.gmra.mxu0 %v1450
        %v1530 = vpop.f32.mrf.mxu0
        %v1531 = vadd.f32 0.0, %v1530
        %v1532 = vpop.f32.mrf.mxu0
        %1533 = vmatprep.mubr.f32.mxu0 0.0
        %1534 = vmatmul.mubr.f32.gmra.mxu0 %v1453
        %v1535 = vpop.f32.mrf.mxu0
        %v1536 = vadd.f32 0.0, %v1535
        %v1537 = vpop.f32.mrf.mxu0
        %1538 = vmatprep.mubr.f32.mxu0 0.0
        %1539 = vmatmul.mubr.f32.gmra.mxu0 %v1456
        %v1540 = vpop.f32.mrf.mxu0
        %v1541 = vadd.f32 0.0, %v1540
        %v1542 = vpop.f32.mrf.mxu0
        %1543 = vmatprep.mubr.f32.mxu0 0.0
        %1544 = vmatmul.mubr.f32.gmra.mxu0 %v1459
        %v1545 = vpop.f32.mrf.mxu0
        %v1546 = vadd.f32 0.0, %v1545
        %v1547 = vpop.f32.mrf.mxu0
        %1548 = vdwg.mxu0
        %v1549 = vld [vmem:[#allocation8] sm:$0xff]
        %v1550 = vld [vmem:[#allocation8 + $0x8] sm:$0xff]
        %v1551 = vld [vmem:[#allocation8 + $0x10] sm:$0xff]
        %v1552 = vld [vmem:[#allocation8 + $0x18] sm:$0xff]
        %v1553 = vlaneseq
        %v1554 = vshrl.u32 %v1553, 7
        %v1555 = vsub.s32 0, %v1554
        %v1556 = vrot.slane %v1438, %v1555
        %v1557 = vlaneseq
        %v1558 = vshrl.u32 %v1557, 7
        %v1559 = vsub.s32 0, %v1558
        %v1560 = vrot.slane %v1439, %v1559
        %v1561 = vmul.f32 %v1556, %v1413
        %v1562 = vmul.f32 %v1560, %v1414
        %v1563 = vmul.f32 %v1556, %v1415
        %v1564 = vmul.f32 %v1560, %v1416
        %v1565 = vmul.f32 %v1561, 1.442695
        %v1566 = vpow.pop %v1565
        %v1567 = vmul.f32 %v1562, 1.442695
        %v1568 = vpow.pop %v1567
        %v1569 = vmul.f32 %v1563, 1.442695
        %v1570 = vpow.pop %v1569
        %v1571 = vmul.f32 %v1564, 1.442695
        %v1572 = vpow.pop %v1571
        %v1573 = vmul.f32 %v1566, %v1549
        %v1574 = vmul.f32 %v1568, %v1550
        %v1575 = vmul.f32 %v1570, %v1551
        %v1576 = vmul.f32 %v1572, %v1552
        %v1577 = vmul.f32 %v1438, %v1442
        %v1578 = vmul.f32 %v1439, %v1443
        %v1579 = vlaneseq
        %v1580 = vshrl.u32 %v1579, 7
        %v1581 = vsub.s32 0, %v1580
        %v1582 = vrot.slane %v1577, %v1581
        %v1583 = vlaneseq
        %v1584 = vshrl.u32 %v1583, 7
        %v1585 = vsub.s32 0, %v1584
        %v1586 = vrot.slane %v1578, %v1585
        %1588 = vset.pattern.permute.xlu0 0
        %1589 = vperm.xlu0 %1588, %v1531
        %v1590 = vpop.permute.xlu0 %1589
        %1593 = vset.pattern.permute.xlu0 0
        %1594 = vperm.xlu0 %1593, %v1536
        %v1595 = vpop.permute.xlu0 %1594
        %v1597 = vmul.f32 %v1582, %v1590
        %v1598 = vmul.f32 %v1586, %v1590
        %v1599 = vmul.f32 %v1582, %v1595
        %v1600 = vmul.f32 %v1586, %v1595
        %v1601 = vadd.f32 %v1573, %v1597
        %v1602 = vadd.f32 %v1574, %v1598
        %v1603 = vadd.f32 %v1575, %v1599
        %v1604 = vadd.f32 %v1576, %v1600
        %1606 = vset.pattern.permute.xlu0 0
        %1607 = vperm.xlu0 %1606, %v1541
        %v1608 = vpop.permute.xlu0 %1607
        %1611 = vset.pattern.permute.xlu0 0
        %1612 = vperm.xlu0 %1611, %v1546
        %v1613 = vpop.permute.xlu0 %1612
        %v1615 = vmul.f32 %v1608, %v1601
        %v1616 = vmul.f32 %v1608, %v1602
        %v1617 = vmul.f32 %v1613, %v1603
        %v1618 = vmul.f32 %v1613, %v1604
        %v1619 = vadd.f32 %v1615, %v1617
        %v1620 = vrot.slane %v1619, 4
        %v1621 = vadd.f32 %v1619, %v1620
        %v1622 = vrot.slane %v1621, 2
        %v1623 = vadd.f32 %v1621, %v1622
        %v1624 = vrot.slane %v1623, 1
        %v1625 = vadd.f32 %v1623, %v1624
        %v1626 = vadd.f32 %v1616, %v1618
        %v1627 = vrot.slane %v1626, 4
        %v1628 = vadd.f32 %v1626, %v1627
        %v1629 = vrot.slane %v1628, 2
        %v1630 = vadd.f32 %v1628, %v1629
        %v1631 = vrot.slane %v1630, 1
        %v1632 = vadd.f32 %v1630, %v1631
        %v1634 = vlaneseq
        %v1635 = vshrl.u32 %v1634, 7
        %v1636 = vsub.s32 0, %v1635
        %v1637 = vrot.slane %v1417, %v1636
        %v1638 = vlaneseq
        %v1639 = vshrl.u32 %v1638, 7
        %v1640 = vsub.s32 1, %v1639
        %v1641 = vrot.slane %v1417, %v1640
        %v1644 = vmul.f32 %v1442, %v1637
        %v1645 = vmul.f32 %v1443, %v1641
        %v1646 = vadd.f32 %v1625, %v1644
        %v1647 = vadd.f32 %v1632, %v1645
        %v1648 = vmul.f32 %v1646, %v1446
        %v1649 = vmul.f32 %v1647, %v1447
        %v1650 = vlaneseq
        %v1651 = vshrl.u32 %v1650, 7
        %v1652 = vsub.s32 1, %v1651
        %v1653 = vrot.slane %v1438, %v1652
        %v1654 = vlaneseq
        %v1655 = vshrl.u32 %v1654, 7
        %v1656 = vsub.s32 1, %v1655
        %v1657 = vrot.slane %v1439, %v1656
        %v1658 = vmul.f32 %v1653, %v1413
        %v1659 = vmul.f32 %v1657, %v1414
        %v1660 = vmul.f32 %v1653, %v1415
        %v1661 = vmul.f32 %v1657, %v1416
        %v1662 = vmul.f32 %v1658, 1.442695
        %v1663 = vpow.pop %v1662
        %v1664 = vmul.f32 %v1659, 1.442695
        %v1665 = vpow.pop %v1664
        %v1666 = vmul.f32 %v1660, 1.442695
        %v1667 = vpow.pop %v1666
        %v1668 = vmul.f32 %v1661, 1.442695
        %v1669 = vpow.pop %v1668
        %v1670 = vmul.f32 %v1663, %v1601
        %v1671 = vmul.f32 %v1665, %v1602
        %v1672 = vmul.f32 %v1667, %v1603
        %v1673 = vmul.f32 %v1669, %v1604
        %v1674 = vlaneseq
        %v1675 = vshrl.u32 %v1674, 7
        %v1676 = vsub.s32 1, %v1675
        %v1677 = vrot.slane %v1577, %v1676
        %v1678 = vlaneseq
        %v1679 = vshrl.u32 %v1678, 7
        %v1680 = vsub.s32 1, %v1679
        %v1681 = vrot.slane %v1578, %v1680
        %1682 = vset.pattern.permute.xlu0 1
        %1683 = vperm.xlu0 %1682, %v1531
        %v1684 = vpop.permute.xlu0 %1683
        %1686 = vset.pattern.permute.xlu0 1
        %1687 = vperm.xlu0 %1686, %v1536
        %v1688 = vpop.permute.xlu0 %1687
        %v1690 = vmul.f32 %v1677, %v1684
        %v1691 = vmul.f32 %v1681, %v1684
        %v1692 = vmul.f32 %v1677, %v1688
        %v1693 = vmul.f32 %v1681, %v1688
        %v1694 = vadd.f32 %v1670, %v1690
        %v1695 = vadd.f32 %v1671, %v1691
        %v1696 = vadd.f32 %v1672, %v1692
        %v1697 = vadd.f32 %v1673, %v1693
        %1698 = vset.pattern.permute.xlu0 1
        %1699 = vperm.xlu0 %1698, %v1541
        %v1700 = vpop.permute.xlu0 %1699
        %1702 = vset.pattern.permute.xlu0 1
        %1703 = vperm.xlu0 %1702, %v1546
        %v1704 = vpop.permute.xlu0 %1703
        %v1706 = vmul.f32 %v1700, %v1694
        %v1707 = vmul.f32 %v1700, %v1695
        %v1708 = vmul.f32 %v1704, %v1696
        %v1709 = vmul.f32 %v1704, %v1697
        %v1710 = vadd.f32 %v1706, %v1708
        %v1711 = vrot.slane %v1710, 4
        %v1712 = vadd.f32 %v1710, %v1711
        %v1713 = vrot.slane %v1712, 2
        %v1714 = vadd.f32 %v1712, %v1713
        %v1715 = vrot.slane %v1714, 1
        %v1716 = vadd.f32 %v1714, %v1715
        %v1717 = vadd.f32 %v1707, %v1709
        %v1718 = vrot.slane %v1717, 4
        %v1719 = vadd.f32 %v1717, %v1718
        %v1720 = vrot.slane %v1719, 2
        %v1721 = vadd.f32 %v1719, %v1720
        %v1722 = vrot.slane %v1721, 1
        %v1723 = vadd.f32 %v1721, %v1722
        %v1724 = vadd.f32 %v1716, %v1644
        %v1725 = vadd.f32 %v1723, %v1645
        %v1726 = vmul.f32 %v1724, %v1446
        %v1727 = vmul.f32 %v1725, %v1447
        %v1728 = vlaneseq
        %v1729 = vshrl.u32 %v1728, 7
        %v1730 = vsub.s32 2, %v1729
        %v1731 = vrot.slane %v1438, %v1730
        %v1732 = vlaneseq
        %v1733 = vshrl.u32 %v1732, 7
        %v1734 = vsub.s32 2, %v1733
        %v1735 = vrot.slane %v1439, %v1734
        %v1736 = vmul.f32 %v1731, %v1413
        %v1737 = vmul.f32 %v1735, %v1414
        %v1738 = vmul.f32 %v1731, %v1415
        %v1739 = vmul.f32 %v1735, %v1416
        %v1740 = vmul.f32 %v1736, 1.442695
        %v1741 = vpow.pop %v1740
        %v1742 = vmul.f32 %v1737, 1.442695
        %v1743 = vpow.pop %v1742
        %v1744 = vmul.f32 %v1738, 1.442695
        %v1745 = vpow.pop %v1744
        %v1746 = vmul.f32 %v1739, 1.442695
        %v1747 = vpow.pop %v1746
        %v1748 = vmul.f32 %v1741, %v1694
        %v1749 = vmul.f32 %v1743, %v1695
        %v1750 = vmul.f32 %v1745, %v1696
        %v1751 = vmul.f32 %v1747, %v1697
        %v1752 = vlaneseq
        %v1753 = vshrl.u32 %v1752, 7
        %v1754 = vsub.s32 2, %v1753
        %v1755 = vrot.slane %v1577, %v1754
        %v1756 = vlaneseq
        %v1757 = vshrl.u32 %v1756, 7
        %v1758 = vsub.s32 2, %v1757
        %v1759 = vrot.slane %v1578, %v1758
        %1760 = vset.pattern.permute.xlu0 2
        %1761 = vperm.xlu0 %1760, %v1531
        %v1762 = vpop.permute.xlu0 %1761
        %1764 = vset.pattern.permute.xlu0 2
        %1765 = vperm.xlu0 %1764, %v1536
        %v1766 = vpop.permute.xlu0 %1765
        %v1768 = vmul.f32 %v1755, %v1762
        %v1769 = vmul.f32 %v1759, %v1762
        %v1770 = vmul.f32 %v1755, %v1766
        %v1771 = vmul.f32 %v1759, %v1766
        %v1772 = vadd.f32 %v1748, %v1768
        %v1773 = vadd.f32 %v1749, %v1769
        %v1774 = vadd.f32 %v1750, %v1770
        %v1775 = vadd.f32 %v1751, %v1771
        %1776 = vset.pattern.permute.xlu0 2
        %1777 = vperm.xlu0 %1776, %v1541
        %v1778 = vpop.permute.xlu0 %1777
        %1780 = vset.pattern.permute.xlu0 2
        %1781 = vperm.xlu0 %1780, %v1546
        %v1782 = vpop.permute.xlu0 %1781
        %v1784 = vmul.f32 %v1778, %v1772
        %v1785 = vmul.f32 %v1778, %v1773
        %v1786 = vmul.f32 %v1782, %v1774
        %v1787 = vmul.f32 %v1782, %v1775
        %v1788 = vadd.f32 %v1784, %v1786
        %v1789 = vrot.slane %v1788, 4
        %v1790 = vadd.f32 %v1788, %v1789
        %v1791 = vrot.slane %v1790, 2
        %v1792 = vadd.f32 %v1790, %v1791
        %v1793 = vrot.slane %v1792, 1
        %v1794 = vadd.f32 %v1792, %v1793
        %v1795 = vadd.f32 %v1785, %v1787
        %v1796 = vrot.slane %v1795, 4
        %v1797 = vadd.f32 %v1795, %v1796
        %v1798 = vrot.slane %v1797, 2
        %v1799 = vadd.f32 %v1797, %v1798
        %v1800 = vrot.slane %v1799, 1
        %v1801 = vadd.f32 %v1799, %v1800
        %v1802 = vadd.f32 %v1794, %v1644
        %v1803 = vadd.f32 %v1801, %v1645
        %v1804 = vmul.f32 %v1802, %v1446
        %v1805 = vmul.f32 %v1803, %v1447
        %v1806 = vlaneseq
        %v1807 = vshrl.u32 %v1806, 7
        %v1808 = vsub.s32 3, %v1807
        %v1809 = vrot.slane %v1438, %v1808
        %v1810 = vlaneseq
        %v1811 = vshrl.u32 %v1810, 7
        %v1812 = vsub.s32 3, %v1811
        %v1813 = vrot.slane %v1439, %v1812
        %v1814 = vmul.f32 %v1809, %v1413
        %v1815 = vmul.f32 %v1813, %v1414
        %v1816 = vmul.f32 %v1809, %v1415
        %v1817 = vmul.f32 %v1813, %v1416
        %v1818 = vmul.f32 %v1814, 1.442695
        %v1819 = vpow.pop %v1818
        %v1820 = vmul.f32 %v1815, 1.442695
        %v1821 = vpow.pop %v1820
        %v1822 = vmul.f32 %v1816, 1.442695
        %v1823 = vpow.pop %v1822
        %v1824 = vmul.f32 %v1817, 1.442695
        %v1825 = vpow.pop %v1824
        %v1826 = vmul.f32 %v1819, %v1772
        %v1827 = vmul.f32 %v1821, %v1773
        %v1828 = vmul.f32 %v1823, %v1774
        %v1829 = vmul.f32 %v1825, %v1775
        %v1830 = vlaneseq
        %v1831 = vshrl.u32 %v1830, 7
        %v1832 = vsub.s32 3, %v1831
        %v1833 = vrot.slane %v1577, %v1832
        %v1834 = vlaneseq
        %v1835 = vshrl.u32 %v1834, 7
        %v1836 = vsub.s32 3, %v1835
        %v1837 = vrot.slane %v1578, %v1836
        %1838 = vset.pattern.permute.xlu0 3
        %1839 = vperm.xlu0 %1838, %v1531
        %v1840 = vpop.permute.xlu0 %1839
        %1842 = vset.pattern.permute.xlu0 3
        %1843 = vperm.xlu0 %1842, %v1536
        %v1844 = vpop.permute.xlu0 %1843
        %v1846 = vmul.f32 %v1833, %v1840
        %v1847 = vmul.f32 %v1837, %v1840
        %v1848 = vmul.f32 %v1833, %v1844
        %v1849 = vmul.f32 %v1837, %v1844
        %v1850 = vadd.f32 %v1826, %v1846
        %v1851 = vadd.f32 %v1827, %v1847
        %v1852 = vadd.f32 %v1828, %v1848
        %v1853 = vadd.f32 %v1829, %v1849
        %1854 = vset.pattern.permute.xlu0 3
        %1855 = vperm.xlu0 %1854, %v1541
        %v1856 = vpop.permute.xlu0 %1855
        %1858 = vset.pattern.permute.xlu0 3
        %1859 = vperm.xlu0 %1858, %v1546
        %v1860 = vpop.permute.xlu0 %1859
        %v1862 = vmul.f32 %v1856, %v1850
        %v1863 = vmul.f32 %v1856, %v1851
        %v1864 = vmul.f32 %v1860, %v1852
        %v1865 = vmul.f32 %v1860, %v1853
        %v1866 = vadd.f32 %v1862, %v1864
        %v1867 = vrot.slane %v1866, 4
        %v1868 = vadd.f32 %v1866, %v1867
        %v1869 = vrot.slane %v1868, 2
        %v1870 = vadd.f32 %v1868, %v1869
        %v1871 = vrot.slane %v1870, 1
        %v1872 = vadd.f32 %v1870, %v1871
        %v1873 = vadd.f32 %v1863, %v1865
        %v1874 = vrot.slane %v1873, 4
        %v1875 = vadd.f32 %v1873, %v1874
        %v1876 = vrot.slane %v1875, 2
        %v1877 = vadd.f32 %v1875, %v1876
        %v1878 = vrot.slane %v1877, 1
        %v1879 = vadd.f32 %v1877, %v1878
        %v1880 = vadd.f32 %v1872, %v1644
        %v1881 = vadd.f32 %v1879, %v1645
        %v1882 = vmul.f32 %v1880, %v1446
        %v1883 = vmul.f32 %v1881, %v1447
        %v1884 = vlaneseq
        %v1885 = vshrl.u32 %v1884, 7
        %v1886 = vsub.s32 4, %v1885
        %v1887 = vrot.slane %v1438, %v1886
        %v1888 = vlaneseq
        %v1889 = vshrl.u32 %v1888, 7
        %v1890 = vsub.s32 4, %v1889
        %v1891 = vrot.slane %v1439, %v1890
        %v1892 = vmul.f32 %v1887, %v1413
        %v1893 = vmul.f32 %v1891, %v1414
        %v1894 = vmul.f32 %v1887, %v1415
        %v1895 = vmul.f32 %v1891, %v1416
        %v1896 = vmul.f32 %v1892, 1.442695
        %v1897 = vpow.pop %v1896
        %v1898 = vmul.f32 %v1893, 1.442695
        %v1899 = vpow.pop %v1898
        %v1900 = vmul.f32 %v1894, 1.442695
        %v1901 = vpow.pop %v1900
        %v1902 = vmul.f32 %v1895, 1.442695
        %v1903 = vpow.pop %v1902
        %v1904 = vmul.f32 %v1897, %v1850
        %v1905 = vmul.f32 %v1899, %v1851
        %v1906 = vmul.f32 %v1901, %v1852
        %v1907 = vmul.f32 %v1903, %v1853
        %v1908 = vlaneseq
        %v1909 = vshrl.u32 %v1908, 7
        %v1910 = vsub.s32 4, %v1909
        %v1911 = vrot.slane %v1577, %v1910
        %v1912 = vlaneseq
        %v1913 = vshrl.u32 %v1912, 7
        %v1914 = vsub.s32 4, %v1913
        %v1915 = vrot.slane %v1578, %v1914
        %1916 = vset.pattern.permute.xlu0 4
        %1917 = vperm.xlu0 %1916, %v1531
        %v1918 = vpop.permute.xlu0 %1917
        %1920 = vset.pattern.permute.xlu0 4
        %1921 = vperm.xlu0 %1920, %v1536
        %v1922 = vpop.permute.xlu0 %1921
        %v1924 = vmul.f32 %v1911, %v1918
        %v1925 = vmul.f32 %v1915, %v1918
        %v1926 = vmul.f32 %v1911, %v1922
        %v1927 = vmul.f32 %v1915, %v1922
        %v1928 = vadd.f32 %v1904, %v1924
        %v1929 = vadd.f32 %v1905, %v1925
        %v1930 = vadd.f32 %v1906, %v1926
        %v1931 = vadd.f32 %v1907, %v1927
        %1932 = vset.pattern.permute.xlu0 4
        %1933 = vperm.xlu0 %1932, %v1541
        %v1934 = vpop.permute.xlu0 %1933
        %1936 = vset.pattern.permute.xlu0 4
        %1937 = vperm.xlu0 %1936, %v1546
        %v1938 = vpop.permute.xlu0 %1937
        %v1940 = vmul.f32 %v1934, %v1928
        %v1941 = vmul.f32 %v1934, %v1929
        %v1942 = vmul.f32 %v1938, %v1930
        %v1943 = vmul.f32 %v1938, %v1931
        %v1944 = vadd.f32 %v1940, %v1942
        %v1945 = vrot.slane %v1944, 4
        %v1946 = vadd.f32 %v1944, %v1945
        %v1947 = vrot.slane %v1946, 2
        %v1948 = vadd.f32 %v1946, %v1947
        %v1949 = vrot.slane %v1948, 1
        %v1950 = vadd.f32 %v1948, %v1949
        %v1951 = vadd.f32 %v1941, %v1943
        %v1952 = vrot.slane %v1951, 4
        %v1953 = vadd.f32 %v1951, %v1952
        %v1954 = vrot.slane %v1953, 2
        %v1955 = vadd.f32 %v1953, %v1954
        %v1956 = vrot.slane %v1955, 1
        %v1957 = vadd.f32 %v1955, %v1956
        %v1958 = vadd.f32 %v1950, %v1644
        %v1959 = vadd.f32 %v1957, %v1645
        %v1960 = vmul.f32 %v1958, %v1446
        %v1961 = vmul.f32 %v1959, %v1447
        %v1962 = vlaneseq
        %v1963 = vshrl.u32 %v1962, 7
        %v1964 = vsub.s32 5, %v1963
        %v1965 = vrot.slane %v1438, %v1964
        %v1966 = vlaneseq
        %v1967 = vshrl.u32 %v1966, 7
        %v1968 = vsub.s32 5, %v1967
        %v1969 = vrot.slane %v1439, %v1968
        %v1970 = vmul.f32 %v1965, %v1413
        %v1971 = vmul.f32 %v1969, %v1414
        %v1972 = vmul.f32 %v1965, %v1415
        %v1973 = vmul.f32 %v1969, %v1416
        %v1974 = vmul.f32 %v1970, 1.442695
        %v1975 = vpow.pop %v1974
        %v1976 = vmul.f32 %v1971, 1.442695
        %v1977 = vpow.pop %v1976
        %v1978 = vmul.f32 %v1972, 1.442695
        %v1979 = vpow.pop %v1978
        %v1980 = vmul.f32 %v1973, 1.442695
        %v1981 = vpow.pop %v1980
        %v1982 = vmul.f32 %v1975, %v1928
        %v1983 = vmul.f32 %v1977, %v1929
        %v1984 = vmul.f32 %v1979, %v1930
        %v1985 = vmul.f32 %v1981, %v1931
        %v1986 = vlaneseq
        %v1987 = vshrl.u32 %v1986, 7
        %v1988 = vsub.s32 5, %v1987
        %v1989 = vrot.slane %v1577, %v1988
        %v1990 = vlaneseq
        %v1991 = vshrl.u32 %v1990, 7
        %v1992 = vsub.s32 5, %v1991
        %v1993 = vrot.slane %v1578, %v1992
        %1994 = vset.pattern.permute.xlu0 5
        %1995 = vperm.xlu0 %1994, %v1531
        %v1996 = vpop.permute.xlu0 %1995
        %1998 = vset.pattern.permute.xlu0 5
        %1999 = vperm.xlu0 %1998, %v1536
        %v2000 = vpop.permute.xlu0 %1999
        %v2002 = vmul.f32 %v1989, %v1996
        %v2003 = vmul.f32 %v1993, %v1996
        %v2004 = vmul.f32 %v1989, %v2000
        %v2005 = vmul.f32 %v1993, %v2000
        %v2006 = vadd.f32 %v1982, %v2002
        %v2007 = vadd.f32 %v1983, %v2003
        %v2008 = vadd.f32 %v1984, %v2004
        %v2009 = vadd.f32 %v1985, %v2005
        %2010 = vset.pattern.permute.xlu0 5
        %2011 = vperm.xlu0 %2010, %v1541
        %v2012 = vpop.permute.xlu0 %2011
        %2014 = vset.pattern.permute.xlu0 5
        %2015 = vperm.xlu0 %2014, %v1546
        %v2016 = vpop.permute.xlu0 %2015
        %v2018 = vmul.f32 %v2012, %v2006
        %v2019 = vmul.f32 %v2012, %v2007
        %v2020 = vmul.f32 %v2016, %v2008
        %v2021 = vmul.f32 %v2016, %v2009
        %v2022 = vadd.f32 %v2018, %v2020
        %v2023 = vrot.slane %v2022, 4
        %v2024 = vadd.f32 %v2022, %v2023
        %v2025 = vrot.slane %v2024, 2
        %v2026 = vadd.f32 %v2024, %v2025
        %v2027 = vrot.slane %v2026, 1
        %v2028 = vadd.f32 %v2026, %v2027
        %v2029 = vadd.f32 %v2019, %v2021
        %v2030 = vrot.slane %v2029, 4
        %v2031 = vadd.f32 %v2029, %v2030
        %v2032 = vrot.slane %v2031, 2
        %v2033 = vadd.f32 %v2031, %v2032
        %v2034 = vrot.slane %v2033, 1
        %v2035 = vadd.f32 %v2033, %v2034
        %v2036 = vadd.f32 %v2028, %v1644
        %v2037 = vadd.f32 %v2035, %v1645
        %v2038 = vmul.f32 %v2036, %v1446
        %v2039 = vmul.f32 %v2037, %v1447
        %v2040 = vlaneseq
        %v2041 = vshrl.u32 %v2040, 7
        %v2042 = vsub.s32 6, %v2041
        %v2043 = vrot.slane %v1438, %v2042
        %v2044 = vlaneseq
        %v2045 = vshrl.u32 %v2044, 7
        %v2046 = vsub.s32 6, %v2045
        %v2047 = vrot.slane %v1439, %v2046
        %v2048 = vmul.f32 %v2043, %v1413
        %v2049 = vmul.f32 %v2047, %v1414
        %v2050 = vmul.f32 %v2043, %v1415
        %v2051 = vmul.f32 %v2047, %v1416
        %v2052 = vmul.f32 %v2048, 1.442695
        %v2053 = vpow.pop %v2052
        %v2054 = vmul.f32 %v2049, 1.442695
        %v2055 = vpow.pop %v2054
        %v2056 = vmul.f32 %v2050, 1.442695
        %v2057 = vpow.pop %v2056
        %v2058 = vmul.f32 %v2051, 1.442695
        %v2059 = vpow.pop %v2058
        %v2060 = vmul.f32 %v2053, %v2006
        %v2061 = vmul.f32 %v2055, %v2007
        %v2062 = vmul.f32 %v2057, %v2008
        %v2063 = vmul.f32 %v2059, %v2009
        %v2064 = vlaneseq
        %v2065 = vshrl.u32 %v2064, 7
        %v2066 = vsub.s32 6, %v2065
        %v2067 = vrot.slane %v1577, %v2066
        %v2068 = vlaneseq
        %v2069 = vshrl.u32 %v2068, 7
        %v2070 = vsub.s32 6, %v2069
        %v2071 = vrot.slane %v1578, %v2070
        %2072 = vset.pattern.permute.xlu0 6
        %2073 = vperm.xlu0 %2072, %v1531
        %v2074 = vpop.permute.xlu0 %2073
        %2076 = vset.pattern.permute.xlu0 6
        %2077 = vperm.xlu0 %2076, %v1536
        %v2078 = vpop.permute.xlu0 %2077
        %v2080 = vmul.f32 %v2067, %v2074
        %v2081 = vmul.f32 %v2071, %v2074
        %v2082 = vmul.f32 %v2067, %v2078
        %v2083 = vmul.f32 %v2071, %v2078
        %v2084 = vadd.f32 %v2060, %v2080
        %v2085 = vadd.f32 %v2061, %v2081
        %v2086 = vadd.f32 %v2062, %v2082
        %v2087 = vadd.f32 %v2063, %v2083
        %2088 = vset.pattern.permute.xlu0 6
        %2089 = vperm.xlu0 %2088, %v1541
        %v2090 = vpop.permute.xlu0 %2089
        %2092 = vset.pattern.permute.xlu0 6
        %2093 = vperm.xlu0 %2092, %v1546
        %v2094 = vpop.permute.xlu0 %2093
        %v2096 = vmul.f32 %v2090, %v2084
        %v2097 = vmul.f32 %v2090, %v2085
        %v2098 = vmul.f32 %v2094, %v2086
        %v2099 = vmul.f32 %v2094, %v2087
        %v2100 = vadd.f32 %v2096, %v2098
        %v2101 = vrot.slane %v2100, 4
        %v2102 = vadd.f32 %v2100, %v2101
        %v2103 = vrot.slane %v2102, 2
        %v2104 = vadd.f32 %v2102, %v2103
        %v2105 = vrot.slane %v2104, 1
        %v2106 = vadd.f32 %v2104, %v2105
        %v2107 = vadd.f32 %v2097, %v2099
        %v2108 = vrot.slane %v2107, 4
        %v2109 = vadd.f32 %v2107, %v2108
        %v2110 = vrot.slane %v2109, 2
        %v2111 = vadd.f32 %v2109, %v2110
        %v2112 = vrot.slane %v2111, 1
        %v2113 = vadd.f32 %v2111, %v2112
        %v2114 = vadd.f32 %v2106, %v1644
        %v2115 = vadd.f32 %v2113, %v1645
        %v2116 = vmul.f32 %v2114, %v1446
        %v2117 = vmul.f32 %v2115, %v1447
        %v2118 = vlaneseq
        %v2119 = vshrl.u32 %v2118, 7
        %v2120 = vsub.s32 7, %v2119
        %v2121 = vrot.slane %v1438, %v2120
        %v2122 = vlaneseq
        %v2123 = vshrl.u32 %v2122, 7
        %v2124 = vsub.s32 7, %v2123
        %v2125 = vrot.slane %v1439, %v2124
        %v2126 = vmul.f32 %v2121, %v1413
        %v2127 = vmul.f32 %v2125, %v1414
        %v2128 = vmul.f32 %v2121, %v1415
        %v2129 = vmul.f32 %v2125, %v1416
        %v2130 = vmul.f32 %v2126, 1.442695
        %v2131 = vpow.pop %v2130
        %v2132 = vmul.f32 %v2127, 1.442695
        %v2133 = vpow.pop %v2132
        %v2134 = vmul.f32 %v2128, 1.442695
        %v2135 = vpow.pop %v2134
        %v2136 = vmul.f32 %v2129, 1.442695
        %v2137 = vpow.pop %v2136
        %v2138 = vmul.f32 %v2131, %v2084
        %v2139 = vmul.f32 %v2133, %v2085
        %v2140 = vmul.f32 %v2135, %v2086
        %v2141 = vmul.f32 %v2137, %v2087
        %v2142 = vlaneseq
        %v2143 = vshrl.u32 %v2142, 7
        %v2144 = vsub.s32 7, %v2143
        %v2145 = vrot.slane %v1577, %v2144
        %v2146 = vlaneseq
        %v2147 = vshrl.u32 %v2146, 7
        %v2148 = vsub.s32 7, %v2147
        %v2149 = vrot.slane %v1578, %v2148
        %2150 = vset.pattern.permute.xlu0 7
        %2151 = vperm.xlu0 %2150, %v1531
        %v2152 = vpop.permute.xlu0 %2151
        %2154 = vset.pattern.permute.xlu0 7
        %2155 = vperm.xlu0 %2154, %v1536
        %v2156 = vpop.permute.xlu0 %2155
        %v2158 = vmul.f32 %v2145, %v2152
        %v2159 = vmul.f32 %v2149, %v2152
        %v2160 = vmul.f32 %v2145, %v2156
        %v2161 = vmul.f32 %v2149, %v2156
        %v2162 = vadd.f32 %v2138, %v2158
        %v2163 = vadd.f32 %v2139, %v2159
        %v2164 = vadd.f32 %v2140, %v2160
        %v2165 = vadd.f32 %v2141, %v2161
        %2166 = vset.pattern.permute.xlu0 7
        %2167 = vperm.xlu0 %2166, %v1541
        %v2168 = vpop.permute.xlu0 %2167
        %2170 = vset.pattern.permute.xlu0 7
        %2171 = vperm.xlu0 %2170, %v1546
        %v2172 = vpop.permute.xlu0 %2171
        %v2174 = vmul.f32 %v2168, %v2162
        %v2175 = vmul.f32 %v2168, %v2163
        %v2176 = vmul.f32 %v2172, %v2164
        %v2177 = vmul.f32 %v2172, %v2165
        %v2178 = vadd.f32 %v2174, %v2176
        %v2179 = vrot.slane %v2178, 4
        %v2180 = vadd.f32 %v2178, %v2179
        %v2181 = vrot.slane %v2180, 2
        %v2182 = vadd.f32 %v2180, %v2181
        %v2183 = vrot.slane %v2182, 1
        %v2184 = vadd.f32 %v2182, %v2183
        %v2185 = vadd.f32 %v2175, %v2177
        %v2186 = vrot.slane %v2185, 4
        %v2187 = vadd.f32 %v2185, %v2186
        %v2188 = vrot.slane %v2187, 2
        %v2189 = vadd.f32 %v2187, %v2188
        %v2190 = vrot.slane %v2189, 1
        %v2191 = vadd.f32 %v2189, %v2190
        %v2192 = vadd.f32 %v2184, %v1644
        %v2193 = vadd.f32 %v2191, %v1645
        %v2194 = vmul.f32 %v2192, %v1446
        %v2195 = vmul.f32 %v2193, %v1447
        %2196 = vst [vmem:[#allocation8] sm:$0xff] %v2162
        %2197 = vst [vmem:[#allocation8 + $0x8] sm:$0xff] %v2163
        %2198 = vst [vmem:[#allocation8 + $0x10] sm:$0xff] %v2164
        %2199 = vst [vmem:[#allocation8 + $0x18] sm:$0xff] %v2165
        %vm2200 = vcmask 1040384
        %v2201 = vsel %vm2200, %v1648, %v1726
        %v2202 = vsel %vm2200, %v1649, %v1727
        %vm2203 = vcmask 1041408
        %v2204 = vsel %vm2203, %v2201, %v1804
        %v2205 = vsel %vm2203, %v2202, %v1805
        %vm2206 = vcmask 1042432
        %v2207 = vsel %vm2206, %v2204, %v1882
        %v2208 = vsel %vm2206, %v2205, %v1883
        %vm2209 = vcmask 1043456
        %v2210 = vsel %vm2209, %v2207, %v1960
        %v2211 = vsel %vm2209, %v2208, %v1961
        %vm2212 = vcmask 1044480
        %v2213 = vsel %vm2212, %v2210, %v2038
        %v2214 = vsel %vm2212, %v2211, %v2039
        %vm2215 = vcmask 1045504
        %v2216 = vsel %vm2215, %v2213, %v2116
        %v2217 = vsel %vm2215, %v2214, %v2117
        %vm2218 = vcmask 1046528
        %v2219 = vsel %vm2218, %v2216, %v2194
        %v2220 = vsel %vm2218, %v2217, %v2195
        %2221 = vst [vmem:[%s1441] sm:$0xff] %v2219
        %2222 = vst [vmem:[%s1441 + $0x8] sm:$0xff] %v2220
        %s2223 = smul.u32 1, 2
        %s2224 = smul.addr %s2223, 8
        %s2225 = scalar_lea.vmem [#allocation3], %s2224
        %v2226 = vld [vmem:[%s2225] sm:$0xff]
        %v2227 = vld [vmem:[%s2225 + $0x8] sm:$0xff]
        %s2228 = smul.addr %s2223, 8
        %s2229 = scalar_lea.vmem [#allocation2], %s2228
        %v2230 = vld [vmem:[%s2229] sm:$0xff]
        %v2231 = vld [vmem:[%s2229 + $0x8] sm:$0xff]
        %s2232 = smul.addr %s2223, 8
        %s2233 = scalar_lea.vmem [#allocation4], %s2232
        %v2234 = vld [vmem:[%s2233] sm:$0xff]
        %v2235 = vld [vmem:[%s2233 + $0x8] sm:$0xff]
        %s2236 = scalar_lea.vmem [#allocation5], 8
        %v2237 = vld [vmem:[%s2236] sm:$0xff]
        %v2239 = vsel %vm1256, %v2237, 0
        %2241 = vmatprep.subr.mxu0 0.0
        %2242 = vmatpush1.xpose.msra.mxu0 0.0
        %2243 = vmatprep.subr.mxu0 0.0
        %2244 = vmatpush1.xpose.msra.mxu0 0.0
        %2245 = vmatprep.subr.mxu0 0.0
        %2246 = vmatpush1.xpose.msra.mxu0 0.0
        %2247 = vmatprep.subr.mxu0 0.0
        %2248 = vmatpush1.xpose.msra.mxu0 0.0
        %2249 = vmatprep.subr.mxu0 0.0
        %2250 = vmatpush1.xpose.msra.mxu0 0.0
        %2251 = vmatprep.subr.mxu0 0.0
        %2252 = vmatpush1.xpose.msra.mxu0 0.0
        %2253 = vmatprep.subr.mxu0 0.0
        %2254 = vmatpush1.xpose.msra.mxu0 0.0
        %2255 = vmatprep.subr.mxu0 0.0
        %2256 = vmatpush1.xpose.msra.mxu0 0.0
        %2257 = vmatprep.subr.mxu0 0.0
        %2258 = vmatpush1.xpose.msra.mxu0 0.0
        %2259 = vmatprep.subr.mxu0 0.0
        %2260 = vmatpush1.xpose.msra.mxu0 0.0
        %2261 = vmatprep.subr.mxu0 0.0
        %2262 = vmatpush1.xpose.msra.mxu0 0.0
        %2263 = vmatprep.subr.mxu0 0.0
        %2264 = vmatpush1.xpose.msra.mxu0 0.0
        %2265 = vmatprep.subr.mxu0 0.0
        %2266 = vmatpush1.xpose.msra.mxu0 0.0
        %2267 = vmatprep.subr.mxu0 0.0
        %2268 = vmatpush1.xpose.msra.mxu0 0.0
        %2269 = vmatprep.subr.mxu0 0.0
        %2270 = vmatpush1.xpose.msra.mxu0 0.0
        %2271 = vmatprep.subr.mxu0 0.0
        %2272 = vmatpush1.xpose.msra.mxu0 %v2239
        %2273 = vmatprep.subr.mxu0 0.0
        %2274 = vmatpush2.xpose.msra.mxu0 0.0
        %2275 = vmatprep.subr.mxu0 0.0
        %2276 = vmatpush2.xpose.msra.mxu0 0.0
        %2277 = vmatprep.subr.mxu0 0.0
        %2278 = vmatpush2.xpose.msra.mxu0 0.0
        %2279 = vmatprep.subr.mxu0 0.0
        %2280 = vmatpush2.xpose.msra.mxu0 0.0
        %2281 = vmatprep.subr.mxu0 0.0
        %2282 = vmatpush2.xpose.msra.mxu0 0.0
        %2283 = vmatprep.subr.mxu0 0.0
        %2284 = vmatpush2.xpose.msra.mxu0 0.0
        %2285 = vmatprep.subr.mxu0 0.0
        %2286 = vmatpush2.xpose.msra.mxu0 0.0
        %2287 = vmatprep.subr.mxu0 0.0
        %2288 = vmatpush2.xpose.msra.mxu0 0.0
        %2289 = vmatprep.subr.mxu0 0.0
        %2290 = vmatpush2.xpose.msra.mxu0 0.0
        %2291 = vmatprep.subr.mxu0 0.0
        %2292 = vmatpush2.xpose.msra.mxu0 0.0
        %2293 = vmatprep.subr.mxu0 0.0
        %2294 = vmatpush2.xpose.msra.mxu0 0.0
        %2295 = vmatprep.subr.mxu0 0.0
        %2296 = vmatpush2.xpose.msra.mxu0 0.0
        %2297 = vmatprep.subr.mxu0 0.0
        %2298 = vmatpush2.xpose.msra.mxu0 0.0
        %2299 = vmatprep.subr.mxu0 0.0
        %2300 = vmatpush2.xpose.msra.mxu0 0.0
        %2301 = vmatprep.subr.mxu0 0.0
        %2302 = vmatpush2.xpose.msra.mxu0 0.0
        %2303 = vmatprep.subr.mxu0 0.0
        %2304 = vmatpush2.xpose.msra.mxu0 0.0
        %2305 = vmatprep.mubr.f32.mxu0 0.0
        %2306 = vmatmul.mubr.f32.gmra.mxu0 %v1450
        %v2307 = vpop.f32.mrf.mxu0
        %v2308 = vadd.f32 0.0, %v2307
        %v2309 = vpop.f32.mrf.mxu0
        %2310 = vmatprep.mubr.f32.mxu0 0.0
        %2311 = vmatmul.mubr.f32.gmra.mxu0 %v1453
        %v2312 = vpop.f32.mrf.mxu0
        %v2313 = vadd.f32 0.0, %v2312
        %v2314 = vpop.f32.mrf.mxu0
        %2315 = vmatprep.mubr.f32.mxu0 0.0
        %2316 = vmatmul.mubr.f32.gmra.mxu0 %v1456
        %v2317 = vpop.f32.mrf.mxu0
        %v2318 = vadd.f32 0.0, %v2317
        %v2319 = vpop.f32.mrf.mxu0
        %2320 = vmatprep.mubr.f32.mxu0 0.0
        %2321 = vmatmul.mubr.f32.gmra.mxu0 %v1459
        %v2322 = vpop.f32.mrf.mxu0
        %v2323 = vadd.f32 0.0, %v2322
        %v2324 = vpop.f32.mrf.mxu0
        %2325 = vdwg.mxu0
        %v2326 = vld [vmem:[#allocation8] sm:$0xff]
        %v2327 = vld [vmem:[#allocation8 + $0x8] sm:$0xff]
        %v2328 = vld [vmem:[#allocation8 + $0x10] sm:$0xff]
        %v2329 = vld [vmem:[#allocation8 + $0x18] sm:$0xff]
        %v2330 = vlaneseq
        %v2331 = vshrl.u32 %v2330, 7
        %v2332 = vsub.s32 0, %v2331
        %v2333 = vrot.slane %v2226, %v2332
        %v2334 = vlaneseq
        %v2335 = vshrl.u32 %v2334, 7
        %v2336 = vsub.s32 0, %v2335
        %v2337 = vrot.slane %v2227, %v2336
        %v2338 = vmul.f32 %v2333, %v1413
        %v2339 = vmul.f32 %v2337, %v1414
        %v2340 = vmul.f32 %v2333, %v1415
        %v2341 = vmul.f32 %v2337, %v1416
        %v2342 = vmul.f32 %v2338, 1.442695
        %v2343 = vpow.pop %v2342
        %v2344 = vmul.f32 %v2339, 1.442695
        %v2345 = vpow.pop %v2344
        %v2346 = vmul.f32 %v2340, 1.442695
        %v2347 = vpow.pop %v2346
        %v2348 = vmul.f32 %v2341, 1.442695
        %v2349 = vpow.pop %v2348
        %v2350 = vmul.f32 %v2343, %v2326
        %v2351 = vmul.f32 %v2345, %v2327
        %v2352 = vmul.f32 %v2347, %v2328
        %v2353 = vmul.f32 %v2349, %v2329
        %v2354 = vmul.f32 %v2226, %v2230
        %v2355 = vmul.f32 %v2227, %v2231
        %v2356 = vlaneseq
        %v2357 = vshrl.u32 %v2356, 7
        %v2358 = vsub.s32 0, %v2357
        %v2359 = vrot.slane %v2354, %v2358
        %v2360 = vlaneseq
        %v2361 = vshrl.u32 %v2360, 7
        %v2362 = vsub.s32 0, %v2361
        %v2363 = vrot.slane %v2355, %v2362
        %2365 = vset.pattern.permute.xlu0 0
        %2366 = vperm.xlu0 %2365, %v2308
        %v2367 = vpop.permute.xlu0 %2366
        %2370 = vset.pattern.permute.xlu0 0
        %2371 = vperm.xlu0 %2370, %v2313
        %v2372 = vpop.permute.xlu0 %2371
        %v2374 = vmul.f32 %v2359, %v2367
        %v2375 = vmul.f32 %v2363, %v2367
        %v2376 = vmul.f32 %v2359, %v2372
        %v2377 = vmul.f32 %v2363, %v2372
        %v2378 = vadd.f32 %v2350, %v2374
        %v2379 = vadd.f32 %v2351, %v2375
        %v2380 = vadd.f32 %v2352, %v2376
        %v2381 = vadd.f32 %v2353, %v2377
        %2383 = vset.pattern.permute.xlu0 0
        %2384 = vperm.xlu0 %2383, %v2318
        %v2385 = vpop.permute.xlu0 %2384
        %2388 = vset.pattern.permute.xlu0 0
        %2389 = vperm.xlu0 %2388, %v2323
        %v2390 = vpop.permute.xlu0 %2389
        %v2392 = vmul.f32 %v2385, %v2378
        %v2393 = vmul.f32 %v2385, %v2379
        %v2394 = vmul.f32 %v2390, %v2380
        %v2395 = vmul.f32 %v2390, %v2381
        %v2396 = vadd.f32 %v2392, %v2394
        %v2397 = vrot.slane %v2396, 4
        %v2398 = vadd.f32 %v2396, %v2397
        %v2399 = vrot.slane %v2398, 2
        %v2400 = vadd.f32 %v2398, %v2399
        %v2401 = vrot.slane %v2400, 1
        %v2402 = vadd.f32 %v2400, %v2401
        %v2403 = vadd.f32 %v2393, %v2395
        %v2404 = vrot.slane %v2403, 4
        %v2405 = vadd.f32 %v2403, %v2404
        %v2406 = vrot.slane %v2405, 2
        %v2407 = vadd.f32 %v2405, %v2406
        %v2408 = vrot.slane %v2407, 1
        %v2409 = vadd.f32 %v2407, %v2408
        %v2410 = vmul.f32 %v2230, %v1637
        %v2411 = vmul.f32 %v2231, %v1641
        %v2412 = vadd.f32 %v2402, %v2410
        %v2413 = vadd.f32 %v2409, %v2411
        %v2414 = vmul.f32 %v2412, %v2234
        %v2415 = vmul.f32 %v2413, %v2235
        %v2416 = vlaneseq
        %v2417 = vshrl.u32 %v2416, 7
        %v2418 = vsub.s32 1, %v2417
        %v2419 = vrot.slane %v2226, %v2418
        %v2420 = vlaneseq
        %v2421 = vshrl.u32 %v2420, 7
        %v2422 = vsub.s32 1, %v2421
        %v2423 = vrot.slane %v2227, %v2422
        %v2424 = vmul.f32 %v2419, %v1413
        %v2425 = vmul.f32 %v2423, %v1414
        %v2426 = vmul.f32 %v2419, %v1415
        %v2427 = vmul.f32 %v2423, %v1416
        %v2428 = vmul.f32 %v2424, 1.442695
        %v2429 = vpow.pop %v2428
        %v2430 = vmul.f32 %v2425, 1.442695
        %v2431 = vpow.pop %v2430
        %v2432 = vmul.f32 %v2426, 1.442695
        %v2433 = vpow.pop %v2432
        %v2434 = vmul.f32 %v2427, 1.442695
        %v2435 = vpow.pop %v2434
        %v2436 = vmul.f32 %v2429, %v2378
        %v2437 = vmul.f32 %v2431, %v2379
        %v2438 = vmul.f32 %v2433, %v2380
        %v2439 = vmul.f32 %v2435, %v2381
        %v2440 = vlaneseq
        %v2441 = vshrl.u32 %v2440, 7
        %v2442 = vsub.s32 1, %v2441
        %v2443 = vrot.slane %v2354, %v2442
        %v2444 = vlaneseq
        %v2445 = vshrl.u32 %v2444, 7
        %v2446 = vsub.s32 1, %v2445
        %v2447 = vrot.slane %v2355, %v2446
        %2448 = vset.pattern.permute.xlu0 1
        %2449 = vperm.xlu0 %2448, %v2308
        %v2450 = vpop.permute.xlu0 %2449
        %2452 = vset.pattern.permute.xlu0 1
        %2453 = vperm.xlu0 %2452, %v2313
        %v2454 = vpop.permute.xlu0 %2453
        %v2456 = vmul.f32 %v2443, %v2450
        %v2457 = vmul.f32 %v2447, %v2450
        %v2458 = vmul.f32 %v2443, %v2454
        %v2459 = vmul.f32 %v2447, %v2454
        %v2460 = vadd.f32 %v2436, %v2456
        %v2461 = vadd.f32 %v2437, %v2457
        %v2462 = vadd.f32 %v2438, %v2458
        %v2463 = vadd.f32 %v2439, %v2459
        %2464 = vset.pattern.permute.xlu0 1
        %2465 = vperm.xlu0 %2464, %v2318
        %v2466 = vpop.permute.xlu0 %2465
        %2468 = vset.pattern.permute.xlu0 1
        %2469 = vperm.xlu0 %2468, %v2323
        %v2470 = vpop.permute.xlu0 %2469
        %v2472 = vmul.f32 %v2466, %v2460
        %v2473 = vmul.f32 %v2466, %v2461
        %v2474 = vmul.f32 %v2470, %v2462
        %v2475 = vmul.f32 %v2470, %v2463
        %v2476 = vadd.f32 %v2472, %v2474
        %v2477 = vrot.slane %v2476, 4
        %v2478 = vadd.f32 %v2476, %v2477
        %v2479 = vrot.slane %v2478, 2
        %v2480 = vadd.f32 %v2478, %v2479
        %v2481 = vrot.slane %v2480, 1
        %v2482 = vadd.f32 %v2480, %v2481
        %v2483 = vadd.f32 %v2473, %v2475
        %v2484 = vrot.slane %v2483, 4
        %v2485 = vadd.f32 %v2483, %v2484
        %v2486 = vrot.slane %v2485, 2
        %v2487 = vadd.f32 %v2485, %v2486
        %v2488 = vrot.slane %v2487, 1
        %v2489 = vadd.f32 %v2487, %v2488
        %v2490 = vadd.f32 %v2482, %v2410
        %v2491 = vadd.f32 %v2489, %v2411
        %v2492 = vmul.f32 %v2490, %v2234
        %v2493 = vmul.f32 %v2491, %v2235
        %v2494 = vlaneseq
        %v2495 = vshrl.u32 %v2494, 7
        %v2496 = vsub.s32 2, %v2495
        %v2497 = vrot.slane %v2226, %v2496
        %v2498 = vlaneseq
        %v2499 = vshrl.u32 %v2498, 7
        %v2500 = vsub.s32 2, %v2499
        %v2501 = vrot.slane %v2227, %v2500
        %v2502 = vmul.f32 %v2497, %v1413
        %v2503 = vmul.f32 %v2501, %v1414
        %v2504 = vmul.f32 %v2497, %v1415
        %v2505 = vmul.f32 %v2501, %v1416
        %v2506 = vmul.f32 %v2502, 1.442695
        %v2507 = vpow.pop %v2506
        %v2508 = vmul.f32 %v2503, 1.442695
        %v2509 = vpow.pop %v2508
        %v2510 = vmul.f32 %v2504, 1.442695
        %v2511 = vpow.pop %v2510
        %v2512 = vmul.f32 %v2505, 1.442695
        %v2513 = vpow.pop %v2512
        %v2514 = vmul.f32 %v2507, %v2460
        %v2515 = vmul.f32 %v2509, %v2461
        %v2516 = vmul.f32 %v2511, %v2462
        %v2517 = vmul.f32 %v2513, %v2463
        %v2518 = vlaneseq
        %v2519 = vshrl.u32 %v2518, 7
        %v2520 = vsub.s32 2, %v2519
        %v2521 = vrot.slane %v2354, %v2520
        %v2522 = vlaneseq
        %v2523 = vshrl.u32 %v2522, 7
        %v2524 = vsub.s32 2, %v2523
        %v2525 = vrot.slane %v2355, %v2524
        %2526 = vset.pattern.permute.xlu0 2
        %2527 = vperm.xlu0 %2526, %v2308
        %v2528 = vpop.permute.xlu0 %2527
        %2530 = vset.pattern.permute.xlu0 2
        %2531 = vperm.xlu0 %2530, %v2313
        %v2532 = vpop.permute.xlu0 %2531
        %v2534 = vmul.f32 %v2521, %v2528
        %v2535 = vmul.f32 %v2525, %v2528
        %v2536 = vmul.f32 %v2521, %v2532
        %v2537 = vmul.f32 %v2525, %v2532
        %v2538 = vadd.f32 %v2514, %v2534
        %v2539 = vadd.f32 %v2515, %v2535
        %v2540 = vadd.f32 %v2516, %v2536
        %v2541 = vadd.f32 %v2517, %v2537
        %2542 = vset.pattern.permute.xlu0 2
        %2543 = vperm.xlu0 %2542, %v2318
        %v2544 = vpop.permute.xlu0 %2543
        %2546 = vset.pattern.permute.xlu0 2
        %2547 = vperm.xlu0 %2546, %v2323
        %v2548 = vpop.permute.xlu0 %2547
        %v2550 = vmul.f32 %v2544, %v2538
        %v2551 = vmul.f32 %v2544, %v2539
        %v2552 = vmul.f32 %v2548, %v2540
        %v2553 = vmul.f32 %v2548, %v2541
        %v2554 = vadd.f32 %v2550, %v2552
        %v2555 = vrot.slane %v2554, 4
        %v2556 = vadd.f32 %v2554, %v2555
        %v2557 = vrot.slane %v2556, 2
        %v2558 = vadd.f32 %v2556, %v2557
        %v2559 = vrot.slane %v2558, 1
        %v2560 = vadd.f32 %v2558, %v2559
        %v2561 = vadd.f32 %v2551, %v2553
        %v2562 = vrot.slane %v2561, 4
        %v2563 = vadd.f32 %v2561, %v2562
        %v2564 = vrot.slane %v2563, 2
        %v2565 = vadd.f32 %v2563, %v2564
        %v2566 = vrot.slane %v2565, 1
        %v2567 = vadd.f32 %v2565, %v2566
        %v2568 = vadd.f32 %v2560, %v2410
        %v2569 = vadd.f32 %v2567, %v2411
        %v2570 = vmul.f32 %v2568, %v2234
        %v2571 = vmul.f32 %v2569, %v2235
        %v2572 = vlaneseq
        %v2573 = vshrl.u32 %v2572, 7
        %v2574 = vsub.s32 3, %v2573
        %v2575 = vrot.slane %v2226, %v2574
        %v2576 = vlaneseq
        %v2577 = vshrl.u32 %v2576, 7
        %v2578 = vsub.s32 3, %v2577
        %v2579 = vrot.slane %v2227, %v2578
        %v2580 = vmul.f32 %v2575, %v1413
        %v2581 = vmul.f32 %v2579, %v1414
        %v2582 = vmul.f32 %v2575, %v1415
        %v2583 = vmul.f32 %v2579, %v1416
        %v2584 = vmul.f32 %v2580, 1.442695
        %v2585 = vpow.pop %v2584
        %v2586 = vmul.f32 %v2581, 1.442695
        %v2587 = vpow.pop %v2586
        %v2588 = vmul.f32 %v2582, 1.442695
        %v2589 = vpow.pop %v2588
        %v2590 = vmul.f32 %v2583, 1.442695
        %v2591 = vpow.pop %v2590
        %v2592 = vmul.f32 %v2585, %v2538
        %v2593 = vmul.f32 %v2587, %v2539
        %v2594 = vmul.f32 %v2589, %v2540
        %v2595 = vmul.f32 %v2591, %v2541
        %v2596 = vlaneseq
        %v2597 = vshrl.u32 %v2596, 7
        %v2598 = vsub.s32 3, %v2597
        %v2599 = vrot.slane %v2354, %v2598
        %v2600 = vlaneseq
        %v2601 = vshrl.u32 %v2600, 7
        %v2602 = vsub.s32 3, %v2601
        %v2603 = vrot.slane %v2355, %v2602
        %2604 = vset.pattern.permute.xlu0 3
        %2605 = vperm.xlu0 %2604, %v2308
        %v2606 = vpop.permute.xlu0 %2605
        %2608 = vset.pattern.permute.xlu0 3
        %2609 = vperm.xlu0 %2608, %v2313
        %v2610 = vpop.permute.xlu0 %2609
        %v2612 = vmul.f32 %v2599, %v2606
        %v2613 = vmul.f32 %v2603, %v2606
        %v2614 = vmul.f32 %v2599, %v2610
        %v2615 = vmul.f32 %v2603, %v2610
        %v2616 = vadd.f32 %v2592, %v2612
        %v2617 = vadd.f32 %v2593, %v2613
        %v2618 = vadd.f32 %v2594, %v2614
        %v2619 = vadd.f32 %v2595, %v2615
        %2620 = vset.pattern.permute.xlu0 3
        %2621 = vperm.xlu0 %2620, %v2318
        %v2622 = vpop.permute.xlu0 %2621
        %2624 = vset.pattern.permute.xlu0 3
        %2625 = vperm.xlu0 %2624, %v2323
        %v2626 = vpop.permute.xlu0 %2625
        %v2628 = vmul.f32 %v2622, %v2616
        %v2629 = vmul.f32 %v2622, %v2617
        %v2630 = vmul.f32 %v2626, %v2618
        %v2631 = vmul.f32 %v2626, %v2619
        %v2632 = vadd.f32 %v2628, %v2630
        %v2633 = vrot.slane %v2632, 4
        %v2634 = vadd.f32 %v2632, %v2633
        %v2635 = vrot.slane %v2634, 2
        %v2636 = vadd.f32 %v2634, %v2635
        %v2637 = vrot.slane %v2636, 1
        %v2638 = vadd.f32 %v2636, %v2637
        %v2639 = vadd.f32 %v2629, %v2631
        %v2640 = vrot.slane %v2639, 4
        %v2641 = vadd.f32 %v2639, %v2640
        %v2642 = vrot.slane %v2641, 2
        %v2643 = vadd.f32 %v2641, %v2642
        %v2644 = vrot.slane %v2643, 1
        %v2645 = vadd.f32 %v2643, %v2644
        %v2646 = vadd.f32 %v2638, %v2410
        %v2647 = vadd.f32 %v2645, %v2411
        %v2648 = vmul.f32 %v2646, %v2234
        %v2649 = vmul.f32 %v2647, %v2235
        %v2650 = vlaneseq
        %v2651 = vshrl.u32 %v2650, 7
        %v2652 = vsub.s32 4, %v2651
        %v2653 = vrot.slane %v2226, %v2652
        %v2654 = vlaneseq
        %v2655 = vshrl.u32 %v2654, 7
        %v2656 = vsub.s32 4, %v2655
        %v2657 = vrot.slane %v2227, %v2656
        %v2658 = vmul.f32 %v2653, %v1413
        %v2659 = vmul.f32 %v2657, %v1414
        %v2660 = vmul.f32 %v2653, %v1415
        %v2661 = vmul.f32 %v2657, %v1416
        %v2662 = vmul.f32 %v2658, 1.442695
        %v2663 = vpow.pop %v2662
        %v2664 = vmul.f32 %v2659, 1.442695
        %v2665 = vpow.pop %v2664
        %v2666 = vmul.f32 %v2660, 1.442695
        %v2667 = vpow.pop %v2666
        %v2668 = vmul.f32 %v2661, 1.442695
        %v2669 = vpow.pop %v2668
        %v2670 = vmul.f32 %v2663, %v2616
        %v2671 = vmul.f32 %v2665, %v2617
        %v2672 = vmul.f32 %v2667, %v2618
        %v2673 = vmul.f32 %v2669, %v2619
        %v2674 = vlaneseq
        %v2675 = vshrl.u32 %v2674, 7
        %v2676 = vsub.s32 4, %v2675
        %v2677 = vrot.slane %v2354, %v2676
        %v2678 = vlaneseq
        %v2679 = vshrl.u32 %v2678, 7
        %v2680 = vsub.s32 4, %v2679
        %v2681 = vrot.slane %v2355, %v2680
        %2682 = vset.pattern.permute.xlu0 4
        %2683 = vperm.xlu0 %2682, %v2308
        %v2684 = vpop.permute.xlu0 %2683
        %2686 = vset.pattern.permute.xlu0 4
        %2687 = vperm.xlu0 %2686, %v2313
        %v2688 = vpop.permute.xlu0 %2687
        %v2690 = vmul.f32 %v2677, %v2684
        %v2691 = vmul.f32 %v2681, %v2684
        %v2692 = vmul.f32 %v2677, %v2688
        %v2693 = vmul.f32 %v2681, %v2688
        %v2694 = vadd.f32 %v2670, %v2690
        %v2695 = vadd.f32 %v2671, %v2691
        %v2696 = vadd.f32 %v2672, %v2692
        %v2697 = vadd.f32 %v2673, %v2693
        %2698 = vset.pattern.permute.xlu0 4
        %2699 = vperm.xlu0 %2698, %v2318
        %v2700 = vpop.permute.xlu0 %2699
        %2702 = vset.pattern.permute.xlu0 4
        %2703 = vperm.xlu0 %2702, %v2323
        %v2704 = vpop.permute.xlu0 %2703
        %v2706 = vmul.f32 %v2700, %v2694
        %v2707 = vmul.f32 %v2700, %v2695
        %v2708 = vmul.f32 %v2704, %v2696
        %v2709 = vmul.f32 %v2704, %v2697
        %v2710 = vadd.f32 %v2706, %v2708
        %v2711 = vrot.slane %v2710, 4
        %v2712 = vadd.f32 %v2710, %v2711
        %v2713 = vrot.slane %v2712, 2
        %v2714 = vadd.f32 %v2712, %v2713
        %v2715 = vrot.slane %v2714, 1
        %v2716 = vadd.f32 %v2714, %v2715
        %v2717 = vadd.f32 %v2707, %v2709
        %v2718 = vrot.slane %v2717, 4
        %v2719 = vadd.f32 %v2717, %v2718
        %v2720 = vrot.slane %v2719, 2
        %v2721 = vadd.f32 %v2719, %v2720
        %v2722 = vrot.slane %v2721, 1
        %v2723 = vadd.f32 %v2721, %v2722
        %v2724 = vadd.f32 %v2716, %v2410
        %v2725 = vadd.f32 %v2723, %v2411
        %v2726 = vmul.f32 %v2724, %v2234
        %v2727 = vmul.f32 %v2725, %v2235
        %v2728 = vlaneseq
        %v2729 = vshrl.u32 %v2728, 7
        %v2730 = vsub.s32 5, %v2729
        %v2731 = vrot.slane %v2226, %v2730
        %v2732 = vlaneseq
        %v2733 = vshrl.u32 %v2732, 7
        %v2734 = vsub.s32 5, %v2733
        %v2735 = vrot.slane %v2227, %v2734
        %v2736 = vmul.f32 %v2731, %v1413
        %v2737 = vmul.f32 %v2735, %v1414
        %v2738 = vmul.f32 %v2731, %v1415
        %v2739 = vmul.f32 %v2735, %v1416
        %v2740 = vmul.f32 %v2736, 1.442695
        %v2741 = vpow.pop %v2740
        %v2742 = vmul.f32 %v2737, 1.442695
        %v2743 = vpow.pop %v2742
        %v2744 = vmul.f32 %v2738, 1.442695
        %v2745 = vpow.pop %v2744
        %v2746 = vmul.f32 %v2739, 1.442695
        %v2747 = vpow.pop %v2746
        %v2748 = vmul.f32 %v2741, %v2694
        %v2749 = vmul.f32 %v2743, %v2695
        %v2750 = vmul.f32 %v2745, %v2696
        %v2751 = vmul.f32 %v2747, %v2697
        %v2752 = vlaneseq
        %v2753 = vshrl.u32 %v2752, 7
        %v2754 = vsub.s32 5, %v2753
        %v2755 = vrot.slane %v2354, %v2754
        %v2756 = vlaneseq
        %v2757 = vshrl.u32 %v2756, 7
        %v2758 = vsub.s32 5, %v2757
        %v2759 = vrot.slane %v2355, %v2758
        %2760 = vset.pattern.permute.xlu0 5
        %2761 = vperm.xlu0 %2760, %v2308
        %v2762 = vpop.permute.xlu0 %2761
        %2764 = vset.pattern.permute.xlu0 5
        %2765 = vperm.xlu0 %2764, %v2313
        %v2766 = vpop.permute.xlu0 %2765
        %v2768 = vmul.f32 %v2755, %v2762
        %v2769 = vmul.f32 %v2759, %v2762
        %v2770 = vmul.f32 %v2755, %v2766
        %v2771 = vmul.f32 %v2759, %v2766
        %v2772 = vadd.f32 %v2748, %v2768
        %v2773 = vadd.f32 %v2749, %v2769
        %v2774 = vadd.f32 %v2750, %v2770
        %v2775 = vadd.f32 %v2751, %v2771
        %2776 = vset.pattern.permute.xlu0 5
        %2777 = vperm.xlu0 %2776, %v2318
        %v2778 = vpop.permute.xlu0 %2777
        %2780 = vset.pattern.permute.xlu0 5
        %2781 = vperm.xlu0 %2780, %v2323
        %v2782 = vpop.permute.xlu0 %2781
        %v2784 = vmul.f32 %v2778, %v2772
        %v2785 = vmul.f32 %v2778, %v2773
        %v2786 = vmul.f32 %v2782, %v2774
        %v2787 = vmul.f32 %v2782, %v2775
        %v2788 = vadd.f32 %v2784, %v2786
        %v2789 = vrot.slane %v2788, 4
        %v2790 = vadd.f32 %v2788, %v2789
        %v2791 = vrot.slane %v2790, 2
        %v2792 = vadd.f32 %v2790, %v2791
        %v2793 = vrot.slane %v2792, 1
        %v2794 = vadd.f32 %v2792, %v2793
        %v2795 = vadd.f32 %v2785, %v2787
        %v2796 = vrot.slane %v2795, 4
        %v2797 = vadd.f32 %v2795, %v2796
        %v2798 = vrot.slane %v2797, 2
        %v2799 = vadd.f32 %v2797, %v2798
        %v2800 = vrot.slane %v2799, 1
        %v2801 = vadd.f32 %v2799, %v2800
        %v2802 = vadd.f32 %v2794, %v2410
        %v2803 = vadd.f32 %v2801, %v2411
        %v2804 = vmul.f32 %v2802, %v2234
        %v2805 = vmul.f32 %v2803, %v2235
        %v2806 = vlaneseq
        %v2807 = vshrl.u32 %v2806, 7
        %v2808 = vsub.s32 6, %v2807
        %v2809 = vrot.slane %v2226, %v2808
        %v2810 = vlaneseq
        %v2811 = vshrl.u32 %v2810, 7
        %v2812 = vsub.s32 6, %v2811
        %v2813 = vrot.slane %v2227, %v2812
        %v2814 = vmul.f32 %v2809, %v1413
        %v2815 = vmul.f32 %v2813, %v1414
        %v2816 = vmul.f32 %v2809, %v1415
        %v2817 = vmul.f32 %v2813, %v1416
        %v2818 = vmul.f32 %v2814, 1.442695
        %v2819 = vpow.pop %v2818
        %v2820 = vmul.f32 %v2815, 1.442695
        %v2821 = vpow.pop %v2820
        %v2822 = vmul.f32 %v2816, 1.442695
        %v2823 = vpow.pop %v2822
        %v2824 = vmul.f32 %v2817, 1.442695
        %v2825 = vpow.pop %v2824
        %v2826 = vmul.f32 %v2819, %v2772
        %v2827 = vmul.f32 %v2821, %v2773
        %v2828 = vmul.f32 %v2823, %v2774
        %v2829 = vmul.f32 %v2825, %v2775
        %v2830 = vlaneseq
        %v2831 = vshrl.u32 %v2830, 7
        %v2832 = vsub.s32 6, %v2831
        %v2833 = vrot.slane %v2354, %v2832
        %v2834 = vlaneseq
        %v2835 = vshrl.u32 %v2834, 7
        %v2836 = vsub.s32 6, %v2835
        %v2837 = vrot.slane %v2355, %v2836
        %2838 = vset.pattern.permute.xlu0 6
        %2839 = vperm.xlu0 %2838, %v2308
        %v2840 = vpop.permute.xlu0 %2839
        %2842 = vset.pattern.permute.xlu0 6
        %2843 = vperm.xlu0 %2842, %v2313
        %v2844 = vpop.permute.xlu0 %2843
        %v2846 = vmul.f32 %v2833, %v2840
        %v2847 = vmul.f32 %v2837, %v2840
        %v2848 = vmul.f32 %v2833, %v2844
        %v2849 = vmul.f32 %v2837, %v2844
        %v2850 = vadd.f32 %v2826, %v2846
        %v2851 = vadd.f32 %v2827, %v2847
        %v2852 = vadd.f32 %v2828, %v2848
        %v2853 = vadd.f32 %v2829, %v2849
        %2854 = vset.pattern.permute.xlu0 6
        %2855 = vperm.xlu0 %2854, %v2318
        %v2856 = vpop.permute.xlu0 %2855
        %2858 = vset.pattern.permute.xlu0 6
        %2859 = vperm.xlu0 %2858, %v2323
        %v2860 = vpop.permute.xlu0 %2859
        %v2862 = vmul.f32 %v2856, %v2850
        %v2863 = vmul.f32 %v2856, %v2851
        %v2864 = vmul.f32 %v2860, %v2852
        %v2865 = vmul.f32 %v2860, %v2853
        %v2866 = vadd.f32 %v2862, %v2864
        %v2867 = vrot.slane %v2866, 4
        %v2868 = vadd.f32 %v2866, %v2867
        %v2869 = vrot.slane %v2868, 2
        %v2870 = vadd.f32 %v2868, %v2869
        %v2871 = vrot.slane %v2870, 1
        %v2872 = vadd.f32 %v2870, %v2871
        %v2873 = vadd.f32 %v2863, %v2865
        %v2874 = vrot.slane %v2873, 4
        %v2875 = vadd.f32 %v2873, %v2874
        %v2876 = vrot.slane %v2875, 2
        %v2877 = vadd.f32 %v2875, %v2876
        %v2878 = vrot.slane %v2877, 1
        %v2879 = vadd.f32 %v2877, %v2878
        %v2880 = vadd.f32 %v2872, %v2410
        %v2881 = vadd.f32 %v2879, %v2411
        %v2882 = vmul.f32 %v2880, %v2234
        %v2883 = vmul.f32 %v2881, %v2235
        %v2884 = vlaneseq
        %v2885 = vshrl.u32 %v2884, 7
        %v2886 = vsub.s32 7, %v2885
        %v2887 = vrot.slane %v2226, %v2886
        %v2888 = vlaneseq
        %v2889 = vshrl.u32 %v2888, 7
        %v2890 = vsub.s32 7, %v2889
        %v2891 = vrot.slane %v2227, %v2890
        %v2892 = vmul.f32 %v2887, %v1413
        %v2893 = vmul.f32 %v2891, %v1414
        %v2894 = vmul.f32 %v2887, %v1415
        %v2895 = vmul.f32 %v2891, %v1416
        %v2896 = vmul.f32 %v2892, 1.442695
        %v2897 = vpow.pop %v2896
        %v2898 = vmul.f32 %v2893, 1.442695
        %v2899 = vpow.pop %v2898
        %v2900 = vmul.f32 %v2894, 1.442695
        %v2901 = vpow.pop %v2900
        %v2902 = vmul.f32 %v2895, 1.442695
        %v2903 = vpow.pop %v2902
        %v2904 = vmul.f32 %v2897, %v2850
        %v2905 = vmul.f32 %v2899, %v2851
        %v2906 = vmul.f32 %v2901, %v2852
        %v2907 = vmul.f32 %v2903, %v2853
        %v2908 = vlaneseq
        %v2909 = vshrl.u32 %v2908, 7
        %v2910 = vsub.s32 7, %v2909
        %v2911 = vrot.slane %v2354, %v2910
        %v2912 = vlaneseq
        %v2913 = vshrl.u32 %v2912, 7
        %v2914 = vsub.s32 7, %v2913
        %v2915 = vrot.slane %v2355, %v2914
        %2916 = vset.pattern.permute.xlu0 7
        %2917 = vperm.xlu0 %2916, %v2308
        %v2918 = vpop.permute.xlu0 %2917
        %2920 = vset.pattern.permute.xlu0 7
        %2921 = vperm.xlu0 %2920, %v2313
        %v2922 = vpop.permute.xlu0 %2921
        %v2924 = vmul.f32 %v2911, %v2918
        %v2925 = vmul.f32 %v2915, %v2918
        %v2926 = vmul.f32 %v2911, %v2922
        %v2927 = vmul.f32 %v2915, %v2922
        %v2928 = vadd.f32 %v2904, %v2924
        %v2929 = vadd.f32 %v2905, %v2925
        %v2930 = vadd.f32 %v2906, %v2926
        %v2931 = vadd.f32 %v2907, %v2927
        %2932 = vset.pattern.permute.xlu0 7
        %2933 = vperm.xlu0 %2932, %v2318
        %v2934 = vpop.permute.xlu0 %2933
        %2936 = vset.pattern.permute.xlu0 7
        %2937 = vperm.xlu0 %2936, %v2323
        %v2938 = vpop.permute.xlu0 %2937
        %v2940 = vmul.f32 %v2934, %v2928
        %v2941 = vmul.f32 %v2934, %v2929
        %v2942 = vmul.f32 %v2938, %v2930
        %v2943 = vmul.f32 %v2938, %v2931
        %v2944 = vadd.f32 %v2940, %v2942
        %v2945 = vrot.slane %v2944, 4
        %v2946 = vadd.f32 %v2944, %v2945
        %v2947 = vrot.slane %v2946, 2
        %v2948 = vadd.f32 %v2946, %v2947
        %v2949 = vrot.slane %v2948, 1
        %v2950 = vadd.f32 %v2948, %v2949
        %v2951 = vadd.f32 %v2941, %v2943
        %v2952 = vrot.slane %v2951, 4
        %v2953 = vadd.f32 %v2951, %v2952
        %v2954 = vrot.slane %v2953, 2
        %v2955 = vadd.f32 %v2953, %v2954
        %v2956 = vrot.slane %v2955, 1
        %v2957 = vadd.f32 %v2955, %v2956
        %v2958 = vadd.f32 %v2950, %v2410
        %v2959 = vadd.f32 %v2957, %v2411
        %v2960 = vmul.f32 %v2958, %v2234
        %v2961 = vmul.f32 %v2959, %v2235
        %2962 = vst [vmem:[#allocation8] sm:$0xff] %v2928
        %2963 = vst [vmem:[#allocation8 + $0x8] sm:$0xff] %v2929
        %2964 = vst [vmem:[#allocation8 + $0x10] sm:$0xff] %v2930
        %2965 = vst [vmem:[#allocation8 + $0x18] sm:$0xff] %v2931
        %v2966 = vsel %vm2200, %v2414, %v2492
        %v2967 = vsel %vm2200, %v2415, %v2493
        %v2968 = vsel %vm2203, %v2966, %v2570
        %v2969 = vsel %vm2203, %v2967, %v2571
        %v2970 = vsel %vm2206, %v2968, %v2648
        %v2971 = vsel %vm2206, %v2969, %v2649
        %v2972 = vsel %vm2209, %v2970, %v2726
        %v2973 = vsel %vm2209, %v2971, %v2727
        %v2974 = vsel %vm2212, %v2972, %v2804
        %v2975 = vsel %vm2212, %v2973, %v2805
        %v2976 = vsel %vm2215, %v2974, %v2882
        %v2977 = vsel %vm2215, %v2975, %v2883
        %v2978 = vsel %vm2218, %v2976, %v2960
        %v2979 = vsel %vm2218, %v2977, %v2961
        %2980 = vst [vmem:[%s2229] sm:$0xff] %v2978
        %2981 = vst [vmem:[%s2229 + $0x8] sm:$0xff] %v2979
        %v2982 = vld [vmem:[#allocation2] sm:$0xff]
        %v2983 = vld [vmem:[#allocation2 + $0x8] sm:$0xff]
        %v2984 = vld [vmem:[#allocation2 + $0x10] sm:$0xff]
        %v2985 = vld [vmem:[#allocation2 + $0x18] sm:$0xff]
        %v2986 = vld [vmem:[%s9] sm:$0xff]
        %v2987 = vld [vmem:[%s9 + $0x8] sm:$0xff]
        %v2988 = vld [vmem:[%s9 + $0x10] sm:$0xff]
        %v2989 = vld [vmem:[%s9 + $0x18] sm:$0xff]
        %v2990 = vld [vmem:[%s9 + $0x20] sm:$0xff]
        %v2991 = vld [vmem:[%s9 + $0x28] sm:$0xff]
        %v2992 = vld [vmem:[%s9 + $0x30] sm:$0xff]
        %v2993 = vld [vmem:[%s9 + $0x38] sm:$0xff]
        %v2994 = vld [vmem:[%s9 + $0x40] sm:$0xff]
        %v2995 = vld [vmem:[%s9 + $0x48] sm:$0xff]
        %v2996 = vld [vmem:[%s9 + $0x50] sm:$0xff]
        %v2997 = vld [vmem:[%s9 + $0x58] sm:$0xff]
        %v2998 = vld [vmem:[%s9 + $0x60] sm:$0xff]
        %v2999 = vld [vmem:[%s9 + $0x68] sm:$0xff]
        %v3000 = vld [vmem:[%s9 + $0x70] sm:$0xff]
        %v3001 = vld [vmem:[%s9 + $0x78] sm:$0xff]
        %v3002 = vld [vmem:[%s9 + $0x80] sm:$0xff]
        %v3003 = vld [vmem:[%s9 + $0x88] sm:$0xff]
        %v3004 = vld [vmem:[%s9 + $0x90] sm:$0xff]
        %v3005 = vld [vmem:[%s9 + $0x98] sm:$0xff]
        %v3006 = vld [vmem:[%s9 + $0xa0] sm:$0xff]
        %v3007 = vld [vmem:[%s9 + $0xa8] sm:$0xff]
        %v3008 = vld [vmem:[%s9 + $0xb0] sm:$0xff]
        %v3009 = vld [vmem:[%s9 + $0xb8] sm:$0xff]
        %v3010 = vld [vmem:[%s9 + $0xc0] sm:$0xff]
        %v3011 = vld [vmem:[%s9 + $0xc8] sm:$0xff]
        %v3012 = vld [vmem:[%s9 + $0xd0] sm:$0xff]
        %v3013 = vld [vmem:[%s9 + $0xd8] sm:$0xff]
        %v3014 = vld [vmem:[%s9 + $0xe0] sm:$0xff]
        %v3015 = vld [vmem:[%s9 + $0xe8] sm:$0xff]
        %v3016 = vld [vmem:[%s9 + $0xf0] sm:$0xff]
        %v3017 = vld [vmem:[%s9 + $0xf8] sm:$0xff]
        %v3018 = vld [vmem:[#allocation6] sm:$0xff]
        %v3019 = vld [vmem:[#allocation6 + $0x8] sm:$0xff]
        %3020 = vmatprep.subr.mxu0 0.0
        %3021 = vmatpush1.msra.mxu0 %v3001
        %3022 = vmatprep.subr.mxu0 0.0
        %3023 = vmatpush1.msra.mxu0 %v3000
        %3024 = vmatprep.subr.mxu0 0.0
        %3025 = vmatpush1.msra.mxu0 %v2999
        %3026 = vmatprep.subr.mxu0 0.0
        %3027 = vmatpush1.msra.mxu0 %v2998
        %3028 = vmatprep.subr.mxu0 0.0
        %3029 = vmatpush1.msra.mxu0 %v2997
        %3030 = vmatprep.subr.mxu0 0.0
        %3031 = vmatpush1.msra.mxu0 %v2996
        %3032 = vmatprep.subr.mxu0 0.0
        %3033 = vmatpush1.msra.mxu0 %v2995
        %3034 = vmatprep.subr.mxu0 0.0
        %3035 = vmatpush1.msra.mxu0 %v2994
        %3036 = vmatprep.subr.mxu0 0.0
        %3037 = vmatpush1.msra.mxu0 %v2993
        %3038 = vmatprep.subr.mxu0 0.0
        %3039 = vmatpush1.msra.mxu0 %v2992
        %3040 = vmatprep.subr.mxu0 0.0
        %3041 = vmatpush1.msra.mxu0 %v2991
        %3042 = vmatprep.subr.mxu0 0.0
        %3043 = vmatpush1.msra.mxu0 %v2990
        %3044 = vmatprep.subr.mxu0 0.0
        %3045 = vmatpush1.msra.mxu0 %v2989
        %3046 = vmatprep.subr.mxu0 0.0
        %3047 = vmatpush1.msra.mxu0 %v2988
        %3048 = vmatprep.subr.mxu0 0.0
        %3049 = vmatpush1.msra.mxu0 %v2987
        %3050 = vmatprep.subr.mxu0 0.0
        %3051 = vmatpush1.msra.mxu0 %v2986
        %3052 = vmatprep.subr.mxu0 0.0
        %3053 = vmatpush2.msra.mxu0 %v3017
        %3054 = vmatprep.subr.mxu0 0.0
        %3055 = vmatpush2.msra.mxu0 %v3016
        %3056 = vmatprep.subr.mxu0 0.0
        %3057 = vmatpush2.msra.mxu0 %v3015
        %3058 = vmatprep.subr.mxu0 0.0
        %3059 = vmatpush2.msra.mxu0 %v3014
        %3060 = vmatprep.subr.mxu0 0.0
        %3061 = vmatpush2.msra.mxu0 %v3013
        %3062 = vmatprep.subr.mxu0 0.0
        %3063 = vmatpush2.msra.mxu0 %v3012
        %3064 = vmatprep.subr.mxu0 0.0
        %3065 = vmatpush2.msra.mxu0 %v3011
        %3066 = vmatprep.subr.mxu0 0.0
        %3067 = vmatpush2.msra.mxu0 %v3010
        %3068 = vmatprep.subr.mxu0 0.0
        %3069 = vmatpush2.msra.mxu0 %v3009
        %3070 = vmatprep.subr.mxu0 0.0
        %3071 = vmatpush2.msra.mxu0 %v3008
        %3072 = vmatprep.subr.mxu0 0.0
        %3073 = vmatpush2.msra.mxu0 %v3007
        %3074 = vmatprep.subr.mxu0 0.0
        %3075 = vmatpush2.msra.mxu0 %v3006
        %3076 = vmatprep.subr.mxu0 0.0
        %3077 = vmatpush2.msra.mxu0 %v3005
        %3078 = vmatprep.subr.mxu0 0.0
        %3079 = vmatpush2.msra.mxu0 %v3004
        %3080 = vmatprep.subr.mxu0 0.0
        %3081 = vmatpush2.msra.mxu0 %v3003
        %3082 = vmatprep.subr.mxu0 0.0
        %3083 = vmatpush2.msra.mxu0 %v3002
        %3084 = vmatprep.mubr.f32.mxu0 %v2983
        %3085 = vmatmul.mubr.f32.gmra.mxu0 %v2982
        %v3086 = vpop.f32.mrf.mxu0
        %v3087 = vadd.f32 %v3018, %v3086
        %v3088 = vpop.f32.mrf.mxu0
        %3089 = vmatprep.mubr.f32.mxu0 %v2985
        %3090 = vmatmul.mubr.f32.gmra.mxu0 %v2984
        %v3091 = vpop.f32.mrf.mxu0
        %v3092 = vadd.f32 %v3019, %v3091
        %v3093 = vpop.f32.mrf.mxu0
        %3094 = vdwg.mxu0
        %3095 = vadd.xlane.f32.xlu0 %v3087
        %v3096 = vpop.xlane.xlu0 %3095
        %3097 = vadd.xlane.f32.xlu0 %v3092
        %v3098 = vpop.xlane.xlu0 %3097
        %v3099 = vmul.f32 %v3096, %v632
        %v3100 = vmul.f32 %v3098, %v632
        %v3101 = vsub.f32 %v3087, %v3099
        %v3102 = vsub.f32 %v3092, %v3100
        %v3103 = vmul.f32 %v3101, %v3101
        %v3104 = vmul.f32 %v3102, %v3102
        %3105 = vadd.xlane.f32.xlu0 %v3103
        %v3106 = vpop.xlane.xlu0 %3105
        %3107 = vadd.xlane.f32.xlu0 %v3104
        %v3108 = vpop.xlane.xlu0 %3107
        %v3109 = vmul.f32 %v3106, %v632
        %v3110 = vmul.f32 %v3108, %v632
        %v3111 = vadd.f32 %v3109, 1e-05
        %v3112 = vadd.f32 %v3110, 1e-05
        %v3113 = vrsqrt.pop %v3111
        %v3114 = vrsqrt.pop %v3112
        %v3115 = vmul.f32 %v3101, %v3113
        %v3116 = vmul.f32 %v3102, %v3114
        %v3117 = vld [vmem:[#allocation20] sm:$0xff]
        %v3118 = vld [vmem:[#allocation20 + $0x8] sm:$0xff]
        %v3119 = vld [vmem:[#allocation20 + $0x10] sm:$0xff]
        %v3120 = vld [vmem:[#allocation20 + $0x18] sm:$0xff]
        %v3121 = vld [vmem:[#allocation20 + $0x20] sm:$0xff]
        %v3122 = vld [vmem:[#allocation20 + $0x28] sm:$0xff]
        %v3123 = vld [vmem:[#allocation20 + $0x30] sm:$0xff]
        %v3124 = vld [vmem:[#allocation20 + $0x38] sm:$0xff]
        %v3125 = vld [vmem:[#allocation20 + $0x40] sm:$0xff]
        %v3126 = vld [vmem:[#allocation20 + $0x48] sm:$0xff]
        %v3127 = vld [vmem:[#allocation20 + $0x50] sm:$0xff]
        %v3128 = vld [vmem:[#allocation20 + $0x58] sm:$0xff]
        %v3129 = vld [vmem:[#allocation20 + $0x60] sm:$0xff]
        %v3130 = vld [vmem:[#allocation20 + $0x68] sm:$0xff]
        %v3131 = vld [vmem:[#allocation20 + $0x70] sm:$0xff]
        %v3132 = vld [vmem:[#allocation20 + $0x78] sm:$0xff]
        %v3133 = vld [vmem:[#allocation20 + $0x80] sm:$0xff]
        %v3134 = vld [vmem:[#allocation20 + $0x88] sm:$0xff]
        %v3135 = vld [vmem:[#allocation20 + $0x90] sm:$0xff]
        %v3136 = vld [vmem:[#allocation20 + $0x98] sm:$0xff]
        %v3137 = vld [vmem:[#allocation20 + $0xa0] sm:$0xff]
        %v3138 = vld [vmem:[#allocation20 + $0xa8] sm:$0xff]
        %v3139 = vld [vmem:[#allocation20 + $0xb0] sm:$0xff]
        %v3140 = vld [vmem:[#allocation20 + $0xb8] sm:$0xff]
        %v3141 = vld [vmem:[#allocation20 + $0xc0] sm:$0xff]
        %v3142 = vld [vmem:[#allocation20 + $0xc8] sm:$0xff]
        %v3143 = vld [vmem:[#allocation20 + $0xd0] sm:$0xff]
        %v3144 = vld [vmem:[#allocation20 + $0xd8] sm:$0xff]
        %v3145 = vld [vmem:[#allocation20 + $0xe0] sm:$0xff]
        %v3146 = vld [vmem:[#allocation20 + $0xe8] sm:$0xff]
        %v3147 = vld [vmem:[#allocation20 + $0xf0] sm:$0xff]
        %v3148 = vld [vmem:[#allocation20 + $0xf8] sm:$0xff]
        %v3149 = vld [vmem:[#allocation20 + $0x100] sm:$0xff]
        %v3150 = vld [vmem:[#allocation20 + $0x108] sm:$0xff]
        %v3151 = vld [vmem:[#allocation20 + $0x110] sm:$0xff]
        %v3152 = vld [vmem:[#allocation20 + $0x118] sm:$0xff]
        %v3153 = vld [vmem:[#allocation20 + $0x120] sm:$0xff]
        %v3154 = vld [vmem:[#allocation20 + $0x128] sm:$0xff]
        %v3155 = vld [vmem:[#allocation20 + $0x130] sm:$0xff]
        %v3156 = vld [vmem:[#allocation20 + $0x138] sm:$0xff]
        %v3157 = vld [vmem:[#allocation20 + $0x140] sm:$0xff]
        %v3158 = vld [vmem:[#allocation20 + $0x148] sm:$0xff]
        %v3159 = vld [vmem:[#allocation20 + $0x150] sm:$0xff]
        %v3160 = vld [vmem:[#allocation20 + $0x158] sm:$0xff]
        %v3161 = vld [vmem:[#allocation20 + $0x160] sm:$0xff]
        %v3162 = vld [vmem:[#allocation20 + $0x168] sm:$0xff]
        %v3163 = vld [vmem:[#allocation20 + $0x170] sm:$0xff]
        %v3164 = vld [vmem:[#allocation20 + $0x178] sm:$0xff]
        %v3165 = vld [vmem:[#allocation20 + $0x180] sm:$0xff]
        %v3166 = vld [vmem:[#allocation20 + $0x188] sm:$0xff]
        %v3167 = vld [vmem:[#allocation20 + $0x190] sm:$0xff]
        %v3168 = vld [vmem:[#allocation20 + $0x198] sm:$0xff]
        %v3169 = vld [vmem:[#allocation20 + $0x1a0] sm:$0xff]
        %v3170 = vld [vmem:[#allocation20 + $0x1a8] sm:$0xff]
        %v3171 = vld [vmem:[#allocation20 + $0x1b0] sm:$0xff]
        %v3172 = vld [vmem:[#allocation20 + $0x1b8] sm:$0xff]
        %v3173 = vld [vmem:[#allocation20 + $0x1c0] sm:$0xff]
        %v3174 = vld [vmem:[#allocation20 + $0x1c8] sm:$0xff]
        %v3175 = vld [vmem:[#allocation20 + $0x1d0] sm:$0xff]
        %v3176 = vld [vmem:[#allocation20 + $0x1d8] sm:$0xff]
        %v3177 = vld [vmem:[#allocation20 + $0x1e0] sm:$0xff]
        %v3178 = vld [vmem:[#allocation20 + $0x1e8] sm:$0xff]
        %v3179 = vld [vmem:[#allocation20 + $0x1f0] sm:$0xff]
        %v3180 = vld [vmem:[#allocation20 + $0x1f8] sm:$0xff]
        %v3181 = vld [vmem:[#allocation21] sm:$0xf]
        %v3183 = vlaneseq
        %v3184 = vshrl.u32 %v3183, 7
        %v3185 = vsub.s32 0, %v3184
        %v3186 = vrot.slane %v3181, %v3185
        %v3187 = vlaneseq
        %v3188 = vshrl.u32 %v3187, 7
        %v3189 = vsub.s32 1, %v3188
        %v3190 = vrot.slane %v3181, %v3189
        %v3191 = vlaneseq
        %v3192 = vshrl.u32 %v3191, 7
        %v3193 = vsub.s32 2, %v3192
        %v3194 = vrot.slane %v3181, %v3193
        %v3195 = vlaneseq
        %v3196 = vshrl.u32 %v3195, 7
        %v3197 = vsub.s32 3, %v3196
        %v3198 = vrot.slane %v3181, %v3197
        %3203 = vmatprep.subr.mxu0 %v3178
        %3204 = vmatpush1.msra.mxu0 %v3177
        %3205 = vmatprep.subr.mxu0 %v3174
        %3206 = vmatpush1.msra.mxu0 %v3173
        %3207 = vmatprep.subr.mxu0 %v3170
        %3208 = vmatpush1.msra.mxu0 %v3169
        %3209 = vmatprep.subr.mxu0 %v3166
        %3210 = vmatpush1.msra.mxu0 %v3165
        %3211 = vmatprep.subr.mxu0 %v3162
        %3212 = vmatpush1.msra.mxu0 %v3161
        %3213 = vmatprep.subr.mxu0 %v3158
        %3214 = vmatpush1.msra.mxu0 %v3157
        %3215 = vmatprep.subr.mxu0 %v3154
        %3216 = vmatpush1.msra.mxu0 %v3153
        %3217 = vmatprep.subr.mxu0 %v3150
        %3218 = vmatpush1.msra.mxu0 %v3149
        %3219 = vmatprep.subr.mxu0 %v3146
        %3220 = vmatpush1.msra.mxu0 %v3145
        %3221 = vmatprep.subr.mxu0 %v3142
        %3222 = vmatpush1.msra.mxu0 %v3141
        %3223 = vmatprep.subr.mxu0 %v3138
        %3224 = vmatpush1.msra.mxu0 %v3137
        %3225 = vmatprep.subr.mxu0 %v3134
        %3226 = vmatpush1.msra.mxu0 %v3133
        %3227 = vmatprep.subr.mxu0 %v3130
        %3228 = vmatpush1.msra.mxu0 %v3129
        %3229 = vmatprep.subr.mxu0 %v3126
        %3230 = vmatpush1.msra.mxu0 %v3125
        %3231 = vmatprep.subr.mxu0 %v3122
        %3232 = vmatpush1.msra.mxu0 %v3121
        %3233 = vmatprep.subr.mxu0 %v3118
        %3234 = vmatpush1.msra.mxu0 %v3117
        %3235 = vmatprep.subr.mxu0 0.0
        %3236 = vmatpush2.msra.mxu0 0.0
        %3237 = vmatprep.subr.mxu0 0.0
        %3238 = vmatpush2.msra.mxu0 0.0
        %3239 = vmatprep.subr.mxu0 0.0
        %3240 = vmatpush2.msra.mxu0 0.0
        %3241 = vmatprep.subr.mxu0 0.0
        %3242 = vmatpush2.msra.mxu0 0.0
        %3243 = vmatprep.subr.mxu0 0.0
        %3244 = vmatpush2.msra.mxu0 0.0
        %3245 = vmatprep.subr.mxu0 0.0
        %3246 = vmatpush2.msra.mxu0 0.0
        %3247 = vmatprep.subr.mxu0 0.0
        %3248 = vmatpush2.msra.mxu0 0.0
        %3249 = vmatprep.subr.mxu0 0.0
        %3250 = vmatpush2.msra.mxu0 0.0
        %3251 = vmatprep.subr.mxu0 0.0
        %3252 = vmatpush2.msra.mxu0 0.0
        %3253 = vmatprep.subr.mxu0 0.0
        %3254 = vmatpush2.msra.mxu0 0.0
        %3255 = vmatprep.subr.mxu0 0.0
        %3256 = vmatpush2.msra.mxu0 0.0
        %3257 = vmatprep.subr.mxu0 0.0
        %3258 = vmatpush2.msra.mxu0 0.0
        %3259 = vmatprep.subr.mxu0 0.0
        %3260 = vmatpush2.msra.mxu0 0.0
        %3261 = vmatprep.subr.mxu0 0.0
        %3262 = vmatpush2.msra.mxu0 0.0
        %3263 = vmatprep.subr.mxu0 0.0
        %3264 = vmatpush2.msra.mxu0 0.0
        %3265 = vmatprep.subr.mxu0 0.0
        %3266 = vmatpush2.msra.mxu0 0.0
        %3267 = vmatprep.mubr.f32.mxu0 0.0
        %3268 = vmatmul.mubr.f32.gmra.mxu0 %v3115
        %v3269 = vpop.f32.mrf.mxu0
        %v3270 = vadd.f32 %v3186, %v3269
        %v3271 = vpop.f32.mrf.mxu0
        %v3272 = vadd.f32 %v3190, %v3271
        %3273 = vmatprep.mubr.f32.mxu0 0.0
        %3274 = vmatmul.mubr.f32.gmra.mxu0 %v3116
        %v3275 = vpop.f32.mrf.mxu0
        %v3276 = vadd.f32 %v3186, %v3275
        %v3277 = vpop.f32.mrf.mxu0
        %v3278 = vadd.f32 %v3190, %v3277
        %3279 = vdwg.mxu0
        %3280 = vmatprep.subr.mxu0 %v3180
        %3281 = vmatpush1.msra.mxu0 %v3179
        %3282 = vmatprep.subr.mxu0 %v3176
        %3283 = vmatpush1.msra.mxu0 %v3175
        %3284 = vmatprep.subr.mxu0 %v3172
        %3285 = vmatpush1.msra.mxu0 %v3171
        %3286 = vmatprep.subr.mxu0 %v3168
        %3287 = vmatpush1.msra.mxu0 %v3167
        %3288 = vmatprep.subr.mxu0 %v3164
        %3289 = vmatpush1.msra.mxu0 %v3163
        %3290 = vmatprep.subr.mxu0 %v3160
        %3291 = vmatpush1.msra.mxu0 %v3159
        %3292 = vmatprep.subr.mxu0 %v3156
        %3293 = vmatpush1.msra.mxu0 %v3155
        %3294 = vmatprep.subr.mxu0 %v3152
        %3295 = vmatpush1.msra.mxu0 %v3151
        %3296 = vmatprep.subr.mxu0 %v3148
        %3297 = vmatpush1.msra.mxu0 %v3147
        %3298 = vmatprep.subr.mxu0 %v3144
        %3299 = vmatpush1.msra.mxu0 %v3143
        %3300 = vmatprep.subr.mxu0 %v3140
        %3301 = vmatpush1.msra.mxu0 %v3139
        %3302 = vmatprep.subr.mxu0 %v3136
        %3303 = vmatpush1.msra.mxu0 %v3135
        %3304 = vmatprep.subr.mxu0 %v3132
        %3305 = vmatpush1.msra.mxu0 %v3131
        %3306 = vmatprep.subr.mxu0 %v3128
        %3307 = vmatpush1.msra.mxu0 %v3127
        %3308 = vmatprep.subr.mxu0 %v3124
        %3309 = vmatpush1.msra.mxu0 %v3123
        %3310 = vmatprep.subr.mxu0 %v3120
        %3311 = vmatpush1.msra.mxu0 %v3119
        %3312 = vmatprep.subr.mxu0 0.0
        %3313 = vmatpush2.msra.mxu0 0.0
        %3314 = vmatprep.subr.mxu0 0.0
        %3315 = vmatpush2.msra.mxu0 0.0
        %3316 = vmatprep.subr.mxu0 0.0
        %3317 = vmatpush2.msra.mxu0 0.0
        %3318 = vmatprep.subr.mxu0 0.0
        %3319 = vmatpush2.msra.mxu0 0.0
        %3320 = vmatprep.subr.mxu0 0.0
        %3321 = vmatpush2.msra.mxu0 0.0
        %3322 = vmatprep.subr.mxu0 0.0
        %3323 = vmatpush2.msra.mxu0 0.0
        %3324 = vmatprep.subr.mxu0 0.0
        %3325 = vmatpush2.msra.mxu0 0.0
        %3326 = vmatprep.subr.mxu0 0.0
        %3327 = vmatpush2.msra.mxu0 0.0
        %3328 = vmatprep.subr.mxu0 0.0
        %3329 = vmatpush2.msra.mxu0 0.0
        %3330 = vmatprep.subr.mxu0 0.0
        %3331 = vmatpush2.msra.mxu0 0.0
        %3332 = vmatprep.subr.mxu0 0.0
        %3333 = vmatpush2.msra.mxu0 0.0
        %3334 = vmatprep.subr.mxu0 0.0
        %3335 = vmatpush2.msra.mxu0 0.0
        %3336 = vmatprep.subr.mxu0 0.0
        %3337 = vmatpush2.msra.mxu0 0.0
        %3338 = vmatprep.subr.mxu0 0.0
        %3339 = vmatpush2.msra.mxu0 0.0
        %3340 = vmatprep.subr.mxu0 0.0
        %3341 = vmatpush2.msra.mxu0 0.0
        %3342 = vmatprep.subr.mxu0 0.0
        %3343 = vmatpush2.msra.mxu0 0.0
        %3344 = vmatprep.mubr.f32.mxu0 0.0
        %3345 = vmatmul.mubr.f32.gmra.mxu0 %v3115
        %v3346 = vpop.f32.mrf.mxu0
        %v3347 = vadd.f32 %v3194, %v3346
        %v3348 = vpop.f32.mrf.mxu0
        %v3349 = vadd.f32 %v3198, %v3348
        %3350 = vmatprep.mubr.f32.mxu0 0.0
        %3351 = vmatmul.mubr.f32.gmra.mxu0 %v3116
        %v3352 = vpop.f32.mrf.mxu0
        %v3353 = vadd.f32 %v3194, %v3352
        %v3354 = vpop.f32.mrf.mxu0
        %v3355 = vadd.f32 %v3198, %v3354
        %3356 = vdwg.mxu0
        %v3357 = vmax.f32 %v3270, 0.0
        %v3358 = vmax.f32 %v3272, 0.0
        %v3359 = vmax.f32 %v3347, 0.0
        %v3360 = vmax.f32 %v3349, 0.0
        %v3361 = vmax.f32 %v3276, 0.0
        %v3362 = vmax.f32 %v3278, 0.0
        %v3363 = vmax.f32 %v3353, 0.0
        %v3364 = vmax.f32 %v3355, 0.0
        %v3365 = vld [vmem:[#allocation23] sm:$0xff]
        %v3366 = vld [vmem:[#allocation23 + $0x8] sm:$0xff]
        %v3367 = vld [vmem:[#allocation23 + $0x10] sm:$0xff]
        %v3368 = vld [vmem:[#allocation23 + $0x18] sm:$0xff]
        %v3369 = vld [vmem:[#allocation23 + $0x20] sm:$0xff]
        %v3370 = vld [vmem:[#allocation23 + $0x28] sm:$0xff]
        %v3371 = vld [vmem:[#allocation23 + $0x30] sm:$0xff]
        %v3372 = vld [vmem:[#allocation23 + $0x38] sm:$0xff]
        %v3373 = vld [vmem:[#allocation23 + $0x40] sm:$0xff]
        %v3374 = vld [vmem:[#allocation23 + $0x48] sm:$0xff]
        %v3375 = vld [vmem:[#allocation23 + $0x50] sm:$0xff]
        %v3376 = vld [vmem:[#allocation23 + $0x58] sm:$0xff]
        %v3377 = vld [vmem:[#allocation23 + $0x60] sm:$0xff]
        %v3378 = vld [vmem:[#allocation23 + $0x68] sm:$0xff]
        %v3379 = vld [vmem:[#allocation23 + $0x70] sm:$0xff]
        %v3380 = vld [vmem:[#allocation23 + $0x78] sm:$0xff]
        %v3381 = vld [vmem:[#allocation23 + $0x80] sm:$0xff]
        %v3382 = vld [vmem:[#allocation23 + $0x88] sm:$0xff]
        %v3383 = vld [vmem:[#allocation23 + $0x90] sm:$0xff]
        %v3384 = vld [vmem:[#allocation23 + $0x98] sm:$0xff]
        %v3385 = vld [vmem:[#allocation23 + $0xa0] sm:$0xff]
        %v3386 = vld [vmem:[#allocation23 + $0xa8] sm:$0xff]
        %v3387 = vld [vmem:[#allocation23 + $0xb0] sm:$0xff]
        %v3388 = vld [vmem:[#allocation23 + $0xb8] sm:$0xff]
        %v3389 = vld [vmem:[#allocation23 + $0xc0] sm:$0xff]
        %v3390 = vld [vmem:[#allocation23 + $0xc8] sm:$0xff]
        %v3391 = vld [vmem:[#allocation23 + $0xd0] sm:$0xff]
        %v3392 = vld [vmem:[#allocation23 + $0xd8] sm:$0xff]
        %v3393 = vld [vmem:[#allocation23 + $0xe0] sm:$0xff]
        %v3394 = vld [vmem:[#allocation23 + $0xe8] sm:$0xff]
        %v3395 = vld [vmem:[#allocation23 + $0xf0] sm:$0xff]
        %v3396 = vld [vmem:[#allocation23 + $0xf8] sm:$0xff]
        %v3397 = vld [vmem:[#allocation23 + $0x100] sm:$0xff]
        %v3398 = vld [vmem:[#allocation23 + $0x108] sm:$0xff]
        %v3399 = vld [vmem:[#allocation23 + $0x110] sm:$0xff]
        %v3400 = vld [vmem:[#allocation23 + $0x118] sm:$0xff]
        %v3401 = vld [vmem:[#allocation23 + $0x120] sm:$0xff]
        %v3402 = vld [vmem:[#allocation23 + $0x128] sm:$0xff]
        %v3403 = vld [vmem:[#allocation23 + $0x130] sm:$0xff]
        %v3404 = vld [vmem:[#allocation23 + $0x138] sm:$0xff]
        %v3405 = vld [vmem:[#allocation23 + $0x140] sm:$0xff]
        %v3406 = vld [vmem:[#allocation23 + $0x148] sm:$0xff]
        %v3407 = vld [vmem:[#allocation23 + $0x150] sm:$0xff]
        %v3408 = vld [vmem:[#allocation23 + $0x158] sm:$0xff]
        %v3409 = vld [vmem:[#allocation23 + $0x160] sm:$0xff]
        %v3410 = vld [vmem:[#allocation23 + $0x168] sm:$0xff]
        %v3411 = vld [vmem:[#allocation23 + $0x170] sm:$0xff]
        %v3412 = vld [vmem:[#allocation23 + $0x178] sm:$0xff]
        %v3413 = vld [vmem:[#allocation23 + $0x180] sm:$0xff]
        %v3414 = vld [vmem:[#allocation23 + $0x188] sm:$0xff]
        %v3415 = vld [vmem:[#allocation23 + $0x190] sm:$0xff]
        %v3416 = vld [vmem:[#allocation23 + $0x198] sm:$0xff]
        %v3417 = vld [vmem:[#allocation23 + $0x1a0] sm:$0xff]
        %v3418 = vld [vmem:[#allocation23 + $0x1a8] sm:$0xff]
        %v3419 = vld [vmem:[#allocation23 + $0x1b0] sm:$0xff]
        %v3420 = vld [vmem:[#allocation23 + $0x1b8] sm:$0xff]
        %v3421 = vld [vmem:[#allocation23 + $0x1c0] sm:$0xff]
        %v3422 = vld [vmem:[#allocation23 + $0x1c8] sm:$0xff]
        %v3423 = vld [vmem:[#allocation23 + $0x1d0] sm:$0xff]
        %v3424 = vld [vmem:[#allocation23 + $0x1d8] sm:$0xff]
        %v3425 = vld [vmem:[#allocation23 + $0x1e0] sm:$0xff]
        %v3426 = vld [vmem:[#allocation23 + $0x1e8] sm:$0xff]
        %v3427 = vld [vmem:[#allocation23 + $0x1f0] sm:$0xff]
        %v3428 = vld [vmem:[#allocation23 + $0x1f8] sm:$0xff]
        %v3429 = vld [vmem:[%s13] sm:$0x1]
        %v3431 = vlaneseq
        %v3432 = vshrl.u32 %v3431, 7
        %v3433 = vsub.s32 0, %v3432
        %v3434 = vrot.slane %v3429, %v3433
        %3436 = vmatprep.subr.mxu0 0.0
        %3437 = vmatpush1.msra.mxu0 %v3380
        %3438 = vmatprep.subr.mxu0 0.0
        %3439 = vmatpush1.msra.mxu0 %v3379
        %3440 = vmatprep.subr.mxu0 0.0
        %3441 = vmatpush1.msra.mxu0 %v3378
        %3442 = vmatprep.subr.mxu0 0.0
        %3443 = vmatpush1.msra.mxu0 %v3377
        %3444 = vmatprep.subr.mxu0 0.0
        %3445 = vmatpush1.msra.mxu0 %v3376
        %3446 = vmatprep.subr.mxu0 0.0
        %3447 = vmatpush1.msra.mxu0 %v3375
        %3448 = vmatprep.subr.mxu0 0.0
        %3449 = vmatpush1.msra.mxu0 %v3374
        %3450 = vmatprep.subr.mxu0 0.0
        %3451 = vmatpush1.msra.mxu0 %v3373
        %3452 = vmatprep.subr.mxu0 0.0
        %3453 = vmatpush1.msra.mxu0 %v3372
        %3454 = vmatprep.subr.mxu0 0.0
        %3455 = vmatpush1.msra.mxu0 %v3371
        %3456 = vmatprep.subr.mxu0 0.0
        %3457 = vmatpush1.msra.mxu0 %v3370
        %3458 = vmatprep.subr.mxu0 0.0
        %3459 = vmatpush1.msra.mxu0 %v3369
        %3460 = vmatprep.subr.mxu0 0.0
        %3461 = vmatpush1.msra.mxu0 %v3368
        %3462 = vmatprep.subr.mxu0 0.0
        %3463 = vmatpush1.msra.mxu0 %v3367
        %3464 = vmatprep.subr.mxu0 0.0
        %3465 = vmatpush1.msra.mxu0 %v3366
        %3466 = vmatprep.subr.mxu0 0.0
        %3467 = vmatpush1.msra.mxu0 %v3365
        %3468 = vmatprep.subr.mxu0 0.0
        %3469 = vmatpush2.msra.mxu0 %v3396
        %3470 = vmatprep.subr.mxu0 0.0
        %3471 = vmatpush2.msra.mxu0 %v3395
        %3472 = vmatprep.subr.mxu0 0.0
        %3473 = vmatpush2.msra.mxu0 %v3394
        %3474 = vmatprep.subr.mxu0 0.0
        %3475 = vmatpush2.msra.mxu0 %v3393
        %3476 = vmatprep.subr.mxu0 0.0
        %3477 = vmatpush2.msra.mxu0 %v3392
        %3478 = vmatprep.subr.mxu0 0.0
        %3479 = vmatpush2.msra.mxu0 %v3391
        %3480 = vmatprep.subr.mxu0 0.0
        %3481 = vmatpush2.msra.mxu0 %v3390
        %3482 = vmatprep.subr.mxu0 0.0
        %3483 = vmatpush2.msra.mxu0 %v3389
        %3484 = vmatprep.subr.mxu0 0.0
        %3485 = vmatpush2.msra.mxu0 %v3388
        %3486 = vmatprep.subr.mxu0 0.0
        %3487 = vmatpush2.msra.mxu0 %v3387
        %3488 = vmatprep.subr.mxu0 0.0
        %3489 = vmatpush2.msra.mxu0 %v3386
        %3490 = vmatprep.subr.mxu0 0.0
        %3491 = vmatpush2.msra.mxu0 %v3385
        %3492 = vmatprep.subr.mxu0 0.0
        %3493 = vmatpush2.msra.mxu0 %v3384
        %3494 = vmatprep.subr.mxu0 0.0
        %3495 = vmatpush2.msra.mxu0 %v3383
        %3496 = vmatprep.subr.mxu0 0.0
        %3497 = vmatpush2.msra.mxu0 %v3382
        %3498 = vmatprep.subr.mxu0 0.0
        %3499 = vmatpush2.msra.mxu0 %v3381
        %3500 = vmatprep.mubr.f32.mxu0 %v3358
        %3501 = vmatmul.mubr.f32.gmra.mxu0 %v3357
        %v3502 = vpop.f32.mrf.mxu0
        %v3503 = vadd.f32 %v3434, %v3502
        %v3504 = vpop.f32.mrf.mxu0
        %3505 = vmatprep.mubr.f32.mxu0 %v3362
        %3506 = vmatmul.mubr.f32.gmra.mxu0 %v3361
        %v3507 = vpop.f32.mrf.mxu0
        %v3508 = vadd.f32 %v3434, %v3507
        %v3509 = vpop.f32.mrf.mxu0
        %3510 = vdwg.mxu0
        %3511 = vmatprep.subr.mxu0 0.0
        %3512 = vmatpush1.msra.mxu0 %v3412
        %3513 = vmatprep.subr.mxu0 0.0
        %3514 = vmatpush1.msra.mxu0 %v3411
        %3515 = vmatprep.subr.mxu0 0.0
        %3516 = vmatpush1.msra.mxu0 %v3410
        %3517 = vmatprep.subr.mxu0 0.0
        %3518 = vmatpush1.msra.mxu0 %v3409
        %3519 = vmatprep.subr.mxu0 0.0
        %3520 = vmatpush1.msra.mxu0 %v3408
        %3521 = vmatprep.subr.mxu0 0.0
        %3522 = vmatpush1.msra.mxu0 %v3407
        %3523 = vmatprep.subr.mxu0 0.0
        %3524 = vmatpush1.msra.mxu0 %v3406
        %3525 = vmatprep.subr.mxu0 0.0
        %3526 = vmatpush1.msra.mxu0 %v3405
        %3527 = vmatprep.subr.mxu0 0.0
        %3528 = vmatpush1.msra.mxu0 %v3404
        %3529 = vmatprep.subr.mxu0 0.0
        %3530 = vmatpush1.msra.mxu0 %v3403
        %3531 = vmatprep.subr.mxu0 0.0
        %3532 = vmatpush1.msra.mxu0 %v3402
        %3533 = vmatprep.subr.mxu0 0.0
        %3534 = vmatpush1.msra.mxu0 %v3401
        %3535 = vmatprep.subr.mxu0 0.0
        %3536 = vmatpush1.msra.mxu0 %v3400
        %3537 = vmatprep.subr.mxu0 0.0
        %3538 = vmatpush1.msra.mxu0 %v3399
        %3539 = vmatprep.subr.mxu0 0.0
        %3540 = vmatpush1.msra.mxu0 %v3398
        %3541 = vmatprep.subr.mxu0 0.0
        %3542 = vmatpush1.msra.mxu0 %v3397
        %3543 = vmatprep.subr.mxu0 0.0
        %3544 = vmatpush2.msra.mxu0 %v3428
        %3545 = vmatprep.subr.mxu0 0.0
        %3546 = vmatpush2.msra.mxu0 %v3427
        %3547 = vmatprep.subr.mxu0 0.0
        %3548 = vmatpush2.msra.mxu0 %v3426
        %3549 = vmatprep.subr.mxu0 0.0
        %3550 = vmatpush2.msra.mxu0 %v3425
        %3551 = vmatprep.subr.mxu0 0.0
        %3552 = vmatpush2.msra.mxu0 %v3424
        %3553 = vmatprep.subr.mxu0 0.0
        %3554 = vmatpush2.msra.mxu0 %v3423
        %3555 = vmatprep.subr.mxu0 0.0
        %3556 = vmatpush2.msra.mxu0 %v3422
        %3557 = vmatprep.subr.mxu0 0.0
        %3558 = vmatpush2.msra.mxu0 %v3421
        %3559 = vmatprep.subr.mxu0 0.0
        %3560 = vmatpush2.msra.mxu0 %v3420
        %3561 = vmatprep.subr.mxu0 0.0
        %3562 = vmatpush2.msra.mxu0 %v3419
        %3563 = vmatprep.subr.mxu0 0.0
        %3564 = vmatpush2.msra.mxu0 %v3418
        %3565 = vmatprep.subr.mxu0 0.0
        %3566 = vmatpush2.msra.mxu0 %v3417
        %3567 = vmatprep.subr.mxu0 0.0
        %3568 = vmatpush2.msra.mxu0 %v3416
        %3569 = vmatprep.subr.mxu0 0.0
        %3570 = vmatpush2.msra.mxu0 %v3415
        %3571 = vmatprep.subr.mxu0 0.0
        %3572 = vmatpush2.msra.mxu0 %v3414
        %3573 = vmatprep.subr.mxu0 0.0
        %3574 = vmatpush2.msra.mxu0 %v3413
        %3575 = vmatprep.mubr.f32.mxu0 %v3360
        %3576 = vmatmul.mubr.f32.gmra.mxu0 %v3359
        %v3577 = vpop.f32.mrf.mxu0
        %v3578 = vadd.f32 %v3503, %v3577
        %v3579 = vpop.f32.mrf.mxu0
        %3580 = vmatprep.mubr.f32.mxu0 %v3364
        %3581 = vmatmul.mubr.f32.gmra.mxu0 %v3363
        %v3582 = vpop.f32.mrf.mxu0
        %v3583 = vadd.f32 %v3508, %v3582
        %v3584 = vpop.f32.mrf.mxu0
        %3585 = vdwg.mxu0
        %v3586 = vmul.f32 %v3578, 0.5
        %v3587 = vmul.f32 %v3583, 0.5
        %v3588 = vadd.f32 %v3586, %v626
        %v3589 = vadd.f32 %v3587, %v627
        %3590 = vst [vmem:[%s604] sm:$0xff] %v3588
        %3591 = vst [vmem:[%s604 + $0x8] sm:$0xff] %v3589
        %s3592 = sand.u32 %s356, 1
        %s3593 = scalar_lea.sflag [#allocation11], %s3592
        %s3594 = sand.u32 %s356, 1
        %s3595 = smul.addr %s3594, 16
        %s3596 = scalar_lea.vmem [#allocation24], %s3595
        // Predicated region
        $region117: #{tpu_custom_call.1} parent=75 // pred_check
          %p3597 = pneg %p366
        $region118: #{tpu_custom_call.1} parent=75 // pred_check_branch
          %3599 = sbr.rel (%p3597) target = $region120
        $region119: #{tpu_custom_call.1} parent=75 // pred_region
          %s3600 = smul.u32 2, %s38
          %s3602 = ssub.s32 256, 256
          %3603 = vsyncadd %s3593, %s3602
          %s3604 = smul.addr %s37, 4
          %s3605 = sadd.s32 %s3600, %s3604
          %s3606 = smul.addr %s3605, 128
          %s3607 = scalar_lea.hbm %s14, %s3606
          %s3608 = sshll.u32 %s3596, 4
          %s3609 = int_to_ptr.vmem [resolvable:$true] %s3608
          %3614 = dma.vmem_to_hbm [thread:$0]  %s3609, 256, %s3607, %s3593, 128, 128, 8
        $region120: #{tpu_custom_call.1} parent=75 // pred_fallthru
          _
      $region76: #{tpu_custom_call.1} parent=5 // pred_fallthru
        _
      %p3615 = scmp.le.s32.totalorder 2, %s28
      // Predicated region
      $region121: #{tpu_custom_call.1} parent=5 // pred_check
        %p3616 = pneg %p3615
      $region122: #{tpu_custom_call.1} parent=5 // pred_check_branch
        %3618 = sbr.rel (%p3616) target = $region124
      $region123: #{tpu_custom_call.1} parent=5 // pred_region
        %s3619 = ssub.s32 %s28, 2
        // Predicated region
        $region125: #{tpu_custom_call.1} parent=123 // pred_check
          %p3620 = pneg %p372
        $region126: #{tpu_custom_call.1} parent=123 // pred_check_branch
          %3622 = sbr.rel (%p3620) target = $region128
        $region127: #{tpu_custom_call.1} parent=123 // pred_region
          %s3623 = sand.u32 %s357, 1
          %s3624 = scalar_lea.sflag [#allocation11], %s3623
          %s3625 = sand.u32 %s357, 1
          %s3626 = smul.addr %s3625, 16
          %s3627 = scalar_lea.vmem [#allocation24], %s3626
          %3628 = dma.done %s3624, 256
        $region128: #{tpu_custom_call.1} parent=123 // pred_fallthru
          _
      $region124: #{tpu_custom_call.1} parent=5 // pred_fallthru
        _
    $region6: #{tpu_custom_call.1} parent=1 // loop_footer
      %s32 = sadd.s32 1, %s28
    $region7: #{tpu_custom_call.1} parent=1 // loop_footer_branch
      %27 = sbr.rel target = $region3
    $region8: #{tpu_custom_call.1} parent=1 // loop_exit
      _
    %3629 = vsyncpa [#allocation10], 1
    %s3630 = scalar_lea.sflag [#allocation10], 1
    %3631 = vsyncpa %s3630, 1
    %3632 = vsyncpa [#allocation13], 1
    %3633 = vsyncpa [#allocation16], 1
    %3634 = vsyncpa [#allocation19], 1
    %3635 = vsyncpa [#allocation22], 1
    %3636 = vsyncpa [#allocation11], 1
    %s3637 = scalar_lea.sflag [#allocation11], 1
    %3638 = vsyncpa %s3637, 1

</llo_original>
